<compile_context>
chip_gen: v7x
topology: tpu7x:2x2x1
jax: 0.10.0
libtpu: 0.0.40
codegen_flags: <defaults>
</compile_context>

<pallas_src>
import jax
import jax.numpy as jnp
from jax import lax
from jax.experimental import pallas as pl
from jax.experimental.pallas import tpu as pltpu


def lstm_kernel(x_ref, wih_ref, whh_ref, b_ref, wlin_ref, blin_ref,
                h0_ref, c0_ref,
                y_ref, hn_ref, cn_ref):
    T = x_ref.shape[0]
    H = h0_ref.shape[1]

    # Input contribution for all timesteps at once: (T, I) @ (I, 4H)  (MXU)
    gx = jnp.dot(x_ref[...], wih_ref[...],
                 preferred_element_type=jnp.float32) + b_ref[...]

    whh = whh_ref[...]          # loaded once, reused across all timesteps
    h = h0_ref[...]             # (1, H) carried in vregs
    c = c0_ref[...]             # (1, H) carried in vregs
    hs = []

    # Fully unrolled static recurrence: slices are static, no per-step VMEM
    # round trips for h/c, no per-step masked stores for the h sequence.
    for t in range(T):
        gates = gx[t:t + 1, :] + jnp.dot(h, whh,
                                         preferred_element_type=jnp.float32)
        sig = jax.nn.sigmoid(gates[:, :3 * H])      # [i, f, o] contiguous
        i_g = sig[:, 0 * H:1 * H]
        f_g = sig[:, 1 * H:2 * H]
        o_g = sig[:, 2 * H:3 * H]
        g_g = jnp.tanh(gates[:, 3 * H:4 * H])
        c = f_g * c + i_g * g_g
        h = o_g * jnp.tanh(c)
        hs.append(h)

    hseq = jnp.concatenate(hs, axis=0)              # (T, H), built in registers

    # relu6 + output projection: clamp then (T, H) @ (H, O_pad)  (MXU)
    h6 = jnp.clip(hseq, 0.0, 6.0)
    y_ref[...] = jnp.dot(h6, wlin_ref[...],
                         preferred_element_type=jnp.float32) + blin_ref[...]
    hn_ref[...] = h
    cn_ref[...] = c


def _permute_gates_rows(w):
    """Reorder PyTorch LSTM gate blocks [i, f, g, o] -> [i, f, o, g] along axis 0."""
    i, f, g, o = jnp.split(w, 4, axis=0)
    return jnp.concatenate([i, f, o, g], axis=0)


def simple_lstm_forward(x, params, h0, c0):
    T, _ = x.shape
    H = h0.shape[1]
    O = params["w_lin"].shape[0]
    O_pad = ((O + 127) // 128) * 128                # lane-dense output store

    # Gate-permuted, pre-transposed weights (wrapper-side, one-time cost).
    wih_t = _permute_gates_rows(params["w_ih"]).T                    # (I, 4H)
    whh_t = _permute_gates_rows(params["w_hh"]).T                    # (H, 4H)
    b = _permute_gates_rows(
        (params["b_ih"] + params["b_hh"]).reshape(4, H)).reshape(1, 4 * H)
    wlin_t = params["w_lin"].T                                       # (H, O)
    wlin_t = jnp.pad(wlin_t, ((0, 0), (0, O_pad - O)))               # (H, O_pad)
    blin = jnp.pad(params["b_lin"], (0, O_pad - O)).reshape(1, O_pad)

    vmem = lambda: pl.BlockSpec(memory_space=pltpu.MemorySpace.VMEM)
    out_shapes = (
        jax.ShapeDtypeStruct((T, O_pad), jnp.float32),   # y_pred (padded lanes)
        jax.ShapeDtypeStruct((1, H), jnp.float32),       # h_n
        jax.ShapeDtypeStruct((1, H), jnp.float32),       # c_n
    )
    y_pad, hn, cn = pl.pallas_call(
        lstm_kernel,
        out_shape=out_shapes,
        in_specs=[vmem() for _ in range(8)],
        out_specs=(vmem(), vmem(), vmem()),
    )(x, wih_t, whh_t, b, wlin_t, blin, h0, c0)
    return y_pad[:, :O], hn, cn


def reference_forward(x, params, h0, c0):
    """Pure-JAX reference matching torch.nn.LSTM + relu6 + Linear (unbatched)."""
    H = h0.shape[1]

    def step(carry, x_t):
        h, c = carry
        gates = (x_t @ params["w_ih"].T + params["b_ih"]
                 + h @ params["w_hh"].T + params["b_hh"])
        i = jax.nn.sigmoid(gates[..., 0 * H:1 * H])
        f = jax.nn.sigmoid(gates[..., 1 * H:2 * H])
        g = jnp.tanh(gates[..., 2 * H:3 * H])
        o = jax.nn.sigmoid(gates[..., 3 * H:4 * H])
        c = f * c + i * g
        h = o * jnp.tanh(c)
        return (h, c), h

    (hn, cn), hs = lax.scan(step, (h0, c0), x[:, None, :])
    hs = hs[:, 0, :]
    y = jnp.clip(hs, 0.0, 6.0) @ params["w_lin"].T + params["b_lin"]
    return y, hn, cn


if __name__ == "__main__":
    # Small shapes consistent with the module (hidden scaled down from 1024).
    T = 8           # sequence length
    I = 50          # input_size
    H = 256         # hidden_size
    O = I           # output_size = input_size

    key = jax.random.PRNGKey(0)
    k = jax.random.split(key, 7)
    bound = 1.0 / (H ** 0.5)
    params = {
        "w_ih": jax.random.uniform(k[0], (4 * H, I), jnp.float32, -bound, bound),
        "w_hh": jax.random.uniform(k[1], (4 * H, H), jnp.float32, -bound, bound),
        "b_ih": jax.random.uniform(k[2], (4 * H,), jnp.float32, -bound, bound),
        "b_hh": jax.random.uniform(k[3], (4 * H,), jnp.float32, -bound, bound),
        "w_lin": jax.random.uniform(k[4], (O, H), jnp.float32, -bound, bound),
        "b_lin": jax.random.uniform(k[5], (O,), jnp.float32, -bound, bound),
    }
    x = jax.random.normal(k[6], (T, I), jnp.float32)

    # self.init_hidden(): zeros of shape (1, hidden_size)
    h0 = jnp.zeros((1, H), jnp.float32)
    c0 = jnp.zeros((1, H), jnp.float32)

    y, hn, cn = simple_lstm_forward(x, params, h0, c0)
    jax.block_until_ready((y, hn, cn))

    y_ref, hn_ref, cn_ref = reference_forward(x, params, h0, c0)
    assert y.shape == (T, O)
    assert jnp.allclose(y, y_ref, atol=1e-3, rtol=1e-3)
    assert jnp.allclose(hn, hn_ref, atol=1e-3, rtol=1e-3)
    assert jnp.allclose(cn, cn_ref, atol=1e-3, rtol=1e-3)

    # TODO(synk): the PyTorch module mutates self.hidden across calls; here the
    # recurrent state is passed in / returned explicitly (.detach() is a no-op
    # for forward semantics).
    print("KERNEL_OK")
</pallas_src>

<mosaic_0001>
module attributes {stable_mosaic.version = 11 : i64} {
  func.func @lstm_kernel(%arg0: memref<8x50xf32, #tpu.memory_space<vmem>>, %arg1: memref<50x1024xf32, #tpu.memory_space<vmem>>, %arg2: memref<256x1024xf32, #tpu.memory_space<vmem>>, %arg3: memref<1x1024xf32, #tpu.memory_space<vmem>>, %arg4: memref<256x128xf32, #tpu.memory_space<vmem>>, %arg5: memref<1x128xf32, #tpu.memory_space<vmem>>, %arg6: memref<1x256xf32, #tpu.memory_space<vmem>>, %arg7: memref<1x256xf32, #tpu.memory_space<vmem>>, %arg8: memref<8x128xf32, #tpu.memory_space<vmem>>, %arg9: memref<1x256xf32, #tpu.memory_space<vmem>>, %arg10: memref<1x256xf32, #tpu.memory_space<vmem>>) attributes {dimension_semantics = [], scalar_prefetch = 0 : i64, scratch_operands = 0 : i64, tpu.core_type = #tpu.core_type<tc>} {
    %c0 = arith.constant 0 : index
    %c0_0 = arith.constant 0 : index
    %0 = vector.load %arg0[%c0, %c0_0] : memref<8x50xf32, #tpu.memory_space<vmem>>, vector<8x50xf32>
    %c0_1 = arith.constant 0 : index
    %c0_2 = arith.constant 0 : index
    %1 = vector.load %arg1[%c0_1, %c0_2] : memref<50x1024xf32, #tpu.memory_space<vmem>>, vector<50x1024xf32>
    %cst = arith.constant dense<0.000000e+00> : vector<8x1024xf32>
    %2 = tpu.matmul %0, %1, %cst {dimension_numbers = #tpu.dot_dimension_numbers<[1], [0], [0], [1], [0, 0, 1, 1], [], []>} : vector<8x50xf32>, vector<50x1024xf32>, vector<8x1024xf32> -> vector<8x1024xf32>
    %c0_3 = arith.constant 0 : index
    %c0_4 = arith.constant 0 : index
    %3 = vector.load %arg3[%c0_3, %c0_4] : memref<1x1024xf32, #tpu.memory_space<vmem>>, vector<1x1024xf32>
    %4 = vector.broadcast %3 : vector<1x1024xf32> to vector<8x1024xf32>
    %5 = arith.addf %2, %4 : vector<8x1024xf32>
    %c0_5 = arith.constant 0 : index
    %c0_6 = arith.constant 0 : index
    %6 = vector.load %arg2[%c0_5, %c0_6] : memref<256x1024xf32, #tpu.memory_space<vmem>>, vector<256x1024xf32>
    %c0_7 = arith.constant 0 : index
    %c0_8 = arith.constant 0 : index
    %7 = vector.load %arg6[%c0_7, %c0_8] : memref<1x256xf32, #tpu.memory_space<vmem>>, vector<1x256xf32>
    %c0_9 = arith.constant 0 : index
    %c0_10 = arith.constant 0 : index
    %8 = vector.load %arg7[%c0_9, %c0_10] : memref<1x256xf32, #tpu.memory_space<vmem>>, vector<1x256xf32>
    %9 = vector.extract_strided_slice %5 {offsets = [0, 0], sizes = [1, 1024], strides = [1, 1]} : vector<8x1024xf32> to vector<1x1024xf32>
    %cst_11 = arith.constant dense<0.000000e+00> : vector<1x1024xf32>
    %10 = tpu.matmul %7, %6, %cst_11 {dimension_numbers = #tpu.dot_dimension_numbers<[1], [0], [0], [1], [0, 0, 1, 1], [], []>} : vector<1x256xf32>, vector<256x1024xf32>, vector<1x1024xf32> -> vector<1x1024xf32>
    %11 = arith.addf %9, %10 : vector<1x1024xf32>
    %12 = vector.extract_strided_slice %11 {offsets = [0, 0], sizes = [1, 768], strides = [1, 1]} : vector<1x1024xf32> to vector<1x768xf32>
    %13 = arith.negf %12 : vector<1x768xf32>
    %14 = math.exp %13 : vector<1x768xf32>
    %cst_12 = arith.constant 1.000000e+00 : f32
    %15 = vector.broadcast %cst_12 : f32 to vector<1x768xf32>
    %16 = arith.addf %15, %14 : vector<1x768xf32>
    %17 = arith.divf %15, %16 : vector<1x768xf32>
    %18 = vector.extract_strided_slice %17 {offsets = [0, 0], sizes = [1, 256], strides = [1, 1]} : vector<1x768xf32> to vector<1x256xf32>
    %19 = vector.extract_strided_slice %17 {offsets = [0, 256], sizes = [1, 256], strides = [1, 1]} : vector<1x768xf32> to vector<1x256xf32>
    %20 = vector.extract_strided_slice %17 {offsets = [0, 512], sizes = [1, 256], strides = [1, 1]} : vector<1x768xf32> to vector<1x256xf32>
    %21 = vector.extract_strided_slice %11 {offsets = [0, 768], sizes = [1, 256], strides = [1, 1]} : vector<1x1024xf32> to vector<1x256xf32>
    %22 = math.tanh %21 : vector<1x256xf32>
    %23 = arith.mulf %19, %8 : vector<1x256xf32>
    %24 = arith.mulf %18, %22 : vector<1x256xf32>
    %25 = arith.addf %23, %24 : vector<1x256xf32>
    %26 = math.tanh %25 : vector<1x256xf32>
    %27 = arith.mulf %20, %26 : vector<1x256xf32>
    %28 = vector.extract_strided_slice %5 {offsets = [1, 0], sizes = [1, 1024], strides = [1, 1]} : vector<8x1024xf32> to vector<1x1024xf32>
    %cst_13 = arith.constant dense<0.000000e+00> : vector<1x1024xf32>
    %29 = tpu.matmul %27, %6, %cst_13 {dimension_numbers = #tpu.dot_dimension_numbers<[1], [0], [0], [1], [0, 0, 1, 1], [], []>} : vector<1x256xf32>, vector<256x1024xf32>, vector<1x1024xf32> -> vector<1x1024xf32>
    %30 = arith.addf %28, %29 : vector<1x1024xf32>
    %31 = vector.extract_strided_slice %30 {offsets = [0, 0], sizes = [1, 768], strides = [1, 1]} : vector<1x1024xf32> to vector<1x768xf32>
    %32 = arith.negf %31 : vector<1x768xf32>
    %33 = math.exp %32 : vector<1x768xf32>
    %cst_14 = arith.constant 1.000000e+00 : f32
    %34 = vector.broadcast %cst_14 : f32 to vector<1x768xf32>
    %35 = arith.addf %34, %33 : vector<1x768xf32>
    %36 = arith.divf %34, %35 : vector<1x768xf32>
    %37 = vector.extract_strided_slice %36 {offsets = [0, 0], sizes = [1, 256], strides = [1, 1]} : vector<1x768xf32> to vector<1x256xf32>
    %38 = vector.extract_strided_slice %36 {offsets = [0, 256], sizes = [1, 256], strides = [1, 1]} : vector<1x768xf32> to vector<1x256xf32>
    %39 = vector.extract_strided_slice %36 {offsets = [0, 512], sizes = [1, 256], strides = [1, 1]} : vector<1x768xf32> to vector<1x256xf32>
    %40 = vector.extract_strided_slice %30 {offsets = [0, 768], sizes = [1, 256], strides = [1, 1]} : vector<1x1024xf32> to vector<1x256xf32>
    %41 = math.tanh %40 : vector<1x256xf32>
    %42 = arith.mulf %38, %25 : vector<1x256xf32>
    %43 = arith.mulf %37, %41 : vector<1x256xf32>
    %44 = arith.addf %42, %43 : vector<1x256xf32>
    %45 = math.tanh %44 : vector<1x256xf32>
    %46 = arith.mulf %39, %45 : vector<1x256xf32>
    %47 = vector.extract_strided_slice %5 {offsets = [2, 0], sizes = [1, 1024], strides = [1, 1]} : vector<8x1024xf32> to vector<1x1024xf32>
    %cst_15 = arith.constant dense<0.000000e+00> : vector<1x1024xf32>
    %48 = tpu.matmul %46, %6, %cst_15 {dimension_numbers = #tpu.dot_dimension_numbers<[1], [0], [0], [1], [0, 0, 1, 1], [], []>} : vector<1x256xf32>, vector<256x1024xf32>, vector<1x1024xf32> -> vector<1x1024xf32>
    %49 = arith.addf %47, %48 : vector<1x1024xf32>
    %50 = vector.extract_strided_slice %49 {offsets = [0, 0], sizes = [1, 768], strides = [1, 1]} : vector<1x1024xf32> to vector<1x768xf32>
    %51 = arith.negf %50 : vector<1x768xf32>
    %52 = math.exp %51 : vector<1x768xf32>
    %cst_16 = arith.constant 1.000000e+00 : f32
    %53 = vector.broadcast %cst_16 : f32 to vector<1x768xf32>
    %54 = arith.addf %53, %52 : vector<1x768xf32>
    %55 = arith.divf %53, %54 : vector<1x768xf32>
    %56 = vector.extract_strided_slice %55 {offsets = [0, 0], sizes = [1, 256], strides = [1, 1]} : vector<1x768xf32> to vector<1x256xf32>
    %57 = vector.extract_strided_slice %55 {offsets = [0, 256], sizes = [1, 256], strides = [1, 1]} : vector<1x768xf32> to vector<1x256xf32>
    %58 = vector.extract_strided_slice %55 {offsets = [0, 512], sizes = [1, 256], strides = [1, 1]} : vector<1x768xf32> to vector<1x256xf32>
    %59 = vector.extract_strided_slice %49 {offsets = [0, 768], sizes = [1, 256], strides = [1, 1]} : vector<1x1024xf32> to vector<1x256xf32>
    %60 = math.tanh %59 : vector<1x256xf32>
    %61 = arith.mulf %57, %44 : vector<1x256xf32>
    %62 = arith.mulf %56, %60 : vector<1x256xf32>
    %63 = arith.addf %61, %62 : vector<1x256xf32>
    %64 = math.tanh %63 : vector<1x256xf32>
    %65 = arith.mulf %58, %64 : vector<1x256xf32>
    %66 = vector.extract_strided_slice %5 {offsets = [3, 0], sizes = [1, 1024], strides = [1, 1]} : vector<8x1024xf32> to vector<1x1024xf32>
    %cst_17 = arith.constant dense<0.000000e+00> : vector<1x1024xf32>
    %67 = tpu.matmul %65, %6, %cst_17 {dimension_numbers = #tpu.dot_dimension_numbers<[1], [0], [0], [1], [0, 0, 1, 1], [], []>} : vector<1x256xf32>, vector<256x1024xf32>, vector<1x1024xf32> -> vector<1x1024xf32>
    %68 = arith.addf %66, %67 : vector<1x1024xf32>
    %69 = vector.extract_strided_slice %68 {offsets = [0, 0], sizes = [1, 768], strides = [1, 1]} : vector<1x1024xf32> to vector<1x768xf32>
    %70 = arith.negf %69 : vector<1x768xf32>
    %71 = math.exp %70 : vector<1x768xf32>
    %cst_18 = arith.constant 1.000000e+00 : f32
    %72 = vector.broadcast %cst_18 : f32 to vector<1x768xf32>
    %73 = arith.addf %72, %71 : vector<1x768xf32>
    %74 = arith.divf %72, %73 : vector<1x768xf32>
    %75 = vector.extract_strided_slice %74 {offsets = [0, 0], sizes = [1, 256], strides = [1, 1]} : vector<1x768xf32> to vector<1x256xf32>
    %76 = vector.extract_strided_slice %74 {offsets = [0, 256], sizes = [1, 256], strides = [1, 1]} : vector<1x768xf32> to vector<1x256xf32>
    %77 = vector.extract_strided_slice %74 {offsets = [0, 512], sizes = [1, 256], strides = [1, 1]} : vector<1x768xf32> to vector<1x256xf32>
    %78 = vector.extract_strided_slice %68 {offsets = [0, 768], sizes = [1, 256], strides = [1, 1]} : vector<1x1024xf32> to vector<1x256xf32>
    %79 = math.tanh %78 : vector<1x256xf32>
    %80 = arith.mulf %76, %63 : vector<1x256xf32>
    %81 = arith.mulf %75, %79 : vector<1x256xf32>
    %82 = arith.addf %80, %81 : vector<1x256xf32>
    %83 = math.tanh %82 : vector<1x256xf32>
    %84 = arith.mulf %77, %83 : vector<1x256xf32>
    %85 = vector.extract_strided_slice %5 {offsets = [4, 0], sizes = [1, 1024], strides = [1, 1]} : vector<8x1024xf32> to vector<1x1024xf32>
    %cst_19 = arith.constant dense<0.000000e+00> : vector<1x1024xf32>
    %86 = tpu.matmul %84, %6, %cst_19 {dimension_numbers = #tpu.dot_dimension_numbers<[1], [0], [0], [1], [0, 0, 1, 1], [], []>} : vector<1x256xf32>, vector<256x1024xf32>, vector<1x1024xf32> -> vector<1x1024xf32>
    %87 = arith.addf %85, %86 : vector<1x1024xf32>
    %88 = vector.extract_strided_slice %87 {offsets = [0, 0], sizes = [1, 768], strides = [1, 1]} : vector<1x1024xf32> to vector<1x768xf32>
    %89 = arith.negf %88 : vector<1x768xf32>
    %90 = math.exp %89 : vector<1x768xf32>
    %cst_20 = arith.constant 1.000000e+00 : f32
    %91 = vector.broadcast %cst_20 : f32 to vector<1x768xf32>
    %92 = arith.addf %91, %90 : vector<1x768xf32>
    %93 = arith.divf %91, %92 : vector<1x768xf32>
    %94 = vector.extract_strided_slice %93 {offsets = [0, 0], sizes = [1, 256], strides = [1, 1]} : vector<1x768xf32> to vector<1x256xf32>
    %95 = vector.extract_strided_slice %93 {offsets = [0, 256], sizes = [1, 256], strides = [1, 1]} : vector<1x768xf32> to vector<1x256xf32>
    %96 = vector.extract_strided_slice %93 {offsets = [0, 512], sizes = [1, 256], strides = [1, 1]} : vector<1x768xf32> to vector<1x256xf32>
    %97 = vector.extract_strided_slice %87 {offsets = [0, 768], sizes = [1, 256], strides = [1, 1]} : vector<1x1024xf32> to vector<1x256xf32>
    %98 = math.tanh %97 : vector<1x256xf32>
    %99 = arith.mulf %95, %82 : vector<1x256xf32>
    %100 = arith.mulf %94, %98 : vector<1x256xf32>
    %101 = arith.addf %99, %100 : vector<1x256xf32>
    %102 = math.tanh %101 : vector<1x256xf32>
    %103 = arith.mulf %96, %102 : vector<1x256xf32>
    %104 = vector.extract_strided_slice %5 {offsets = [5, 0], sizes = [1, 1024], strides = [1, 1]} : vector<8x1024xf32> to vector<1x1024xf32>
    %cst_21 = arith.constant dense<0.000000e+00> : vector<1x1024xf32>
    %105 = tpu.matmul %103, %6, %cst_21 {dimension_numbers = #tpu.dot_dimension_numbers<[1], [0], [0], [1], [0, 0, 1, 1], [], []>} : vector<1x256xf32>, vector<256x1024xf32>, vector<1x1024xf32> -> vector<1x1024xf32>
    %106 = arith.addf %104, %105 : vector<1x1024xf32>
    %107 = vector.extract_strided_slice %106 {offsets = [0, 0], sizes = [1, 768], strides = [1, 1]} : vector<1x1024xf32> to vector<1x768xf32>
    %108 = arith.negf %107 : vector<1x768xf32>
    %109 = math.exp %108 : vector<1x768xf32>
    %cst_22 = arith.constant 1.000000e+00 : f32
    %110 = vector.broadcast %cst_22 : f32 to vector<1x768xf32>
    %111 = arith.addf %110, %109 : vector<1x768xf32>
    %112 = arith.divf %110, %111 : vector<1x768xf32>
    %113 = vector.extract_strided_slice %112 {offsets = [0, 0], sizes = [1, 256], strides = [1, 1]} : vector<1x768xf32> to vector<1x256xf32>
    %114 = vector.extract_strided_slice %112 {offsets = [0, 256], sizes = [1, 256], strides = [1, 1]} : vector<1x768xf32> to vector<1x256xf32>
    %115 = vector.extract_strided_slice %112 {offsets = [0, 512], sizes = [1, 256], strides = [1, 1]} : vector<1x768xf32> to vector<1x256xf32>
    %116 = vector.extract_strided_slice %106 {offsets = [0, 768], sizes = [1, 256], strides = [1, 1]} : vector<1x1024xf32> to vector<1x256xf32>
    %117 = math.tanh %116 : vector<1x256xf32>
    %118 = arith.mulf %114, %101 : vector<1x256xf32>
    %119 = arith.mulf %113, %117 : vector<1x256xf32>
    %120 = arith.addf %118, %119 : vector<1x256xf32>
    %121 = math.tanh %120 : vector<1x256xf32>
    %122 = arith.mulf %115, %121 : vector<1x256xf32>
    %123 = vector.extract_strided_slice %5 {offsets = [6, 0], sizes = [1, 1024], strides = [1, 1]} : vector<8x1024xf32> to vector<1x1024xf32>
    %cst_23 = arith.constant dense<0.000000e+00> : vector<1x1024xf32>
    %124 = tpu.matmul %122, %6, %cst_23 {dimension_numbers = #tpu.dot_dimension_numbers<[1], [0], [0], [1], [0, 0, 1, 1], [], []>} : vector<1x256xf32>, vector<256x1024xf32>, vector<1x1024xf32> -> vector<1x1024xf32>
    %125 = arith.addf %123, %124 : vector<1x1024xf32>
    %126 = vector.extract_strided_slice %125 {offsets = [0, 0], sizes = [1, 768], strides = [1, 1]} : vector<1x1024xf32> to vector<1x768xf32>
    %127 = arith.negf %126 : vector<1x768xf32>
    %128 = math.exp %127 : vector<1x768xf32>
    %cst_24 = arith.constant 1.000000e+00 : f32
    %129 = vector.broadcast %cst_24 : f32 to vector<1x768xf32>
    %130 = arith.addf %129, %128 : vector<1x768xf32>
    %131 = arith.divf %129, %130 : vector<1x768xf32>
    %132 = vector.extract_strided_slice %131 {offsets = [0, 0], sizes = [1, 256], strides = [1, 1]} : vector<1x768xf32> to vector<1x256xf32>
    %133 = vector.extract_strided_slice %131 {offsets = [0, 256], sizes = [1, 256], strides = [1, 1]} : vector<1x768xf32> to vector<1x256xf32>
    %134 = vector.extract_strided_slice %131 {offsets = [0, 512], sizes = [1, 256], strides = [1, 1]} : vector<1x768xf32> to vector<1x256xf32>
    %135 = vector.extract_strided_slice %125 {offsets = [0, 768], sizes = [1, 256], strides = [1, 1]} : vector<1x1024xf32> to vector<1x256xf32>
    %136 = math.tanh %135 : vector<1x256xf32>
    %137 = arith.mulf %133, %120 : vector<1x256xf32>
    %138 = arith.mulf %132, %136 : vector<1x256xf32>
    %139 = arith.addf %137, %138 : vector<1x256xf32>
    %140 = math.tanh %139 : vector<1x256xf32>
    %141 = arith.mulf %134, %140 : vector<1x256xf32>
    %142 = vector.extract_strided_slice %5 {offsets = [7, 0], sizes = [1, 1024], strides = [1, 1]} : vector<8x1024xf32> to vector<1x1024xf32>
    %cst_25 = arith.constant dense<0.000000e+00> : vector<1x1024xf32>
    %143 = tpu.matmul %141, %6, %cst_25 {dimension_numbers = #tpu.dot_dimension_numbers<[1], [0], [0], [1], [0, 0, 1, 1], [], []>} : vector<1x256xf32>, vector<256x1024xf32>, vector<1x1024xf32> -> vector<1x1024xf32>
    %144 = arith.addf %142, %143 : vector<1x1024xf32>
    %145 = vector.extract_strided_slice %144 {offsets = [0, 0], sizes = [1, 768], strides = [1, 1]} : vector<1x1024xf32> to vector<1x768xf32>
    %146 = arith.negf %145 : vector<1x768xf32>
    %147 = math.exp %146 : vector<1x768xf32>
    %cst_26 = arith.constant 1.000000e+00 : f32
    %148 = vector.broadcast %cst_26 : f32 to vector<1x768xf32>
    %149 = arith.addf %148, %147 : vector<1x768xf32>
    %150 = arith.divf %148, %149 : vector<1x768xf32>
    %151 = vector.extract_strided_slice %150 {offsets = [0, 0], sizes = [1, 256], strides = [1, 1]} : vector<1x768xf32> to vector<1x256xf32>
    %152 = vector.extract_strided_slice %150 {offsets = [0, 256], sizes = [1, 256], strides = [1, 1]} : vector<1x768xf32> to vector<1x256xf32>
    %153 = vector.extract_strided_slice %150 {offsets = [0, 512], sizes = [1, 256], strides = [1, 1]} : vector<1x768xf32> to vector<1x256xf32>
    %154 = vector.extract_strided_slice %144 {offsets = [0, 768], sizes = [1, 256], strides = [1, 1]} : vector<1x1024xf32> to vector<1x256xf32>
    %155 = math.tanh %154 : vector<1x256xf32>
    %156 = arith.mulf %152, %139 : vector<1x256xf32>
    %157 = arith.mulf %151, %155 : vector<1x256xf32>
    %158 = arith.addf %156, %157 : vector<1x256xf32>
    %159 = math.tanh %158 : vector<1x256xf32>
    %160 = arith.mulf %153, %159 : vector<1x256xf32>
    %161 = tpu.concatenate %27, %46, %65, %84, %103, %122, %141, %160 in 0 : vector<1x256xf32>, vector<1x256xf32>, vector<1x256xf32>, vector<1x256xf32>, vector<1x256xf32>, vector<1x256xf32>, vector<1x256xf32>, vector<1x256xf32> -> vector<8x256xf32>
    %cst_27 = arith.constant 0.000000e+00 : f32
    %cst_28 = arith.constant 6.000000e+00 : f32
    %162 = vector.broadcast %cst_27 : f32 to vector<8x256xf32>
    %163 = arith.maximumf %162, %161 : vector<8x256xf32>
    %164 = vector.broadcast %cst_28 : f32 to vector<8x256xf32>
    %165 = arith.minimumf %164, %163 : vector<8x256xf32>
    %c0_29 = arith.constant 0 : index
    %c0_30 = arith.constant 0 : index
    %166 = vector.load %arg4[%c0_29, %c0_30] : memref<256x128xf32, #tpu.memory_space<vmem>>, vector<256x128xf32>
    %cst_31 = arith.constant dense<0.000000e+00> : vector<8x128xf32>
    %167 = tpu.matmul %165, %166, %cst_31 {dimension_numbers = #tpu.dot_dimension_numbers<[1], [0], [0], [1], [0, 0, 1, 1], [], []>} : vector<8x256xf32>, vector<256x128xf32>, vector<8x128xf32> -> vector<8x128xf32>
    %c0_32 = arith.constant 0 : index
    %c0_33 = arith.constant 0 : index
    %168 = vector.load %arg5[%c0_32, %c0_33] : memref<1x128xf32, #tpu.memory_space<vmem>>, vector<1x128xf32>
    %169 = vector.broadcast %168 : vector<1x128xf32> to vector<8x128xf32>
    %170 = arith.addf %167, %169 : vector<8x128xf32>
    %c0_34 = arith.constant 0 : index
    %c0_35 = arith.constant 0 : index
    %171 = vector.load %arg8[%c0_34, %c0_35] : memref<8x128xf32, #tpu.memory_space<vmem>>, vector<8x128xf32>
    tpu.vector_store %arg8[%c0_34, %c0_35], %170 {strides = array<i32>} : memref<8x128xf32, #tpu.memory_space<vmem>>, vector<8x128xf32>,
    %c0_36 = arith.constant 0 : index
    %c0_37 = arith.constant 0 : index
    %172 = vector.load %arg9[%c0_36, %c0_37] : memref<1x256xf32, #tpu.memory_space<vmem>>, vector<1x256xf32>
    tpu.vector_store %arg9[%c0_36, %c0_37], %160 {strides = array<i32>} : memref<1x256xf32, #tpu.memory_space<vmem>>, vector<1x256xf32>,
    %c0_38 = arith.constant 0 : index
    %c0_39 = arith.constant 0 : index
    %173 = vector.load %arg10[%c0_38, %c0_39] : memref<1x256xf32, #tpu.memory_space<vmem>>, vector<1x256xf32>
    tpu.vector_store %arg10[%c0_38, %c0_39], %158 {strides = array<i32>} : memref<1x256xf32, #tpu.memory_space<vmem>>, vector<1x256xf32>,
    return
  }
}

</mosaic_0001>

<llo_original>
// kernel: tpu_custom_call.1
$region0: #{tpu_custom_call.1}
  #allocation0 [shape = 'u32[]', space=smem, size = 0x4, offset = 0x4, fixed_abs, tag = 'smem constant byte address 0x4 - core index']
  #allocation1 [shape = 'u32[144,128]{1,0:T(1,128)}', space=vmem, size = 0x12000, scoped, tag = 'internal scratch']
  %s0 = inlined_call_operand.hbm [shape: f32[8,50], index: 0, kind: input, shape index: {}]
  %s1 = inlined_call_operand.hbm [shape: f32[50,1024], index: 1, kind: input, shape index: {}]
  %s2 = inlined_call_operand.hbm [shape: f32[256,1024], index: 2, kind: input, shape index: {}]
  %s3 = inlined_call_operand.vmem [shape: f32[1,1024], index: 3, kind: input, shape index: {}]
  %s4 = inlined_call_operand.hbm [shape: f32[256,128], index: 4, kind: input, shape index: {}]
  %s5 = inlined_call_operand.vmem [shape: f32[1,128], index: 5, kind: input, shape index: {}]
  %s6 = inlined_call_operand.vmem [shape: f32[1,256], index: 6, kind: input, shape index: {}]
  %s7 = inlined_call_operand.vmem [shape: f32[1,256], index: 7, kind: input, shape index: {}]
  %s8 = inlined_call_operand.hbm [shape: f32[8,128], index: 8, kind: output, shape index: {0}]
  %s9 = inlined_call_operand.hbm [shape: f32[1,256], index: 9, kind: output, shape index: {1}]
  %s10 = inlined_call_operand.hbm [shape: f32[1,256], index: 10, kind: output, shape index: {2}]
  %11 = xla_tuple %s8, %s9, %s10
  %s12 = sld [smem:[#allocation0]]
  $region74: #{tpu_custom_call.1} parent=0
    _
  %s14 = ssub.s32 1, %s12
  %s15 = scalar_select 0, %s14, %s12
  $region1: #{tpu_custom_call.1} parent=0
    #allocation2 [shape = 'u8[4096]{0}', space=vmem, size = 0x1000, scoped, tag = 'input window, operand 0, single buffered']
    #allocation3 [shape = 's32[1]{0}', space=sflag, size = 0x4, scoped, tag = 'scoped memory for tpu_custom_call.1']
    #allocation4 [shape = 's32[1]{0}', space=sflag, size = 0x4, scoped, tag = 'scoped memory for tpu_custom_call.1']
    #allocation5 [shape = 'u8[229376]{0}', space=vmem, size = 0x38000, scoped, tag = 'input window, operand 1, single buffered']
    #allocation6 [shape = 's32[1]{0}', space=sflag, size = 0x4, scoped, tag = 'scoped memory for tpu_custom_call.1']
    #allocation7 [shape = 'u8[1048576]{0}', space=vmem, size = 0x100000, scoped, tag = 'input window, operand 2, single buffered']
    #allocation8 [shape = 'u8[131072]{0}', space=vmem, size = 0x20000, scoped, tag = 'input window, operand 4, single buffered']
    #allocation9 [shape = 's32[1]{0}', space=sflag, size = 0x4, scoped, tag = 'scoped memory for tpu_custom_call.1']
    #allocation10 [shape = 'u8[4096]{0}', space=vmem, size = 0x1000, scoped, tag = 'output window, operand 0, single buffered']
    #allocation11 [shape = 'u8[1024]{0}', space=vmem, size = 0x400, scoped, tag = 'output window, operand 1, single buffered']
    #allocation12 [shape = 's32[1]{0}', space=sflag, size = 0x4, scoped, tag = 'scoped memory for tpu_custom_call.1']
    #allocation13 [shape = 'u8[1024]{0}', space=vmem, size = 0x400, scoped, tag = 'output window, operand 2, single buffered']
    %16 = vsyncpa [#allocation3], 0
    %17 = vsyncpa [#allocation6], 0
    %18 = vsyncpa [#allocation9], 0
    %19 = vsyncpa [#allocation4], 0
    %20 = vsyncpa [#allocation12], 0
    // Predicated region
    $region2: #{tpu_custom_call.1} parent=1 // pred_check
      _
    $region3: #{tpu_custom_call.1} parent=1 // pred_check_branch
      %22 = sbr.rel (0) target = $region5
    $region4: #{tpu_custom_call.1} parent=1 // pred_region
      %s24 = ssub.s32 128, 128
      %25 = vsyncadd [#allocation3], %s24
      %s27 = sshll.u32 [#allocation2], 4
      %s28 = int_to_ptr.vmem [resolvable:$true] %s27
      %30 = dma.hbm_to_vmem [thread:$0]  %s0, 128, %s28, [#allocation3]
    $region5: #{tpu_custom_call.1} parent=1 // pred_fallthru
      _
    // Predicated region
    $region6: #{tpu_custom_call.1} parent=1 // pred_check
      _
    $region7: #{tpu_custom_call.1} parent=1 // pred_check_branch
      %32 = sbr.rel (0) target = $region9
    $region8: #{tpu_custom_call.1} parent=1 // pred_region
      %s34 = ssub.s32 7168, 7168
      %35 = vsyncadd [#allocation6], %s34
      %s36 = sshll.u32 [#allocation5], 4
      %s37 = int_to_ptr.vmem [resolvable:$true] %s36
      %42 = dma.hbm_to_vmem [thread:$0]  %s1, 7168, %s37, [#allocation6], 1024, 1024, 64
    $region9: #{tpu_custom_call.1} parent=1 // pred_fallthru
      _
    // Predicated region
    $region10: #{tpu_custom_call.1} parent=1 // pred_check
      _
    $region11: #{tpu_custom_call.1} parent=1 // pred_check_branch
      %44 = sbr.rel (0) target = $region13
    $region12: #{tpu_custom_call.1} parent=1 // pred_region
      %s46 = ssub.s32 32768, 32768
      %47 = vsyncadd [#allocation6], %s46
      %s48 = sshll.u32 [#allocation7], 4
      %s49 = int_to_ptr.vmem [resolvable:$true] %s48
      %54 = dma.hbm_to_vmem [thread:$0]  %s2, 32768, %s49, [#allocation6], 1024, 1024, 64
    $region13: #{tpu_custom_call.1} parent=1 // pred_fallthru
      _
    // Predicated region
    $region14: #{tpu_custom_call.1} parent=1 // pred_check
      _
    $region15: #{tpu_custom_call.1} parent=1 // pred_check_branch
      %56 = sbr.rel (0) target = $region17
    $region16: #{tpu_custom_call.1} parent=1 // pred_region
      _
    $region17: #{tpu_custom_call.1} parent=1 // pred_fallthru
      _
    // Predicated region
    $region18: #{tpu_custom_call.1} parent=1 // pred_check
      _
    $region19: #{tpu_custom_call.1} parent=1 // pred_check_branch
      %58 = sbr.rel (0) target = $region21
    $region20: #{tpu_custom_call.1} parent=1 // pred_region
      %s60 = ssub.s32 4096, 4096
      %61 = vsyncadd [#allocation9], %s60
      %s62 = sshll.u32 [#allocation8], 4
      %s63 = int_to_ptr.vmem [resolvable:$true] %s62
      %68 = dma.hbm_to_vmem [thread:$0]  %s4, 4096, %s63, [#allocation9], 128, 128, 8
    $region21: #{tpu_custom_call.1} parent=1 // pred_fallthru
      _
    // Predicated region
    $region22: #{tpu_custom_call.1} parent=1 // pred_check
      _
    $region23: #{tpu_custom_call.1} parent=1 // pred_check_branch
      %70 = sbr.rel (0) target = $region25
    $region24: #{tpu_custom_call.1} parent=1 // pred_region
      _
    $region25: #{tpu_custom_call.1} parent=1 // pred_fallthru
      _
    // Predicated region
    $region26: #{tpu_custom_call.1} parent=1 // pred_check
      _
    $region27: #{tpu_custom_call.1} parent=1 // pred_check_branch
      %72 = sbr.rel (0) target = $region29
    $region28: #{tpu_custom_call.1} parent=1 // pred_region
      _
    $region29: #{tpu_custom_call.1} parent=1 // pred_fallthru
      _
    // Predicated region
    $region30: #{tpu_custom_call.1} parent=1 // pred_check
      _
    $region31: #{tpu_custom_call.1} parent=1 // pred_check_branch
      %74 = sbr.rel (0) target = $region33
    $region32: #{tpu_custom_call.1} parent=1 // pred_region
      _
    $region33: #{tpu_custom_call.1} parent=1 // pred_fallthru
      _
    // Predicated region
    $region34: #{tpu_custom_call.1} parent=1 // pred_check
      _
    $region35: #{tpu_custom_call.1} parent=1 // pred_check_branch
      %76 = sbr.rel (0) target = $region37
    $region36: #{tpu_custom_call.1} parent=1 // pred_region
      %77 = dma.done [#allocation3], 128
    $region37: #{tpu_custom_call.1} parent=1 // pred_fallthru
      _
    // Predicated region
    $region38: #{tpu_custom_call.1} parent=1 // pred_check
      _
    $region39: #{tpu_custom_call.1} parent=1 // pred_check_branch
      %79 = sbr.rel (0) target = $region41
    $region40: #{tpu_custom_call.1} parent=1 // pred_region
      %80 = dma.done [#allocation6], 7168
    $region41: #{tpu_custom_call.1} parent=1 // pred_fallthru
      _
    // Predicated region
    $region42: #{tpu_custom_call.1} parent=1 // pred_check
      _
    $region43: #{tpu_custom_call.1} parent=1 // pred_check_branch
      %82 = sbr.rel (0) target = $region45
    $region44: #{tpu_custom_call.1} parent=1 // pred_region
      %83 = dma.done [#allocation6], 32768
    $region45: #{tpu_custom_call.1} parent=1 // pred_fallthru
      _
    // Predicated region
    $region46: #{tpu_custom_call.1} parent=1 // pred_check
      _
    $region47: #{tpu_custom_call.1} parent=1 // pred_check_branch
      %85 = sbr.rel (0) target = $region49
    $region48: #{tpu_custom_call.1} parent=1 // pred_region
      %86 = dma.done [#allocation9], 4096
    $region49: #{tpu_custom_call.1} parent=1 // pred_fallthru
      _
    %v87 = vld [vmem:[#allocation2] sm:$0xff]
    %v88 = vld [vmem:[#allocation5] sm:$0xff]
    %v89 = vld [vmem:[#allocation5 + $0x8] sm:$0xff]
    %v90 = vld [vmem:[#allocation5 + $0x10] sm:$0xff]
    %v91 = vld [vmem:[#allocation5 + $0x18] sm:$0xff]
    %v92 = vld [vmem:[#allocation5 + $0x20] sm:$0xff]
    %v93 = vld [vmem:[#allocation5 + $0x28] sm:$0xff]
    %v94 = vld [vmem:[#allocation5 + $0x30] sm:$0xff]
    %v95 = vld [vmem:[#allocation5 + $0x38] sm:$0xff]
    %v96 = vld [vmem:[#allocation5 + $0x40] sm:$0xff]
    %v97 = vld [vmem:[#allocation5 + $0x48] sm:$0xff]
    %v98 = vld [vmem:[#allocation5 + $0x50] sm:$0xff]
    %v99 = vld [vmem:[#allocation5 + $0x58] sm:$0xff]
    %v100 = vld [vmem:[#allocation5 + $0x60] sm:$0xff]
    %v101 = vld [vmem:[#allocation5 + $0x68] sm:$0xff]
    %v102 = vld [vmem:[#allocation5 + $0x70] sm:$0xff]
    %v103 = vld [vmem:[#allocation5 + $0x78] sm:$0xff]
    %v104 = vld [vmem:[#allocation5 + $0x80] sm:$0xff]
    %v105 = vld [vmem:[#allocation5 + $0x88] sm:$0xff]
    %v106 = vld [vmem:[#allocation5 + $0x90] sm:$0xff]
    %v107 = vld [vmem:[#allocation5 + $0x98] sm:$0xff]
    %v108 = vld [vmem:[#allocation5 + $0xa0] sm:$0xff]
    %v109 = vld [vmem:[#allocation5 + $0xa8] sm:$0xff]
    %v110 = vld [vmem:[#allocation5 + $0xb0] sm:$0xff]
    %v111 = vld [vmem:[#allocation5 + $0xb8] sm:$0xff]
    %v112 = vld [vmem:[#allocation5 + $0xc0] sm:$0xff]
    %v113 = vld [vmem:[#allocation5 + $0xc8] sm:$0xff]
    %v114 = vld [vmem:[#allocation5 + $0xd0] sm:$0xff]
    %v115 = vld [vmem:[#allocation5 + $0xd8] sm:$0xff]
    %v116 = vld [vmem:[#allocation5 + $0xe0] sm:$0xff]
    %v117 = vld [vmem:[#allocation5 + $0xe8] sm:$0xff]
    %v118 = vld [vmem:[#allocation5 + $0xf0] sm:$0xff]
    %v119 = vld [vmem:[#allocation5 + $0xf8] sm:$0xff]
    %v120 = vld [vmem:[#allocation5 + $0x100] sm:$0xff]
    %v121 = vld [vmem:[#allocation5 + $0x108] sm:$0xff]
    %v122 = vld [vmem:[#allocation5 + $0x110] sm:$0xff]
    %v123 = vld [vmem:[#allocation5 + $0x118] sm:$0xff]
    %v124 = vld [vmem:[#allocation5 + $0x120] sm:$0xff]
    %v125 = vld [vmem:[#allocation5 + $0x128] sm:$0xff]
    %v126 = vld [vmem:[#allocation5 + $0x130] sm:$0xff]
    %v127 = vld [vmem:[#allocation5 + $0x138] sm:$0xff]
    %v128 = vld [vmem:[#allocation5 + $0x140] sm:$0xff]
    %v129 = vld [vmem:[#allocation5 + $0x148] sm:$0xff]
    %v130 = vld [vmem:[#allocation5 + $0x150] sm:$0xff]
    %v131 = vld [vmem:[#allocation5 + $0x158] sm:$0xff]
    %v132 = vld [vmem:[#allocation5 + $0x160] sm:$0xff]
    %v133 = vld [vmem:[#allocation5 + $0x168] sm:$0xff]
    %v134 = vld [vmem:[#allocation5 + $0x170] sm:$0xff]
    %v135 = vld [vmem:[#allocation5 + $0x178] sm:$0xff]
    %v136 = vld [vmem:[#allocation5 + $0x180] sm:$0x3]
    %v137 = vld [vmem:[#allocation5 + $0x188] sm:$0x3]
    %v138 = vld [vmem:[#allocation5 + $0x190] sm:$0x3]
    %v139 = vld [vmem:[#allocation5 + $0x198] sm:$0x3]
    %v140 = vld [vmem:[#allocation5 + $0x1a0] sm:$0x3]
    %v141 = vld [vmem:[#allocation5 + $0x1a8] sm:$0x3]
    %v142 = vld [vmem:[#allocation5 + $0x1b0] sm:$0x3]
    %v143 = vld [vmem:[#allocation5 + $0x1b8] sm:$0x3]
    %v144 = vld [vmem:[%s3] sm:$0xff]
    %v146 = vlaneseq
    %v147 = vshrl.u32 %v146, 7
    %v148 = vsub.s32 0, %v147
    %v149 = vrot.slane %v144, %v148
    %v150 = vlaneseq
    %v151 = vshrl.u32 %v150, 7
    %v152 = vsub.s32 1, %v151
    %v153 = vrot.slane %v144, %v152
    %v154 = vlaneseq
    %v155 = vshrl.u32 %v154, 7
    %v156 = vsub.s32 2, %v155
    %v157 = vrot.slane %v144, %v156
    %v158 = vlaneseq
    %v159 = vshrl.u32 %v158, 7
    %v160 = vsub.s32 3, %v159
    %v161 = vrot.slane %v144, %v160
    %v162 = vlaneseq
    %v163 = vshrl.u32 %v162, 7
    %v164 = vsub.s32 4, %v163
    %v165 = vrot.slane %v144, %v164
    %v166 = vlaneseq
    %v167 = vshrl.u32 %v166, 7
    %v168 = vsub.s32 5, %v167
    %v169 = vrot.slane %v144, %v168
    %v170 = vlaneseq
    %v171 = vshrl.u32 %v170, 7
    %v172 = vsub.s32 6, %v171
    %v173 = vrot.slane %v144, %v172
    %v174 = vlaneseq
    %v175 = vshrl.u32 %v174, 7
    %v176 = vsub.s32 7, %v175
    %v177 = vrot.slane %v144, %v176
    %vm186 = vcmask 408576
    %v188 = vsel %vm186, %v87, 0
    %vm190 = vcmask 1041408
    %v192 = vsel %vm190, %v136, 0
    %v195 = vsel %vm190, %v137, 0
    %v198 = vsel %vm190, %v138, 0
    %v201 = vsel %vm190, %v139, 0
    %v204 = vsel %vm190, %v140, 0
    %v207 = vsel %vm190, %v141, 0
    %v210 = vsel %vm190, %v142, 0
    %v213 = vsel %vm190, %v143, 0
    %215 = vmatprep.subr.mxu0 %v89
    %216 = vmatpush1.msra.mxu0 %v88
    %217 = vmatprep.subr.mxu0 %v97
    %218 = vmatpush1.msra.mxu0 %v96
    %219 = vmatprep.subr.mxu0 %v105
    %220 = vmatpush1.msra.mxu0 %v104
    %221 = vmatprep.subr.mxu0 %v113
    %222 = vmatpush1.msra.mxu0 %v112
    %223 = vmatprep.subr.mxu0 %v121
    %224 = vmatpush1.msra.mxu0 %v120
    %225 = vmatprep.subr.mxu0 %v129
    %226 = vmatpush1.msra.mxu0 %v128
    %227 = vmatprep.subr.mxu0 %v195
    %228 = vmatpush1.msra.mxu0 %v192
    %229 = vmatprep.subr.mxu0 0.0
    %230 = vmatpush1.msra.mxu0 0.0
    %231 = vmatprep.subr.mxu0 0.0
    %232 = vmatpush1.msra.mxu0 0.0
    %233 = vmatprep.subr.mxu0 0.0
    %234 = vmatpush1.msra.mxu0 0.0
    %235 = vmatprep.subr.mxu0 0.0
    %236 = vmatpush1.msra.mxu0 0.0
    %237 = vmatprep.subr.mxu0 0.0
    %238 = vmatpush1.msra.mxu0 0.0
    %239 = vmatprep.subr.mxu0 0.0
    %240 = vmatpush1.msra.mxu0 0.0
    %241 = vmatprep.subr.mxu0 0.0
    %242 = vmatpush1.msra.mxu0 0.0
    %243 = vmatprep.subr.mxu0 0.0
    %244 = vmatpush1.msra.mxu0 0.0
    %245 = vmatprep.subr.mxu0 0.0
    %246 = vmatpush1.msra.mxu0 0.0
    %247 = vmatprep.subr.mxu0 0.0
    %248 = vmatpush1.msra.mxu0 0.0
    %249 = vmatprep.subr.mxu0 0.0
    %250 = vmatpush1.msra.mxu0 0.0
    %251 = vmatprep.subr.mxu0 0.0
    %252 = vmatpush1.msra.mxu0 0.0
    %253 = vmatprep.subr.mxu0 0.0
    %254 = vmatpush1.msra.mxu0 0.0
    %255 = vmatprep.subr.mxu0 0.0
    %256 = vmatpush1.msra.mxu0 0.0
    %257 = vmatprep.subr.mxu0 0.0
    %258 = vmatpush1.msra.mxu0 0.0
    %259 = vmatprep.subr.mxu0 0.0
    %260 = vmatpush1.msra.mxu0 0.0
    %261 = vmatprep.subr.mxu0 0.0
    %262 = vmatpush1.msra.mxu0 0.0
    %263 = vmatprep.subr.mxu0 0.0
    %264 = vmatpush1.msra.mxu0 0.0
    %265 = vmatprep.subr.mxu0 0.0
    %266 = vmatpush1.msra.mxu0 0.0
    %267 = vmatprep.subr.mxu0 0.0
    %268 = vmatpush1.msra.mxu0 0.0
    %269 = vmatprep.subr.mxu0 0.0
    %270 = vmatpush1.msra.mxu0 0.0
    %271 = vmatprep.subr.mxu0 0.0
    %272 = vmatpush1.msra.mxu0 0.0
    %273 = vmatprep.subr.mxu0 0.0
    %274 = vmatpush1.msra.mxu0 0.0
    %275 = vmatprep.subr.mxu0 0.0
    %276 = vmatpush1.msra.mxu0 0.0
    %277 = vmatprep.subr.mxu0 0.0
    %278 = vmatpush1.msra.mxu0 0.0
    %279 = vmatprep.mubr.f32.mxu0 0.0
    %280 = vmatmul.mubr.f32.gmra.mrb[0].mxu0 %v188
    %v281 = vpop.f32.mrb[0].mxu0
    %v282 = vadd.f32 %v149, %v281
    %v283 = vpop.f32.mrb[0].mxu0
    %v284 = vadd.f32 %v153, %v283
    %285 = vdwg.mxu0
    %286 = vmatprep.subr.mxu0 %v91
    %287 = vmatpush1.msra.mxu0 %v90
    %288 = vmatprep.subr.mxu0 %v99
    %289 = vmatpush1.msra.mxu0 %v98
    %290 = vmatprep.subr.mxu0 %v107
    %291 = vmatpush1.msra.mxu0 %v106
    %292 = vmatprep.subr.mxu0 %v115
    %293 = vmatpush1.msra.mxu0 %v114
    %294 = vmatprep.subr.mxu0 %v123
    %295 = vmatpush1.msra.mxu0 %v122
    %296 = vmatprep.subr.mxu0 %v131
    %297 = vmatpush1.msra.mxu0 %v130
    %298 = vmatprep.subr.mxu0 %v201
    %299 = vmatpush1.msra.mxu0 %v198
    %300 = vmatprep.subr.mxu0 0.0
    %301 = vmatpush1.msra.mxu0 0.0
    %302 = vmatprep.subr.mxu0 0.0
    %303 = vmatpush1.msra.mxu0 0.0
    %304 = vmatprep.subr.mxu0 0.0
    %305 = vmatpush1.msra.mxu0 0.0
    %306 = vmatprep.subr.mxu0 0.0
    %307 = vmatpush1.msra.mxu0 0.0
    %308 = vmatprep.subr.mxu0 0.0
    %309 = vmatpush1.msra.mxu0 0.0
    %310 = vmatprep.subr.mxu0 0.0
    %311 = vmatpush1.msra.mxu0 0.0
    %312 = vmatprep.subr.mxu0 0.0
    %313 = vmatpush1.msra.mxu0 0.0
    %314 = vmatprep.subr.mxu0 0.0
    %315 = vmatpush1.msra.mxu0 0.0
    %316 = vmatprep.subr.mxu0 0.0
    %317 = vmatpush1.msra.mxu0 0.0
    %318 = vmatprep.subr.mxu0 0.0
    %319 = vmatpush1.msra.mxu0 0.0
    %320 = vmatprep.subr.mxu0 0.0
    %321 = vmatpush1.msra.mxu0 0.0
    %322 = vmatprep.subr.mxu0 0.0
    %323 = vmatpush1.msra.mxu0 0.0
    %324 = vmatprep.subr.mxu0 0.0
    %325 = vmatpush1.msra.mxu0 0.0
    %326 = vmatprep.subr.mxu0 0.0
    %327 = vmatpush1.msra.mxu0 0.0
    %328 = vmatprep.subr.mxu0 0.0
    %329 = vmatpush1.msra.mxu0 0.0
    %330 = vmatprep.subr.mxu0 0.0
    %331 = vmatpush1.msra.mxu0 0.0
    %332 = vmatprep.subr.mxu0 0.0
    %333 = vmatpush1.msra.mxu0 0.0
    %334 = vmatprep.subr.mxu0 0.0
    %335 = vmatpush1.msra.mxu0 0.0
    %336 = vmatprep.subr.mxu0 0.0
    %337 = vmatpush1.msra.mxu0 0.0
    %338 = vmatprep.subr.mxu0 0.0
    %339 = vmatpush1.msra.mxu0 0.0
    %340 = vmatprep.subr.mxu0 0.0
    %341 = vmatpush1.msra.mxu0 0.0
    %342 = vmatprep.subr.mxu0 0.0
    %343 = vmatpush1.msra.mxu0 0.0
    %344 = vmatprep.subr.mxu0 0.0
    %345 = vmatpush1.msra.mxu0 0.0
    %346 = vmatprep.subr.mxu0 0.0
    %347 = vmatpush1.msra.mxu0 0.0
    %348 = vmatprep.subr.mxu0 0.0
    %349 = vmatpush1.msra.mxu0 0.0
    %350 = vmatprep.mubr.f32.mxu0 0.0
    %351 = vmatmul.mubr.f32.gmra.mrb[0].mxu0 %v188
    %v352 = vpop.f32.mrb[0].mxu0
    %v353 = vadd.f32 %v157, %v352
    %v354 = vpop.f32.mrb[0].mxu0
    %v355 = vadd.f32 %v161, %v354
    %356 = vdwg.mxu0
    %357 = vmatprep.subr.mxu0 %v93
    %358 = vmatpush1.msra.mxu0 %v92
    %359 = vmatprep.subr.mxu0 %v101
    %360 = vmatpush1.msra.mxu0 %v100
    %361 = vmatprep.subr.mxu0 %v109
    %362 = vmatpush1.msra.mxu0 %v108
    %363 = vmatprep.subr.mxu0 %v117
    %364 = vmatpush1.msra.mxu0 %v116
    %365 = vmatprep.subr.mxu0 %v125
    %366 = vmatpush1.msra.mxu0 %v124
    %367 = vmatprep.subr.mxu0 %v133
    %368 = vmatpush1.msra.mxu0 %v132
    %369 = vmatprep.subr.mxu0 %v207
    %370 = vmatpush1.msra.mxu0 %v204
    %371 = vmatprep.subr.mxu0 0.0
    %372 = vmatpush1.msra.mxu0 0.0
    %373 = vmatprep.subr.mxu0 0.0
    %374 = vmatpush1.msra.mxu0 0.0
    %375 = vmatprep.subr.mxu0 0.0
    %376 = vmatpush1.msra.mxu0 0.0
    %377 = vmatprep.subr.mxu0 0.0
    %378 = vmatpush1.msra.mxu0 0.0
    %379 = vmatprep.subr.mxu0 0.0
    %380 = vmatpush1.msra.mxu0 0.0
    %381 = vmatprep.subr.mxu0 0.0
    %382 = vmatpush1.msra.mxu0 0.0
    %383 = vmatprep.subr.mxu0 0.0
    %384 = vmatpush1.msra.mxu0 0.0
    %385 = vmatprep.subr.mxu0 0.0
    %386 = vmatpush1.msra.mxu0 0.0
    %387 = vmatprep.subr.mxu0 0.0
    %388 = vmatpush1.msra.mxu0 0.0
    %389 = vmatprep.subr.mxu0 0.0
    %390 = vmatpush1.msra.mxu0 0.0
    %391 = vmatprep.subr.mxu0 0.0
    %392 = vmatpush1.msra.mxu0 0.0
    %393 = vmatprep.subr.mxu0 0.0
    %394 = vmatpush1.msra.mxu0 0.0
    %395 = vmatprep.subr.mxu0 0.0
    %396 = vmatpush1.msra.mxu0 0.0
    %397 = vmatprep.subr.mxu0 0.0
    %398 = vmatpush1.msra.mxu0 0.0
    %399 = vmatprep.subr.mxu0 0.0
    %400 = vmatpush1.msra.mxu0 0.0
    %401 = vmatprep.subr.mxu0 0.0
    %402 = vmatpush1.msra.mxu0 0.0
    %403 = vmatprep.subr.mxu0 0.0
    %404 = vmatpush1.msra.mxu0 0.0
    %405 = vmatprep.subr.mxu0 0.0
    %406 = vmatpush1.msra.mxu0 0.0
    %407 = vmatprep.subr.mxu0 0.0
    %408 = vmatpush1.msra.mxu0 0.0
    %409 = vmatprep.subr.mxu0 0.0
    %410 = vmatpush1.msra.mxu0 0.0
    %411 = vmatprep.subr.mxu0 0.0
    %412 = vmatpush1.msra.mxu0 0.0
    %413 = vmatprep.subr.mxu0 0.0
    %414 = vmatpush1.msra.mxu0 0.0
    %415 = vmatprep.subr.mxu0 0.0
    %416 = vmatpush1.msra.mxu0 0.0
    %417 = vmatprep.subr.mxu0 0.0
    %418 = vmatpush1.msra.mxu0 0.0
    %419 = vmatprep.subr.mxu0 0.0
    %420 = vmatpush1.msra.mxu0 0.0
    %421 = vmatprep.mubr.f32.mxu0 0.0
    %422 = vmatmul.mubr.f32.gmra.mrb[0].mxu0 %v188
    %v423 = vpop.f32.mrb[0].mxu0
    %v424 = vadd.f32 %v165, %v423
    %v425 = vpop.f32.mrb[0].mxu0
    %v426 = vadd.f32 %v169, %v425
    %427 = vdwg.mxu0
    %428 = vmatprep.subr.mxu0 %v95
    %429 = vmatpush1.msra.mxu0 %v94
    %430 = vmatprep.subr.mxu0 %v103
    %431 = vmatpush1.msra.mxu0 %v102
    %432 = vmatprep.subr.mxu0 %v111
    %433 = vmatpush1.msra.mxu0 %v110
    %434 = vmatprep.subr.mxu0 %v119
    %435 = vmatpush1.msra.mxu0 %v118
    %436 = vmatprep.subr.mxu0 %v127
    %437 = vmatpush1.msra.mxu0 %v126
    %438 = vmatprep.subr.mxu0 %v135
    %439 = vmatpush1.msra.mxu0 %v134
    %440 = vmatprep.subr.mxu0 %v213
    %441 = vmatpush1.msra.mxu0 %v210
    %442 = vmatprep.subr.mxu0 0.0
    %443 = vmatpush1.msra.mxu0 0.0
    %444 = vmatprep.subr.mxu0 0.0
    %445 = vmatpush1.msra.mxu0 0.0
    %446 = vmatprep.subr.mxu0 0.0
    %447 = vmatpush1.msra.mxu0 0.0
    %448 = vmatprep.subr.mxu0 0.0
    %449 = vmatpush1.msra.mxu0 0.0
    %450 = vmatprep.subr.mxu0 0.0
    %451 = vmatpush1.msra.mxu0 0.0
    %452 = vmatprep.subr.mxu0 0.0
    %453 = vmatpush1.msra.mxu0 0.0
    %454 = vmatprep.subr.mxu0 0.0
    %455 = vmatpush1.msra.mxu0 0.0
    %456 = vmatprep.subr.mxu0 0.0
    %457 = vmatpush1.msra.mxu0 0.0
    %458 = vmatprep.subr.mxu0 0.0
    %459 = vmatpush1.msra.mxu0 0.0
    %460 = vmatprep.subr.mxu0 0.0
    %461 = vmatpush1.msra.mxu0 0.0
    %462 = vmatprep.subr.mxu0 0.0
    %463 = vmatpush1.msra.mxu0 0.0
    %464 = vmatprep.subr.mxu0 0.0
    %465 = vmatpush1.msra.mxu0 0.0
    %466 = vmatprep.subr.mxu0 0.0
    %467 = vmatpush1.msra.mxu0 0.0
    %468 = vmatprep.subr.mxu0 0.0
    %469 = vmatpush1.msra.mxu0 0.0
    %470 = vmatprep.subr.mxu0 0.0
    %471 = vmatpush1.msra.mxu0 0.0
    %472 = vmatprep.subr.mxu0 0.0
    %473 = vmatpush1.msra.mxu0 0.0
    %474 = vmatprep.subr.mxu0 0.0
    %475 = vmatpush1.msra.mxu0 0.0
    %476 = vmatprep.subr.mxu0 0.0
    %477 = vmatpush1.msra.mxu0 0.0
    %478 = vmatprep.subr.mxu0 0.0
    %479 = vmatpush1.msra.mxu0 0.0
    %480 = vmatprep.subr.mxu0 0.0
    %481 = vmatpush1.msra.mxu0 0.0
    %482 = vmatprep.subr.mxu0 0.0
    %483 = vmatpush1.msra.mxu0 0.0
    %484 = vmatprep.subr.mxu0 0.0
    %485 = vmatpush1.msra.mxu0 0.0
    %486 = vmatprep.subr.mxu0 0.0
    %487 = vmatpush1.msra.mxu0 0.0
    %488 = vmatprep.subr.mxu0 0.0
    %489 = vmatpush1.msra.mxu0 0.0
    %490 = vmatprep.subr.mxu0 0.0
    %491 = vmatpush1.msra.mxu0 0.0
    %492 = vmatprep.mubr.f32.mxu0 0.0
    %493 = vmatmul.mubr.f32.gmra.mrb[0].mxu0 %v188
    %v494 = vpop.f32.mrb[0].mxu0
    %v495 = vadd.f32 %v173, %v494
    %v496 = vpop.f32.mrb[0].mxu0
    %v497 = vadd.f32 %v177, %v496
    %498 = vdwg.mxu0
    %v499 = vld [vmem:[#allocation7] sm:$0xff]
    %v500 = vld [vmem:[#allocation7 + $0x8] sm:$0xff]
    %v501 = vld [vmem:[#allocation7 + $0x10] sm:$0xff]
    %v502 = vld [vmem:[#allocation7 + $0x18] sm:$0xff]
    %v503 = vld [vmem:[#allocation7 + $0x20] sm:$0xff]
    %v504 = vld [vmem:[#allocation7 + $0x28] sm:$0xff]
    %v505 = vld [vmem:[#allocation7 + $0x30] sm:$0xff]
    %v506 = vld [vmem:[#allocation7 + $0x38] sm:$0xff]
    %v507 = vld [vmem:[#allocation7 + $0x40] sm:$0xff]
    %v508 = vld [vmem:[#allocation7 + $0x48] sm:$0xff]
    %v509 = vld [vmem:[#allocation7 + $0x50] sm:$0xff]
    %v510 = vld [vmem:[#allocation7 + $0x58] sm:$0xff]
    %v511 = vld [vmem:[#allocation7 + $0x60] sm:$0xff]
    %v512 = vld [vmem:[#allocation7 + $0x68] sm:$0xff]
    %v513 = vld [vmem:[#allocation7 + $0x70] sm:$0xff]
    %v514 = vld [vmem:[#allocation7 + $0x78] sm:$0xff]
    %v515 = vld [vmem:[#allocation7 + $0x80] sm:$0xff]
    %v516 = vld [vmem:[#allocation7 + $0x88] sm:$0xff]
    %v517 = vld [vmem:[#allocation7 + $0x90] sm:$0xff]
    %v518 = vld [vmem:[#allocation7 + $0x98] sm:$0xff]
    %v519 = vld [vmem:[#allocation7 + $0xa0] sm:$0xff]
    %v520 = vld [vmem:[#allocation7 + $0xa8] sm:$0xff]
    %v521 = vld [vmem:[#allocation7 + $0xb0] sm:$0xff]
    %v522 = vld [vmem:[#allocation7 + $0xb8] sm:$0xff]
    %v523 = vld [vmem:[#allocation7 + $0xc0] sm:$0xff]
    %v524 = vld [vmem:[#allocation7 + $0xc8] sm:$0xff]
    %v525 = vld [vmem:[#allocation7 + $0xd0] sm:$0xff]
    %v526 = vld [vmem:[#allocation7 + $0xd8] sm:$0xff]
    %v527 = vld [vmem:[#allocation7 + $0xe0] sm:$0xff]
    %v528 = vld [vmem:[#allocation7 + $0xe8] sm:$0xff]
    %v529 = vld [vmem:[#allocation7 + $0xf0] sm:$0xff]
    %v530 = vld [vmem:[#allocation7 + $0xf8] sm:$0xff]
    %v531 = vld [vmem:[#allocation7 + $0x100] sm:$0xff]
    %v532 = vld [vmem:[#allocation7 + $0x108] sm:$0xff]
    %v533 = vld [vmem:[#allocation7 + $0x110] sm:$0xff]
    %v534 = vld [vmem:[#allocation7 + $0x118] sm:$0xff]
    %v535 = vld [vmem:[#allocation7 + $0x120] sm:$0xff]
    %v536 = vld [vmem:[#allocation7 + $0x128] sm:$0xff]
    %v537 = vld [vmem:[#allocation7 + $0x130] sm:$0xff]
    %v538 = vld [vmem:[#allocation7 + $0x138] sm:$0xff]
    %v539 = vld [vmem:[#allocation7 + $0x140] sm:$0xff]
    %v540 = vld [vmem:[#allocation7 + $0x148] sm:$0xff]
    %v541 = vld [vmem:[#allocation7 + $0x150] sm:$0xff]
    %v542 = vld [vmem:[#allocation7 + $0x158] sm:$0xff]
    %v543 = vld [vmem:[#allocation7 + $0x160] sm:$0xff]
    %v544 = vld [vmem:[#allocation7 + $0x168] sm:$0xff]
    %v545 = vld [vmem:[#allocation7 + $0x170] sm:$0xff]
    %v546 = vld [vmem:[#allocation7 + $0x178] sm:$0xff]
    %v547 = vld [vmem:[#allocation7 + $0x180] sm:$0xff]
    %v548 = vld [vmem:[#allocation7 + $0x188] sm:$0xff]
    %v549 = vld [vmem:[#allocation7 + $0x190] sm:$0xff]
    %v550 = vld [vmem:[#allocation7 + $0x198] sm:$0xff]
    %v551 = vld [vmem:[#allocation7 + $0x1a0] sm:$0xff]
    %v552 = vld [vmem:[#allocation7 + $0x1a8] sm:$0xff]
    %v553 = vld [vmem:[#allocation7 + $0x1b0] sm:$0xff]
    %v554 = vld [vmem:[#allocation7 + $0x1b8] sm:$0xff]
    %v555 = vld [vmem:[#allocation7 + $0x1c0] sm:$0xff]
    %v556 = vld [vmem:[#allocation7 + $0x1c8] sm:$0xff]
    %v557 = vld [vmem:[#allocation7 + $0x1d0] sm:$0xff]
    %v558 = vld [vmem:[#allocation7 + $0x1d8] sm:$0xff]
    %v559 = vld [vmem:[#allocation7 + $0x1e0] sm:$0xff]
    %v560 = vld [vmem:[#allocation7 + $0x1e8] sm:$0xff]
    %v561 = vld [vmem:[#allocation7 + $0x1f0] sm:$0xff]
    %v562 = vld [vmem:[#allocation7 + $0x1f8] sm:$0xff]
    %v563 = vld [vmem:[#allocation7 + $0x200] sm:$0xff]
    %v564 = vld [vmem:[#allocation7 + $0x208] sm:$0xff]
    %v565 = vld [vmem:[#allocation7 + $0x210] sm:$0xff]
    %v566 = vld [vmem:[#allocation7 + $0x218] sm:$0xff]
    %v567 = vld [vmem:[#allocation7 + $0x220] sm:$0xff]
    %v568 = vld [vmem:[#allocation7 + $0x228] sm:$0xff]
    %v569 = vld [vmem:[#allocation7 + $0x230] sm:$0xff]
    %v570 = vld [vmem:[#allocation7 + $0x238] sm:$0xff]
    %v571 = vld [vmem:[#allocation7 + $0x240] sm:$0xff]
    %v572 = vld [vmem:[#allocation7 + $0x248] sm:$0xff]
    %v573 = vld [vmem:[#allocation7 + $0x250] sm:$0xff]
    %v574 = vld [vmem:[#allocation7 + $0x258] sm:$0xff]
    %v575 = vld [vmem:[#allocation7 + $0x260] sm:$0xff]
    %v576 = vld [vmem:[#allocation7 + $0x268] sm:$0xff]
    %v577 = vld [vmem:[#allocation7 + $0x270] sm:$0xff]
    %v578 = vld [vmem:[#allocation7 + $0x278] sm:$0xff]
    %v579 = vld [vmem:[#allocation7 + $0x280] sm:$0xff]
    %v580 = vld [vmem:[#allocation7 + $0x288] sm:$0xff]
    %v581 = vld [vmem:[#allocation7 + $0x290] sm:$0xff]
    %v582 = vld [vmem:[#allocation7 + $0x298] sm:$0xff]
    %v583 = vld [vmem:[#allocation7 + $0x2a0] sm:$0xff]
    %v584 = vld [vmem:[#allocation7 + $0x2a8] sm:$0xff]
    %v585 = vld [vmem:[#allocation7 + $0x2b0] sm:$0xff]
    %v586 = vld [vmem:[#allocation7 + $0x2b8] sm:$0xff]
    %v587 = vld [vmem:[#allocation7 + $0x2c0] sm:$0xff]
    %v588 = vld [vmem:[#allocation7 + $0x2c8] sm:$0xff]
    %v589 = vld [vmem:[#allocation7 + $0x2d0] sm:$0xff]
    %v590 = vld [vmem:[#allocation7 + $0x2d8] sm:$0xff]
    %v591 = vld [vmem:[#allocation7 + $0x2e0] sm:$0xff]
    %v592 = vld [vmem:[#allocation7 + $0x2e8] sm:$0xff]
    %v593 = vld [vmem:[#allocation7 + $0x2f0] sm:$0xff]
    %v594 = vld [vmem:[#allocation7 + $0x2f8] sm:$0xff]
    %v595 = vld [vmem:[#allocation7 + $0x300] sm:$0xff]
    %v596 = vld [vmem:[#allocation7 + $0x308] sm:$0xff]
    %v597 = vld [vmem:[#allocation7 + $0x310] sm:$0xff]
    %v598 = vld [vmem:[#allocation7 + $0x318] sm:$0xff]
    %v599 = vld [vmem:[#allocation7 + $0x320] sm:$0xff]
    %v600 = vld [vmem:[#allocation7 + $0x328] sm:$0xff]
    %v601 = vld [vmem:[#allocation7 + $0x330] sm:$0xff]
    %v602 = vld [vmem:[#allocation7 + $0x338] sm:$0xff]
    %v603 = vld [vmem:[#allocation7 + $0x340] sm:$0xff]
    %v604 = vld [vmem:[#allocation7 + $0x348] sm:$0xff]
    %v605 = vld [vmem:[#allocation7 + $0x350] sm:$0xff]
    %v606 = vld [vmem:[#allocation7 + $0x358] sm:$0xff]
    %v607 = vld [vmem:[#allocation7 + $0x360] sm:$0xff]
    %v608 = vld [vmem:[#allocation7 + $0x368] sm:$0xff]
    %v609 = vld [vmem:[#allocation7 + $0x370] sm:$0xff]
    %v610 = vld [vmem:[#allocation7 + $0x378] sm:$0xff]
    %v611 = vld [vmem:[#allocation7 + $0x380] sm:$0xff]
    %v612 = vld [vmem:[#allocation7 + $0x388] sm:$0xff]
    %v613 = vld [vmem:[#allocation7 + $0x390] sm:$0xff]
    %v614 = vld [vmem:[#allocation7 + $0x398] sm:$0xff]
    %v615 = vld [vmem:[#allocation7 + $0x3a0] sm:$0xff]
    %v616 = vld [vmem:[#allocation7 + $0x3a8] sm:$0xff]
    %v617 = vld [vmem:[#allocation7 + $0x3b0] sm:$0xff]
    %v618 = vld [vmem:[#allocation7 + $0x3b8] sm:$0xff]
    %v619 = vld [vmem:[#allocation7 + $0x3c0] sm:$0xff]
    %v620 = vld [vmem:[#allocation7 + $0x3c8] sm:$0xff]
    %v621 = vld [vmem:[#allocation7 + $0x3d0] sm:$0xff]
    %v622 = vld [vmem:[#allocation7 + $0x3d8] sm:$0xff]
    %v623 = vld [vmem:[#allocation7 + $0x3e0] sm:$0xff]
    %v624 = vld [vmem:[#allocation7 + $0x3e8] sm:$0xff]
    %v625 = vld [vmem:[#allocation7 + $0x3f0] sm:$0xff]
    %v626 = vld [vmem:[#allocation7 + $0x3f8] sm:$0xff]
    %v627 = vld [vmem:[#allocation7 + $0x400] sm:$0xff]
    %v628 = vld [vmem:[#allocation7 + $0x408] sm:$0xff]
    %v629 = vld [vmem:[#allocation7 + $0x410] sm:$0xff]
    %v630 = vld [vmem:[#allocation7 + $0x418] sm:$0xff]
    %v631 = vld [vmem:[#allocation7 + $0x420] sm:$0xff]
    %v632 = vld [vmem:[#allocation7 + $0x428] sm:$0xff]
    %v633 = vld [vmem:[#allocation7 + $0x430] sm:$0xff]
    %v634 = vld [vmem:[#allocation7 + $0x438] sm:$0xff]
    %v635 = vld [vmem:[#allocation7 + $0x440] sm:$0xff]
    %v636 = vld [vmem:[#allocation7 + $0x448] sm:$0xff]
    %v637 = vld [vmem:[#allocation7 + $0x450] sm:$0xff]
    %v638 = vld [vmem:[#allocation7 + $0x458] sm:$0xff]
    %v639 = vld [vmem:[#allocation7 + $0x460] sm:$0xff]
    %v640 = vld [vmem:[#allocation7 + $0x468] sm:$0xff]
    %v641 = vld [vmem:[#allocation7 + $0x470] sm:$0xff]
    %v642 = vld [vmem:[#allocation7 + $0x478] sm:$0xff]
    %v643 = vld [vmem:[#allocation7 + $0x480] sm:$0xff]
    %v644 = vld [vmem:[#allocation7 + $0x488] sm:$0xff]
    %v645 = vld [vmem:[#allocation7 + $0x490] sm:$0xff]
    %v646 = vld [vmem:[#allocation7 + $0x498] sm:$0xff]
    %v647 = vld [vmem:[#allocation7 + $0x4a0] sm:$0xff]
    %v648 = vld [vmem:[#allocation7 + $0x4a8] sm:$0xff]
    %v649 = vld [vmem:[#allocation7 + $0x4b0] sm:$0xff]
    %v650 = vld [vmem:[#allocation7 + $0x4b8] sm:$0xff]
    %v651 = vld [vmem:[#allocation7 + $0x4c0] sm:$0xff]
    %v652 = vld [vmem:[#allocation7 + $0x4c8] sm:$0xff]
    %v653 = vld [vmem:[#allocation7 + $0x4d0] sm:$0xff]
    %v654 = vld [vmem:[#allocation7 + $0x4d8] sm:$0xff]
    %v655 = vld [vmem:[#allocation7 + $0x4e0] sm:$0xff]
    %v656 = vld [vmem:[#allocation7 + $0x4e8] sm:$0xff]
    %v657 = vld [vmem:[#allocation7 + $0x4f0] sm:$0xff]
    %v658 = vld [vmem:[#allocation7 + $0x4f8] sm:$0xff]
    %v659 = vld [vmem:[#allocation7 + $0x500] sm:$0xff]
    %v660 = vld [vmem:[#allocation7 + $0x508] sm:$0xff]
    %v661 = vld [vmem:[#allocation7 + $0x510] sm:$0xff]
    %v662 = vld [vmem:[#allocation7 + $0x518] sm:$0xff]
    %v663 = vld [vmem:[#allocation7 + $0x520] sm:$0xff]
    %v664 = vld [vmem:[#allocation7 + $0x528] sm:$0xff]
    %v665 = vld [vmem:[#allocation7 + $0x530] sm:$0xff]
    %v666 = vld [vmem:[#allocation7 + $0x538] sm:$0xff]
    %v667 = vld [vmem:[#allocation7 + $0x540] sm:$0xff]
    %v668 = vld [vmem:[#allocation7 + $0x548] sm:$0xff]
    %v669 = vld [vmem:[#allocation7 + $0x550] sm:$0xff]
    %v670 = vld [vmem:[#allocation7 + $0x558] sm:$0xff]
    %v671 = vld [vmem:[#allocation7 + $0x560] sm:$0xff]
    %v672 = vld [vmem:[#allocation7 + $0x568] sm:$0xff]
    %v673 = vld [vmem:[#allocation7 + $0x570] sm:$0xff]
    %v674 = vld [vmem:[#allocation7 + $0x578] sm:$0xff]
    %v675 = vld [vmem:[#allocation7 + $0x580] sm:$0xff]
    %v676 = vld [vmem:[#allocation7 + $0x588] sm:$0xff]
    %v677 = vld [vmem:[#allocation7 + $0x590] sm:$0xff]
    %v678 = vld [vmem:[#allocation7 + $0x598] sm:$0xff]
    %v679 = vld [vmem:[#allocation7 + $0x5a0] sm:$0xff]
    %v680 = vld [vmem:[#allocation7 + $0x5a8] sm:$0xff]
    %v681 = vld [vmem:[#allocation7 + $0x5b0] sm:$0xff]
    %v682 = vld [vmem:[#allocation7 + $0x5b8] sm:$0xff]
    %v683 = vld [vmem:[#allocation7 + $0x5c0] sm:$0xff]
    %v684 = vld [vmem:[#allocation7 + $0x5c8] sm:$0xff]
    %v685 = vld [vmem:[#allocation7 + $0x5d0] sm:$0xff]
    %v686 = vld [vmem:[#allocation7 + $0x5d8] sm:$0xff]
    %v687 = vld [vmem:[#allocation7 + $0x5e0] sm:$0xff]
    %v688 = vld [vmem:[#allocation7 + $0x5e8] sm:$0xff]
    %v689 = vld [vmem:[#allocation7 + $0x5f0] sm:$0xff]
    %v690 = vld [vmem:[#allocation7 + $0x5f8] sm:$0xff]
    %v691 = vld [vmem:[#allocation7 + $0x600] sm:$0xff]
    %v692 = vld [vmem:[#allocation7 + $0x608] sm:$0xff]
    %v693 = vld [vmem:[#allocation7 + $0x610] sm:$0xff]
    %v694 = vld [vmem:[#allocation7 + $0x618] sm:$0xff]
    %v695 = vld [vmem:[#allocation7 + $0x620] sm:$0xff]
    %v696 = vld [vmem:[#allocation7 + $0x628] sm:$0xff]
    %v697 = vld [vmem:[#allocation7 + $0x630] sm:$0xff]
    %v698 = vld [vmem:[#allocation7 + $0x638] sm:$0xff]
    %v699 = vld [vmem:[#allocation7 + $0x640] sm:$0xff]
    %v700 = vld [vmem:[#allocation7 + $0x648] sm:$0xff]
    %v701 = vld [vmem:[#allocation7 + $0x650] sm:$0xff]
    %v702 = vld [vmem:[#allocation7 + $0x658] sm:$0xff]
    %v703 = vld [vmem:[#allocation7 + $0x660] sm:$0xff]
    %v704 = vld [vmem:[#allocation7 + $0x668] sm:$0xff]
    %v705 = vld [vmem:[#allocation7 + $0x670] sm:$0xff]
    %v706 = vld [vmem:[#allocation7 + $0x678] sm:$0xff]
    %v707 = vld [vmem:[#allocation7 + $0x680] sm:$0xff]
    %v708 = vld [vmem:[#allocation7 + $0x688] sm:$0xff]
    %v709 = vld [vmem:[#allocation7 + $0x690] sm:$0xff]
    %v710 = vld [vmem:[#allocation7 + $0x698] sm:$0xff]
    %v711 = vld [vmem:[#allocation7 + $0x6a0] sm:$0xff]
    %v712 = vld [vmem:[#allocation7 + $0x6a8] sm:$0xff]
    %v713 = vld [vmem:[#allocation7 + $0x6b0] sm:$0xff]
    %v714 = vld [vmem:[#allocation7 + $0x6b8] sm:$0xff]
    %v715 = vld [vmem:[#allocation7 + $0x6c0] sm:$0xff]
    %v716 = vld [vmem:[#allocation7 + $0x6c8] sm:$0xff]
    %v717 = vld [vmem:[#allocation7 + $0x6d0] sm:$0xff]
    %v718 = vld [vmem:[#allocation7 + $0x6d8] sm:$0xff]
    %v719 = vld [vmem:[#allocation7 + $0x6e0] sm:$0xff]
    %v720 = vld [vmem:[#allocation7 + $0x6e8] sm:$0xff]
    %v721 = vld [vmem:[#allocation7 + $0x6f0] sm:$0xff]
    %v722 = vld [vmem:[#allocation7 + $0x6f8] sm:$0xff]
    %v723 = vld [vmem:[#allocation7 + $0x700] sm:$0xff]
    %v724 = vld [vmem:[#allocation7 + $0x708] sm:$0xff]
    %v725 = vld [vmem:[#allocation7 + $0x710] sm:$0xff]
    %v726 = vld [vmem:[#allocation7 + $0x718] sm:$0xff]
    %v727 = vld [vmem:[#allocation7 + $0x720] sm:$0xff]
    %v728 = vld [vmem:[#allocation7 + $0x728] sm:$0xff]
    %v729 = vld [vmem:[#allocation7 + $0x730] sm:$0xff]
    %v730 = vld [vmem:[#allocation7 + $0x738] sm:$0xff]
    %v731 = vld [vmem:[#allocation7 + $0x740] sm:$0xff]
    %v732 = vld [vmem:[#allocation7 + $0x748] sm:$0xff]
    %v733 = vld [vmem:[#allocation7 + $0x750] sm:$0xff]
    %v734 = vld [vmem:[#allocation7 + $0x758] sm:$0xff]
    %v735 = vld [vmem:[#allocation7 + $0x760] sm:$0xff]
    %v736 = vld [vmem:[#allocation7 + $0x768] sm:$0xff]
    %v737 = vld [vmem:[#allocation7 + $0x770] sm:$0xff]
    %v738 = vld [vmem:[#allocation7 + $0x778] sm:$0xff]
    %v739 = vld [vmem:[#allocation7 + $0x780] sm:$0xff]
    %v740 = vld [vmem:[#allocation7 + $0x788] sm:$0xff]
    %v741 = vld [vmem:[#allocation7 + $0x790] sm:$0xff]
    %v742 = vld [vmem:[#allocation7 + $0x798] sm:$0xff]
    %v743 = vld [vmem:[#allocation7 + $0x7a0] sm:$0xff]
    %v744 = vld [vmem:[#allocation7 + $0x7a8] sm:$0xff]
    %v745 = vld [vmem:[#allocation7 + $0x7b0] sm:$0xff]
    %v746 = vld [vmem:[#allocation7 + $0x7b8] sm:$0xff]
    %v747 = vld [vmem:[#allocation7 + $0x7c0] sm:$0xff]
    %v748 = vld [vmem:[#allocation7 + $0x7c8] sm:$0xff]
    %v749 = vld [vmem:[#allocation7 + $0x7d0] sm:$0xff]
    %v750 = vld [vmem:[#allocation7 + $0x7d8] sm:$0xff]
    %v751 = vld [vmem:[#allocation7 + $0x7e0] sm:$0xff]
    %v752 = vld [vmem:[#allocation7 + $0x7e8] sm:$0xff]
    %v753 = vld [vmem:[#allocation7 + $0x7f0] sm:$0xff]
    %v754 = vld [vmem:[#allocation7 + $0x7f8] sm:$0xff]
    %v755 = vld [vmem:[%s6] sm:$0x3]
    %v756 = vld [vmem:[%s7] sm:$0x3]
    %v758 = vlaneseq
    %v759 = vshrl.u32 %v758, 7
    %v760 = vsub.s32 0, %v759
    %v761 = vrot.slane %v755, %v760
    %v762 = vlaneseq
    %v763 = vshrl.u32 %v762, 7
    %v764 = vsub.s32 1, %v763
    %v765 = vrot.slane %v755, %v764
    %768 = vmatprep.subr.mxu0 %v500
    %769 = vmatpush1.msra.mxu0 %v499
    %770 = vmatprep.subr.mxu0 %v508
    %771 = vmatpush1.msra.mxu0 %v507
    %772 = vmatprep.subr.mxu0 %v516
    %773 = vmatpush1.msra.mxu0 %v515
    %774 = vmatprep.subr.mxu0 %v524
    %775 = vmatpush1.msra.mxu0 %v523
    %776 = vmatprep.subr.mxu0 %v532
    %777 = vmatpush1.msra.mxu0 %v531
    %778 = vmatprep.subr.mxu0 %v540
    %779 = vmatpush1.msra.mxu0 %v539
    %780 = vmatprep.subr.mxu0 %v548
    %781 = vmatpush1.msra.mxu0 %v547
    %782 = vmatprep.subr.mxu0 %v556
    %783 = vmatpush1.msra.mxu0 %v555
    %784 = vmatprep.subr.mxu0 %v564
    %785 = vmatpush1.msra.mxu0 %v563
    %786 = vmatprep.subr.mxu0 %v572
    %787 = vmatpush1.msra.mxu0 %v571
    %788 = vmatprep.subr.mxu0 %v580
    %789 = vmatpush1.msra.mxu0 %v579
    %790 = vmatprep.subr.mxu0 %v588
    %791 = vmatpush1.msra.mxu0 %v587
    %792 = vmatprep.subr.mxu0 %v596
    %793 = vmatpush1.msra.mxu0 %v595
    %794 = vmatprep.subr.mxu0 %v604
    %795 = vmatpush1.msra.mxu0 %v603
    %796 = vmatprep.subr.mxu0 %v612
    %797 = vmatpush1.msra.mxu0 %v611
    %798 = vmatprep.subr.mxu0 %v620
    %799 = vmatpush1.msra.mxu0 %v619
    %800 = vmatprep.subr.mxu0 %v628
    %801 = vmatpush1.msra.mxu0 %v627
    %802 = vmatprep.subr.mxu0 %v636
    %803 = vmatpush1.msra.mxu0 %v635
    %804 = vmatprep.subr.mxu0 %v644
    %805 = vmatpush1.msra.mxu0 %v643
    %806 = vmatprep.subr.mxu0 %v652
    %807 = vmatpush1.msra.mxu0 %v651
    %808 = vmatprep.subr.mxu0 %v660
    %809 = vmatpush1.msra.mxu0 %v659
    %810 = vmatprep.subr.mxu0 %v668
    %811 = vmatpush1.msra.mxu0 %v667
    %812 = vmatprep.subr.mxu0 %v676
    %813 = vmatpush1.msra.mxu0 %v675
    %814 = vmatprep.subr.mxu0 %v684
    %815 = vmatpush1.msra.mxu0 %v683
    %816 = vmatprep.subr.mxu0 %v692
    %817 = vmatpush1.msra.mxu0 %v691
    %818 = vmatprep.subr.mxu0 %v700
    %819 = vmatpush1.msra.mxu0 %v699
    %820 = vmatprep.subr.mxu0 %v708
    %821 = vmatpush1.msra.mxu0 %v707
    %822 = vmatprep.subr.mxu0 %v716
    %823 = vmatpush1.msra.mxu0 %v715
    %824 = vmatprep.subr.mxu0 %v724
    %825 = vmatpush1.msra.mxu0 %v723
    %826 = vmatprep.subr.mxu0 %v732
    %827 = vmatpush1.msra.mxu0 %v731
    %828 = vmatprep.subr.mxu0 %v740
    %829 = vmatpush1.msra.mxu0 %v739
    %830 = vmatprep.subr.mxu0 %v748
    %831 = vmatpush1.msra.mxu0 %v747
    %832 = vmatprep.mubr.f32.mxu0 %v765
    %833 = vmatmul.mubr.f32.gmra.mrb[0].mxu0 %v761
    %v834 = vpop.f32.mrb[0].mxu0
    %v835 = vadd.f32 0.0, %v834
    %v836 = vpop.f32.mrb[0].mxu0
    %v837 = vadd.f32 0.0, %v836
    %838 = vdwg.mxu0
    %839 = vmatprep.subr.mxu0 %v502
    %840 = vmatpush1.msra.mxu0 %v501
    %841 = vmatprep.subr.mxu0 %v510
    %842 = vmatpush1.msra.mxu0 %v509
    %843 = vmatprep.subr.mxu0 %v518
    %844 = vmatpush1.msra.mxu0 %v517
    %845 = vmatprep.subr.mxu0 %v526
    %846 = vmatpush1.msra.mxu0 %v525
    %847 = vmatprep.subr.mxu0 %v534
    %848 = vmatpush1.msra.mxu0 %v533
    %849 = vmatprep.subr.mxu0 %v542
    %850 = vmatpush1.msra.mxu0 %v541
    %851 = vmatprep.subr.mxu0 %v550
    %852 = vmatpush1.msra.mxu0 %v549
    %853 = vmatprep.subr.mxu0 %v558
    %854 = vmatpush1.msra.mxu0 %v557
    %855 = vmatprep.subr.mxu0 %v566
    %856 = vmatpush1.msra.mxu0 %v565
    %857 = vmatprep.subr.mxu0 %v574
    %858 = vmatpush1.msra.mxu0 %v573
    %859 = vmatprep.subr.mxu0 %v582
    %860 = vmatpush1.msra.mxu0 %v581
    %861 = vmatprep.subr.mxu0 %v590
    %862 = vmatpush1.msra.mxu0 %v589
    %863 = vmatprep.subr.mxu0 %v598
    %864 = vmatpush1.msra.mxu0 %v597
    %865 = vmatprep.subr.mxu0 %v606
    %866 = vmatpush1.msra.mxu0 %v605
    %867 = vmatprep.subr.mxu0 %v614
    %868 = vmatpush1.msra.mxu0 %v613
    %869 = vmatprep.subr.mxu0 %v622
    %870 = vmatpush1.msra.mxu0 %v621
    %871 = vmatprep.subr.mxu0 %v630
    %872 = vmatpush1.msra.mxu0 %v629
    %873 = vmatprep.subr.mxu0 %v638
    %874 = vmatpush1.msra.mxu0 %v637
    %875 = vmatprep.subr.mxu0 %v646
    %876 = vmatpush1.msra.mxu0 %v645
    %877 = vmatprep.subr.mxu0 %v654
    %878 = vmatpush1.msra.mxu0 %v653
    %879 = vmatprep.subr.mxu0 %v662
    %880 = vmatpush1.msra.mxu0 %v661
    %881 = vmatprep.subr.mxu0 %v670
    %882 = vmatpush1.msra.mxu0 %v669
    %883 = vmatprep.subr.mxu0 %v678
    %884 = vmatpush1.msra.mxu0 %v677
    %885 = vmatprep.subr.mxu0 %v686
    %886 = vmatpush1.msra.mxu0 %v685
    %887 = vmatprep.subr.mxu0 %v694
    %888 = vmatpush1.msra.mxu0 %v693
    %889 = vmatprep.subr.mxu0 %v702
    %890 = vmatpush1.msra.mxu0 %v701
    %891 = vmatprep.subr.mxu0 %v710
    %892 = vmatpush1.msra.mxu0 %v709
    %893 = vmatprep.subr.mxu0 %v718
    %894 = vmatpush1.msra.mxu0 %v717
    %895 = vmatprep.subr.mxu0 %v726
    %896 = vmatpush1.msra.mxu0 %v725
    %897 = vmatprep.subr.mxu0 %v734
    %898 = vmatpush1.msra.mxu0 %v733
    %899 = vmatprep.subr.mxu0 %v742
    %900 = vmatpush1.msra.mxu0 %v741
    %901 = vmatprep.subr.mxu0 %v750
    %902 = vmatpush1.msra.mxu0 %v749
    %903 = vmatprep.mubr.f32.mxu0 %v765
    %904 = vmatmul.mubr.f32.gmra.mrb[0].mxu0 %v761
    %v905 = vpop.f32.mrb[0].mxu0
    %v906 = vadd.f32 0.0, %v905
    %v907 = vpop.f32.mrb[0].mxu0
    %v908 = vadd.f32 0.0, %v907
    %909 = vdwg.mxu0
    %910 = vmatprep.subr.mxu0 %v504
    %911 = vmatpush1.msra.mxu0 %v503
    %912 = vmatprep.subr.mxu0 %v512
    %913 = vmatpush1.msra.mxu0 %v511
    %914 = vmatprep.subr.mxu0 %v520
    %915 = vmatpush1.msra.mxu0 %v519
    %916 = vmatprep.subr.mxu0 %v528
    %917 = vmatpush1.msra.mxu0 %v527
    %918 = vmatprep.subr.mxu0 %v536
    %919 = vmatpush1.msra.mxu0 %v535
    %920 = vmatprep.subr.mxu0 %v544
    %921 = vmatpush1.msra.mxu0 %v543
    %922 = vmatprep.subr.mxu0 %v552
    %923 = vmatpush1.msra.mxu0 %v551
    %924 = vmatprep.subr.mxu0 %v560
    %925 = vmatpush1.msra.mxu0 %v559
    %926 = vmatprep.subr.mxu0 %v568
    %927 = vmatpush1.msra.mxu0 %v567
    %928 = vmatprep.subr.mxu0 %v576
    %929 = vmatpush1.msra.mxu0 %v575
    %930 = vmatprep.subr.mxu0 %v584
    %931 = vmatpush1.msra.mxu0 %v583
    %932 = vmatprep.subr.mxu0 %v592
    %933 = vmatpush1.msra.mxu0 %v591
    %934 = vmatprep.subr.mxu0 %v600
    %935 = vmatpush1.msra.mxu0 %v599
    %936 = vmatprep.subr.mxu0 %v608
    %937 = vmatpush1.msra.mxu0 %v607
    %938 = vmatprep.subr.mxu0 %v616
    %939 = vmatpush1.msra.mxu0 %v615
    %940 = vmatprep.subr.mxu0 %v624
    %941 = vmatpush1.msra.mxu0 %v623
    %942 = vmatprep.subr.mxu0 %v632
    %943 = vmatpush1.msra.mxu0 %v631
    %944 = vmatprep.subr.mxu0 %v640
    %945 = vmatpush1.msra.mxu0 %v639
    %946 = vmatprep.subr.mxu0 %v648
    %947 = vmatpush1.msra.mxu0 %v647
    %948 = vmatprep.subr.mxu0 %v656
    %949 = vmatpush1.msra.mxu0 %v655
    %950 = vmatprep.subr.mxu0 %v664
    %951 = vmatpush1.msra.mxu0 %v663
    %952 = vmatprep.subr.mxu0 %v672
    %953 = vmatpush1.msra.mxu0 %v671
    %954 = vmatprep.subr.mxu0 %v680
    %955 = vmatpush1.msra.mxu0 %v679
    %956 = vmatprep.subr.mxu0 %v688
    %957 = vmatpush1.msra.mxu0 %v687
    %958 = vmatprep.subr.mxu0 %v696
    %959 = vmatpush1.msra.mxu0 %v695
    %960 = vmatprep.subr.mxu0 %v704
    %961 = vmatpush1.msra.mxu0 %v703
    %962 = vmatprep.subr.mxu0 %v712
    %963 = vmatpush1.msra.mxu0 %v711
    %964 = vmatprep.subr.mxu0 %v720
    %965 = vmatpush1.msra.mxu0 %v719
    %966 = vmatprep.subr.mxu0 %v728
    %967 = vmatpush1.msra.mxu0 %v727
    %968 = vmatprep.subr.mxu0 %v736
    %969 = vmatpush1.msra.mxu0 %v735
    %970 = vmatprep.subr.mxu0 %v744
    %971 = vmatpush1.msra.mxu0 %v743
    %972 = vmatprep.subr.mxu0 %v752
    %973 = vmatpush1.msra.mxu0 %v751
    %974 = vmatprep.mubr.f32.mxu0 %v765
    %975 = vmatmul.mubr.f32.gmra.mrb[0].mxu0 %v761
    %v976 = vpop.f32.mrb[0].mxu0
    %v977 = vadd.f32 0.0, %v976
    %v978 = vpop.f32.mrb[0].mxu0
    %v979 = vadd.f32 0.0, %v978
    %980 = vdwg.mxu0
    %981 = vmatprep.subr.mxu0 %v506
    %982 = vmatpush1.msra.mxu0 %v505
    %983 = vmatprep.subr.mxu0 %v514
    %984 = vmatpush1.msra.mxu0 %v513
    %985 = vmatprep.subr.mxu0 %v522
    %986 = vmatpush1.msra.mxu0 %v521
    %987 = vmatprep.subr.mxu0 %v530
    %988 = vmatpush1.msra.mxu0 %v529
    %989 = vmatprep.subr.mxu0 %v538
    %990 = vmatpush1.msra.mxu0 %v537
    %991 = vmatprep.subr.mxu0 %v546
    %992 = vmatpush1.msra.mxu0 %v545
    %993 = vmatprep.subr.mxu0 %v554
    %994 = vmatpush1.msra.mxu0 %v553
    %995 = vmatprep.subr.mxu0 %v562
    %996 = vmatpush1.msra.mxu0 %v561
    %997 = vmatprep.subr.mxu0 %v570
    %998 = vmatpush1.msra.mxu0 %v569
    %999 = vmatprep.subr.mxu0 %v578
    %1000 = vmatpush1.msra.mxu0 %v577
    %1001 = vmatprep.subr.mxu0 %v586
    %1002 = vmatpush1.msra.mxu0 %v585
    %1003 = vmatprep.subr.mxu0 %v594
    %1004 = vmatpush1.msra.mxu0 %v593
    %1005 = vmatprep.subr.mxu0 %v602
    %1006 = vmatpush1.msra.mxu0 %v601
    %1007 = vmatprep.subr.mxu0 %v610
    %1008 = vmatpush1.msra.mxu0 %v609
    %1009 = vmatprep.subr.mxu0 %v618
    %1010 = vmatpush1.msra.mxu0 %v617
    %1011 = vmatprep.subr.mxu0 %v626
    %1012 = vmatpush1.msra.mxu0 %v625
    %1013 = vmatprep.subr.mxu0 %v634
    %1014 = vmatpush1.msra.mxu0 %v633
    %1015 = vmatprep.subr.mxu0 %v642
    %1016 = vmatpush1.msra.mxu0 %v641
    %1017 = vmatprep.subr.mxu0 %v650
    %1018 = vmatpush1.msra.mxu0 %v649
    %1019 = vmatprep.subr.mxu0 %v658
    %1020 = vmatpush1.msra.mxu0 %v657
    %1021 = vmatprep.subr.mxu0 %v666
    %1022 = vmatpush1.msra.mxu0 %v665
    %1023 = vmatprep.subr.mxu0 %v674
    %1024 = vmatpush1.msra.mxu0 %v673
    %1025 = vmatprep.subr.mxu0 %v682
    %1026 = vmatpush1.msra.mxu0 %v681
    %1027 = vmatprep.subr.mxu0 %v690
    %1028 = vmatpush1.msra.mxu0 %v689
    %1029 = vmatprep.subr.mxu0 %v698
    %1030 = vmatpush1.msra.mxu0 %v697
    %1031 = vmatprep.subr.mxu0 %v706
    %1032 = vmatpush1.msra.mxu0 %v705
    %1033 = vmatprep.subr.mxu0 %v714
    %1034 = vmatpush1.msra.mxu0 %v713
    %1035 = vmatprep.subr.mxu0 %v722
    %1036 = vmatpush1.msra.mxu0 %v721
    %1037 = vmatprep.subr.mxu0 %v730
    %1038 = vmatpush1.msra.mxu0 %v729
    %1039 = vmatprep.subr.mxu0 %v738
    %1040 = vmatpush1.msra.mxu0 %v737
    %1041 = vmatprep.subr.mxu0 %v746
    %1042 = vmatpush1.msra.mxu0 %v745
    %1043 = vmatprep.subr.mxu0 %v754
    %1044 = vmatpush1.msra.mxu0 %v753
    %1045 = vmatprep.mubr.f32.mxu0 %v765
    %1046 = vmatmul.mubr.f32.gmra.mrb[0].mxu0 %v761
    %v1047 = vpop.f32.mrb[0].mxu0
    %v1048 = vadd.f32 0.0, %v1047
    %v1049 = vpop.f32.mrb[0].mxu0
    %v1050 = vadd.f32 0.0, %v1049
    %1051 = vdwg.mxu0
    %v1052 = vadd.f32 %v282, %v835
    %v1053 = vadd.f32 %v284, %v837
    %v1054 = vadd.f32 %v353, %v906
    %v1055 = vadd.f32 %v355, %v908
    %v1056 = vadd.f32 %v424, %v977
    %v1057 = vadd.f32 %v426, %v979
    %v1058 = vadd.f32 %v495, %v1048
    %v1059 = vadd.f32 %v497, %v1050
    %v1060 = vxor.u32 %v1052, 2147483648
    %v1061 = vxor.u32 %v1053, 2147483648
    %v1062 = vxor.u32 %v1054, 2147483648
    %v1063 = vxor.u32 %v1055, 2147483648
    %v1064 = vxor.u32 %v1056, 2147483648
    %v1065 = vxor.u32 %v1057, 2147483648
    %v1066 = vmul.f32 %v1060, 1.442695
    %v1067 = vpow.pop %v1066
    %v1068 = vmul.f32 %v1061, 1.442695
    %v1069 = vpow.pop %v1068
    %v1070 = vmul.f32 %v1062, 1.442695
    %v1071 = vpow.pop %v1070
    %v1072 = vmul.f32 %v1063, 1.442695
    %v1073 = vpow.pop %v1072
    %v1074 = vmul.f32 %v1064, 1.442695
    %v1075 = vpow.pop %v1074
    %v1076 = vmul.f32 %v1065, 1.442695
    %v1077 = vpow.pop %v1076
    %v1078 = vadd.f32 %v1067, 1.0
    %v1079 = vadd.f32 %v1069, 1.0
    %v1080 = vadd.f32 %v1071, 1.0
    %v1081 = vadd.f32 %v1073, 1.0
    %v1082 = vadd.f32 %v1075, 1.0
    %v1083 = vadd.f32 %v1077, 1.0
    %v1084 = vrcp.pop %v1078
    %v1085 = vmul.f32 1.0, %v1084
    %v1086 = vrcp.pop %v1079
    %v1087 = vmul.f32 1.0, %v1086
    %v1088 = vrcp.pop %v1080
    %v1089 = vmul.f32 1.0, %v1088
    %v1090 = vrcp.pop %v1081
    %v1091 = vmul.f32 1.0, %v1090
    %v1092 = vrcp.pop %v1082
    %v1093 = vmul.f32 1.0, %v1092
    %v1094 = vrcp.pop %v1083
    %v1095 = vmul.f32 1.0, %v1094
    %v1096 = vtanh.pop %v1058
    %v1097 = vtanh.pop %v1059
    %v1099 = vlaneseq
    %v1100 = vshrl.u32 %v1099, 7
    %v1101 = vsub.s32 0, %v1100
    %v1102 = vrot.slane %v756, %v1101
    %v1103 = vlaneseq
    %v1104 = vshrl.u32 %v1103, 7
    %v1105 = vsub.s32 1, %v1104
    %v1106 = vrot.slane %v756, %v1105
    %v1109 = vmul.f32 %v1089, %v1102
    %v1110 = vmul.f32 %v1091, %v1106
    %v1111 = vmul.f32 %v1085, %v1096
    %v1112 = vmul.f32 %v1087, %v1097
    %v1113 = vadd.f32 %v1109, %v1111
    %v1114 = vadd.f32 %v1110, %v1112
    %v1115 = vtanh.pop %v1113
    %v1116 = vtanh.pop %v1114
    %v1117 = vmul.f32 %v1093, %v1115
    %v1118 = vmul.f32 %v1095, %v1116
    %1119 = vmatprep.subr.mxu0 %v500
    %1120 = vmatpush1.msra.mxu0 %v499
    %1121 = vmatprep.subr.mxu0 %v508
    %1122 = vmatpush1.msra.mxu0 %v507
    %1123 = vmatprep.subr.mxu0 %v516
    %1124 = vmatpush1.msra.mxu0 %v515
    %1125 = vmatprep.subr.mxu0 %v524
    %1126 = vmatpush1.msra.mxu0 %v523
    %1127 = vmatprep.subr.mxu0 %v532
    %1128 = vmatpush1.msra.mxu0 %v531
    %1129 = vmatprep.subr.mxu0 %v540
    %1130 = vmatpush1.msra.mxu0 %v539
    %1131 = vmatprep.subr.mxu0 %v548
    %1132 = vmatpush1.msra.mxu0 %v547
    %1133 = vmatprep.subr.mxu0 %v556
    %1134 = vmatpush1.msra.mxu0 %v555
    %1135 = vmatprep.subr.mxu0 %v564
    %1136 = vmatpush1.msra.mxu0 %v563
    %1137 = vmatprep.subr.mxu0 %v572
    %1138 = vmatpush1.msra.mxu0 %v571
    %1139 = vmatprep.subr.mxu0 %v580
    %1140 = vmatpush1.msra.mxu0 %v579
    %1141 = vmatprep.subr.mxu0 %v588
    %1142 = vmatpush1.msra.mxu0 %v587
    %1143 = vmatprep.subr.mxu0 %v596
    %1144 = vmatpush1.msra.mxu0 %v595
    %1145 = vmatprep.subr.mxu0 %v604
    %1146 = vmatpush1.msra.mxu0 %v603
    %1147 = vmatprep.subr.mxu0 %v612
    %1148 = vmatpush1.msra.mxu0 %v611
    %1149 = vmatprep.subr.mxu0 %v620
    %1150 = vmatpush1.msra.mxu0 %v619
    %1151 = vmatprep.subr.mxu0 %v628
    %1152 = vmatpush1.msra.mxu0 %v627
    %1153 = vmatprep.subr.mxu0 %v636
    %1154 = vmatpush1.msra.mxu0 %v635
    %1155 = vmatprep.subr.mxu0 %v644
    %1156 = vmatpush1.msra.mxu0 %v643
    %1157 = vmatprep.subr.mxu0 %v652
    %1158 = vmatpush1.msra.mxu0 %v651
    %1159 = vmatprep.subr.mxu0 %v660
    %1160 = vmatpush1.msra.mxu0 %v659
    %1161 = vmatprep.subr.mxu0 %v668
    %1162 = vmatpush1.msra.mxu0 %v667
    %1163 = vmatprep.subr.mxu0 %v676
    %1164 = vmatpush1.msra.mxu0 %v675
    %1165 = vmatprep.subr.mxu0 %v684
    %1166 = vmatpush1.msra.mxu0 %v683
    %1167 = vmatprep.subr.mxu0 %v692
    %1168 = vmatpush1.msra.mxu0 %v691
    %1169 = vmatprep.subr.mxu0 %v700
    %1170 = vmatpush1.msra.mxu0 %v699
    %1171 = vmatprep.subr.mxu0 %v708
    %1172 = vmatpush1.msra.mxu0 %v707
    %1173 = vmatprep.subr.mxu0 %v716
    %1174 = vmatpush1.msra.mxu0 %v715
    %1175 = vmatprep.subr.mxu0 %v724
    %1176 = vmatpush1.msra.mxu0 %v723
    %1177 = vmatprep.subr.mxu0 %v732
    %1178 = vmatpush1.msra.mxu0 %v731
    %1179 = vmatprep.subr.mxu0 %v740
    %1180 = vmatpush1.msra.mxu0 %v739
    %1181 = vmatprep.subr.mxu0 %v748
    %1182 = vmatpush1.msra.mxu0 %v747
    %1183 = vmatprep.mubr.f32.mxu0 %v1118
    %1184 = vmatmul.mubr.f32.gmra.mrb[0].mxu0 %v1117
    %v1185 = vpop.f32.mrb[0].mxu0
    %v1186 = vadd.f32 0.0, %v1185
    %v1187 = vpop.f32.mrb[0].mxu0
    %v1188 = vadd.f32 0.0, %v1187
    %1189 = vdwg.mxu0
    %1190 = vmatprep.subr.mxu0 %v502
    %1191 = vmatpush1.msra.mxu0 %v501
    %1192 = vmatprep.subr.mxu0 %v510
    %1193 = vmatpush1.msra.mxu0 %v509
    %1194 = vmatprep.subr.mxu0 %v518
    %1195 = vmatpush1.msra.mxu0 %v517
    %1196 = vmatprep.subr.mxu0 %v526
    %1197 = vmatpush1.msra.mxu0 %v525
    %1198 = vmatprep.subr.mxu0 %v534
    %1199 = vmatpush1.msra.mxu0 %v533
    %1200 = vmatprep.subr.mxu0 %v542
    %1201 = vmatpush1.msra.mxu0 %v541
    %1202 = vmatprep.subr.mxu0 %v550
    %1203 = vmatpush1.msra.mxu0 %v549
    %1204 = vmatprep.subr.mxu0 %v558
    %1205 = vmatpush1.msra.mxu0 %v557
    %1206 = vmatprep.subr.mxu0 %v566
    %1207 = vmatpush1.msra.mxu0 %v565
    %1208 = vmatprep.subr.mxu0 %v574
    %1209 = vmatpush1.msra.mxu0 %v573
    %1210 = vmatprep.subr.mxu0 %v582
    %1211 = vmatpush1.msra.mxu0 %v581
    %1212 = vmatprep.subr.mxu0 %v590
    %1213 = vmatpush1.msra.mxu0 %v589
    %1214 = vmatprep.subr.mxu0 %v598
    %1215 = vmatpush1.msra.mxu0 %v597
    %1216 = vmatprep.subr.mxu0 %v606
    %1217 = vmatpush1.msra.mxu0 %v605
    %1218 = vmatprep.subr.mxu0 %v614
    %1219 = vmatpush1.msra.mxu0 %v613
    %1220 = vmatprep.subr.mxu0 %v622
    %1221 = vmatpush1.msra.mxu0 %v621
    %1222 = vmatprep.subr.mxu0 %v630
    %1223 = vmatpush1.msra.mxu0 %v629
    %1224 = vmatprep.subr.mxu0 %v638
    %1225 = vmatpush1.msra.mxu0 %v637
    %1226 = vmatprep.subr.mxu0 %v646
    %1227 = vmatpush1.msra.mxu0 %v645
    %1228 = vmatprep.subr.mxu0 %v654
    %1229 = vmatpush1.msra.mxu0 %v653
    %1230 = vmatprep.subr.mxu0 %v662
    %1231 = vmatpush1.msra.mxu0 %v661
    %1232 = vmatprep.subr.mxu0 %v670
    %1233 = vmatpush1.msra.mxu0 %v669
    %1234 = vmatprep.subr.mxu0 %v678
    %1235 = vmatpush1.msra.mxu0 %v677
    %1236 = vmatprep.subr.mxu0 %v686
    %1237 = vmatpush1.msra.mxu0 %v685
    %1238 = vmatprep.subr.mxu0 %v694
    %1239 = vmatpush1.msra.mxu0 %v693
    %1240 = vmatprep.subr.mxu0 %v702
    %1241 = vmatpush1.msra.mxu0 %v701
    %1242 = vmatprep.subr.mxu0 %v710
    %1243 = vmatpush1.msra.mxu0 %v709
    %1244 = vmatprep.subr.mxu0 %v718
    %1245 = vmatpush1.msra.mxu0 %v717
    %1246 = vmatprep.subr.mxu0 %v726
    %1247 = vmatpush1.msra.mxu0 %v725
    %1248 = vmatprep.subr.mxu0 %v734
    %1249 = vmatpush1.msra.mxu0 %v733
    %1250 = vmatprep.subr.mxu0 %v742
    %1251 = vmatpush1.msra.mxu0 %v741
    %1252 = vmatprep.subr.mxu0 %v750
    %1253 = vmatpush1.msra.mxu0 %v749
    %1254 = vmatprep.mubr.f32.mxu0 %v1118
    %1255 = vmatmul.mubr.f32.gmra.mrb[0].mxu0 %v1117
    %v1256 = vpop.f32.mrb[0].mxu0
    %v1257 = vadd.f32 0.0, %v1256
    %v1258 = vpop.f32.mrb[0].mxu0
    %v1259 = vadd.f32 0.0, %v1258
    %1260 = vdwg.mxu0
    %1261 = vmatprep.subr.mxu0 %v504
    %1262 = vmatpush1.msra.mxu0 %v503
    %1263 = vmatprep.subr.mxu0 %v512
    %1264 = vmatpush1.msra.mxu0 %v511
    %1265 = vmatprep.subr.mxu0 %v520
    %1266 = vmatpush1.msra.mxu0 %v519
    %1267 = vmatprep.subr.mxu0 %v528
    %1268 = vmatpush1.msra.mxu0 %v527
    %1269 = vmatprep.subr.mxu0 %v536
    %1270 = vmatpush1.msra.mxu0 %v535
    %1271 = vmatprep.subr.mxu0 %v544
    %1272 = vmatpush1.msra.mxu0 %v543
    %1273 = vmatprep.subr.mxu0 %v552
    %1274 = vmatpush1.msra.mxu0 %v551
    %1275 = vmatprep.subr.mxu0 %v560
    %1276 = vmatpush1.msra.mxu0 %v559
    %1277 = vmatprep.subr.mxu0 %v568
    %1278 = vmatpush1.msra.mxu0 %v567
    %1279 = vmatprep.subr.mxu0 %v576
    %1280 = vmatpush1.msra.mxu0 %v575
    %1281 = vmatprep.subr.mxu0 %v584
    %1282 = vmatpush1.msra.mxu0 %v583
    %1283 = vmatprep.subr.mxu0 %v592
    %1284 = vmatpush1.msra.mxu0 %v591
    %1285 = vmatprep.subr.mxu0 %v600
    %1286 = vmatpush1.msra.mxu0 %v599
    %1287 = vmatprep.subr.mxu0 %v608
    %1288 = vmatpush1.msra.mxu0 %v607
    %1289 = vmatprep.subr.mxu0 %v616
    %1290 = vmatpush1.msra.mxu0 %v615
    %1291 = vmatprep.subr.mxu0 %v624
    %1292 = vmatpush1.msra.mxu0 %v623
    %1293 = vmatprep.subr.mxu0 %v632
    %1294 = vmatpush1.msra.mxu0 %v631
    %1295 = vmatprep.subr.mxu0 %v640
    %1296 = vmatpush1.msra.mxu0 %v639
    %1297 = vmatprep.subr.mxu0 %v648
    %1298 = vmatpush1.msra.mxu0 %v647
    %1299 = vmatprep.subr.mxu0 %v656
    %1300 = vmatpush1.msra.mxu0 %v655
    %1301 = vmatprep.subr.mxu0 %v664
    %1302 = vmatpush1.msra.mxu0 %v663
    %1303 = vmatprep.subr.mxu0 %v672
    %1304 = vmatpush1.msra.mxu0 %v671
    %1305 = vmatprep.subr.mxu0 %v680
    %1306 = vmatpush1.msra.mxu0 %v679
    %1307 = vmatprep.subr.mxu0 %v688
    %1308 = vmatpush1.msra.mxu0 %v687
    %1309 = vmatprep.subr.mxu0 %v696
    %1310 = vmatpush1.msra.mxu0 %v695
    %1311 = vmatprep.subr.mxu0 %v704
    %1312 = vmatpush1.msra.mxu0 %v703
    %1313 = vmatprep.subr.mxu0 %v712
    %1314 = vmatpush1.msra.mxu0 %v711
    %1315 = vmatprep.subr.mxu0 %v720
    %1316 = vmatpush1.msra.mxu0 %v719
    %1317 = vmatprep.subr.mxu0 %v728
    %1318 = vmatpush1.msra.mxu0 %v727
    %1319 = vmatprep.subr.mxu0 %v736
    %1320 = vmatpush1.msra.mxu0 %v735
    %1321 = vmatprep.subr.mxu0 %v744
    %1322 = vmatpush1.msra.mxu0 %v743
    %1323 = vmatprep.subr.mxu0 %v752
    %1324 = vmatpush1.msra.mxu0 %v751
    %1325 = vmatprep.mubr.f32.mxu0 %v1118
    %1326 = vmatmul.mubr.f32.gmra.mrb[0].mxu0 %v1117
    %v1327 = vpop.f32.mrb[0].mxu0
    %v1328 = vadd.f32 0.0, %v1327
    %v1329 = vpop.f32.mrb[0].mxu0
    %v1330 = vadd.f32 0.0, %v1329
    %1331 = vdwg.mxu0
    %1332 = vmatprep.subr.mxu0 %v506
    %1333 = vmatpush1.msra.mxu0 %v505
    %1334 = vmatprep.subr.mxu0 %v514
    %1335 = vmatpush1.msra.mxu0 %v513
    %1336 = vmatprep.subr.mxu0 %v522
    %1337 = vmatpush1.msra.mxu0 %v521
    %1338 = vmatprep.subr.mxu0 %v530
    %1339 = vmatpush1.msra.mxu0 %v529
    %1340 = vmatprep.subr.mxu0 %v538
    %1341 = vmatpush1.msra.mxu0 %v537
    %1342 = vmatprep.subr.mxu0 %v546
    %1343 = vmatpush1.msra.mxu0 %v545
    %1344 = vmatprep.subr.mxu0 %v554
    %1345 = vmatpush1.msra.mxu0 %v553
    %1346 = vmatprep.subr.mxu0 %v562
    %1347 = vmatpush1.msra.mxu0 %v561
    %1348 = vmatprep.subr.mxu0 %v570
    %1349 = vmatpush1.msra.mxu0 %v569
    %1350 = vmatprep.subr.mxu0 %v578
    %1351 = vmatpush1.msra.mxu0 %v577
    %1352 = vmatprep.subr.mxu0 %v586
    %1353 = vmatpush1.msra.mxu0 %v585
    %1354 = vmatprep.subr.mxu0 %v594
    %1355 = vmatpush1.msra.mxu0 %v593
    %1356 = vmatprep.subr.mxu0 %v602
    %1357 = vmatpush1.msra.mxu0 %v601
    %1358 = vmatprep.subr.mxu0 %v610
    %1359 = vmatpush1.msra.mxu0 %v609
    %1360 = vmatprep.subr.mxu0 %v618
    %1361 = vmatpush1.msra.mxu0 %v617
    %1362 = vmatprep.subr.mxu0 %v626
    %1363 = vmatpush1.msra.mxu0 %v625
    %1364 = vmatprep.subr.mxu0 %v634
    %1365 = vmatpush1.msra.mxu0 %v633
    %1366 = vmatprep.subr.mxu0 %v642
    %1367 = vmatpush1.msra.mxu0 %v641
    %1368 = vmatprep.subr.mxu0 %v650
    %1369 = vmatpush1.msra.mxu0 %v649
    %1370 = vmatprep.subr.mxu0 %v658
    %1371 = vmatpush1.msra.mxu0 %v657
    %1372 = vmatprep.subr.mxu0 %v666
    %1373 = vmatpush1.msra.mxu0 %v665
    %1374 = vmatprep.subr.mxu0 %v674
    %1375 = vmatpush1.msra.mxu0 %v673
    %1376 = vmatprep.subr.mxu0 %v682
    %1377 = vmatpush1.msra.mxu0 %v681
    %1378 = vmatprep.subr.mxu0 %v690
    %1379 = vmatpush1.msra.mxu0 %v689
    %1380 = vmatprep.subr.mxu0 %v698
    %1381 = vmatpush1.msra.mxu0 %v697
    %1382 = vmatprep.subr.mxu0 %v706
    %1383 = vmatpush1.msra.mxu0 %v705
    %1384 = vmatprep.subr.mxu0 %v714
    %1385 = vmatpush1.msra.mxu0 %v713
    %1386 = vmatprep.subr.mxu0 %v722
    %1387 = vmatpush1.msra.mxu0 %v721
    %1388 = vmatprep.subr.mxu0 %v730
    %1389 = vmatpush1.msra.mxu0 %v729
    %1390 = vmatprep.subr.mxu0 %v738
    %1391 = vmatpush1.msra.mxu0 %v737
    %1392 = vmatprep.subr.mxu0 %v746
    %1393 = vmatpush1.msra.mxu0 %v745
    %1394 = vmatprep.subr.mxu0 %v754
    %1395 = vmatpush1.msra.mxu0 %v753
    %1396 = vmatprep.mubr.f32.mxu0 %v1118
    %1397 = vmatmul.mubr.f32.gmra.mrb[0].mxu0 %v1117
    %v1398 = vpop.f32.mrb[0].mxu0
    %v1399 = vadd.f32 0.0, %v1398
    %v1400 = vpop.f32.mrb[0].mxu0
    %v1401 = vadd.f32 0.0, %v1400
    %1402 = vdwg.mxu0
    %v1411 = vrot.slane %v1186, 7
    %v1412 = vrot.slane %v1188, 7
    %v1413 = vrot.slane %v1257, 7
    %v1414 = vrot.slane %v1259, 7
    %v1415 = vrot.slane %v1328, 7
    %v1416 = vrot.slane %v1330, 7
    %v1417 = vrot.slane %v1399, 7
    %v1418 = vrot.slane %v1401, 7
    %v1427 = vadd.f32 %v282, %v1411
    %v1428 = vadd.f32 %v284, %v1412
    %v1429 = vadd.f32 %v353, %v1413
    %v1430 = vadd.f32 %v355, %v1414
    %v1431 = vadd.f32 %v424, %v1415
    %v1432 = vadd.f32 %v426, %v1416
    %v1433 = vadd.f32 %v495, %v1417
    %v1434 = vadd.f32 %v497, %v1418
    %v1435 = vxor.u32 %v1427, 2147483648
    %v1436 = vxor.u32 %v1428, 2147483648
    %v1437 = vxor.u32 %v1429, 2147483648
    %v1438 = vxor.u32 %v1430, 2147483648
    %v1439 = vxor.u32 %v1431, 2147483648
    %v1440 = vxor.u32 %v1432, 2147483648
    %v1441 = vmul.f32 %v1435, 1.442695
    %v1442 = vpow.pop %v1441
    %v1443 = vmul.f32 %v1436, 1.442695
    %v1444 = vpow.pop %v1443
    %v1445 = vmul.f32 %v1437, 1.442695
    %v1446 = vpow.pop %v1445
    %v1447 = vmul.f32 %v1438, 1.442695
    %v1448 = vpow.pop %v1447
    %v1449 = vmul.f32 %v1439, 1.442695
    %v1450 = vpow.pop %v1449
    %v1451 = vmul.f32 %v1440, 1.442695
    %v1452 = vpow.pop %v1451
    %v1453 = vadd.f32 %v1442, 1.0
    %v1454 = vadd.f32 %v1444, 1.0
    %v1455 = vadd.f32 %v1446, 1.0
    %v1456 = vadd.f32 %v1448, 1.0
    %v1457 = vadd.f32 %v1450, 1.0
    %v1458 = vadd.f32 %v1452, 1.0
    %v1459 = vrcp.pop %v1453
    %v1460 = vmul.f32 1.0, %v1459
    %v1461 = vrcp.pop %v1454
    %v1462 = vmul.f32 1.0, %v1461
    %v1463 = vrcp.pop %v1455
    %v1464 = vmul.f32 1.0, %v1463
    %v1465 = vrcp.pop %v1456
    %v1466 = vmul.f32 1.0, %v1465
    %v1467 = vrcp.pop %v1457
    %v1468 = vmul.f32 1.0, %v1467
    %v1469 = vrcp.pop %v1458
    %v1470 = vmul.f32 1.0, %v1469
    %v1471 = vtanh.pop %v1433
    %v1472 = vtanh.pop %v1434
    %v1475 = vrot.slane %v1113, 7
    %v1476 = vrot.slane %v1114, 7
    %v1479 = vmul.f32 %v1464, %v1475
    %v1480 = vmul.f32 %v1466, %v1476
    %v1481 = vmul.f32 %v1460, %v1471
    %v1482 = vmul.f32 %v1462, %v1472
    %v1483 = vadd.f32 %v1479, %v1481
    %v1484 = vadd.f32 %v1480, %v1482
    %v1485 = vtanh.pop %v1483
    %v1486 = vtanh.pop %v1484
    %v1487 = vmul.f32 %v1468, %v1485
    %v1488 = vmul.f32 %v1470, %v1486
    %v1491 = vrot.slane %v1487, 1
    %v1492 = vrot.slane %v1488, 1
    %1495 = vmatprep.subr.mxu0 %v500
    %1496 = vmatpush1.msra.mxu0 %v499
    %1497 = vmatprep.subr.mxu0 %v508
    %1498 = vmatpush1.msra.mxu0 %v507
    %1499 = vmatprep.subr.mxu0 %v516
    %1500 = vmatpush1.msra.mxu0 %v515
    %1501 = vmatprep.subr.mxu0 %v524
    %1502 = vmatpush1.msra.mxu0 %v523
    %1503 = vmatprep.subr.mxu0 %v532
    %1504 = vmatpush1.msra.mxu0 %v531
    %1505 = vmatprep.subr.mxu0 %v540
    %1506 = vmatpush1.msra.mxu0 %v539
    %1507 = vmatprep.subr.mxu0 %v548
    %1508 = vmatpush1.msra.mxu0 %v547
    %1509 = vmatprep.subr.mxu0 %v556
    %1510 = vmatpush1.msra.mxu0 %v555
    %1511 = vmatprep.subr.mxu0 %v564
    %1512 = vmatpush1.msra.mxu0 %v563
    %1513 = vmatprep.subr.mxu0 %v572
    %1514 = vmatpush1.msra.mxu0 %v571
    %1515 = vmatprep.subr.mxu0 %v580
    %1516 = vmatpush1.msra.mxu0 %v579
    %1517 = vmatprep.subr.mxu0 %v588
    %1518 = vmatpush1.msra.mxu0 %v587
    %1519 = vmatprep.subr.mxu0 %v596
    %1520 = vmatpush1.msra.mxu0 %v595
    %1521 = vmatprep.subr.mxu0 %v604
    %1522 = vmatpush1.msra.mxu0 %v603
    %1523 = vmatprep.subr.mxu0 %v612
    %1524 = vmatpush1.msra.mxu0 %v611
    %1525 = vmatprep.subr.mxu0 %v620
    %1526 = vmatpush1.msra.mxu0 %v619
    %1527 = vmatprep.subr.mxu0 %v628
    %1528 = vmatpush1.msra.mxu0 %v627
    %1529 = vmatprep.subr.mxu0 %v636
    %1530 = vmatpush1.msra.mxu0 %v635
    %1531 = vmatprep.subr.mxu0 %v644
    %1532 = vmatpush1.msra.mxu0 %v643
    %1533 = vmatprep.subr.mxu0 %v652
    %1534 = vmatpush1.msra.mxu0 %v651
    %1535 = vmatprep.subr.mxu0 %v660
    %1536 = vmatpush1.msra.mxu0 %v659
    %1537 = vmatprep.subr.mxu0 %v668
    %1538 = vmatpush1.msra.mxu0 %v667
    %1539 = vmatprep.subr.mxu0 %v676
    %1540 = vmatpush1.msra.mxu0 %v675
    %1541 = vmatprep.subr.mxu0 %v684
    %1542 = vmatpush1.msra.mxu0 %v683
    %1543 = vmatprep.subr.mxu0 %v692
    %1544 = vmatpush1.msra.mxu0 %v691
    %1545 = vmatprep.subr.mxu0 %v700
    %1546 = vmatpush1.msra.mxu0 %v699
    %1547 = vmatprep.subr.mxu0 %v708
    %1548 = vmatpush1.msra.mxu0 %v707
    %1549 = vmatprep.subr.mxu0 %v716
    %1550 = vmatpush1.msra.mxu0 %v715
    %1551 = vmatprep.subr.mxu0 %v724
    %1552 = vmatpush1.msra.mxu0 %v723
    %1553 = vmatprep.subr.mxu0 %v732
    %1554 = vmatpush1.msra.mxu0 %v731
    %1555 = vmatprep.subr.mxu0 %v740
    %1556 = vmatpush1.msra.mxu0 %v739
    %1557 = vmatprep.subr.mxu0 %v748
    %1558 = vmatpush1.msra.mxu0 %v747
    %1559 = vmatprep.mubr.f32.mxu0 %v1492
    %1560 = vmatmul.mubr.f32.gmra.mrb[0].mxu0 %v1491
    %v1561 = vpop.f32.mrb[0].mxu0
    %v1562 = vadd.f32 0.0, %v1561
    %v1563 = vpop.f32.mrb[0].mxu0
    %v1564 = vadd.f32 0.0, %v1563
    %1565 = vdwg.mxu0
    %1566 = vmatprep.subr.mxu0 %v502
    %1567 = vmatpush1.msra.mxu0 %v501
    %1568 = vmatprep.subr.mxu0 %v510
    %1569 = vmatpush1.msra.mxu0 %v509
    %1570 = vmatprep.subr.mxu0 %v518
    %1571 = vmatpush1.msra.mxu0 %v517
    %1572 = vmatprep.subr.mxu0 %v526
    %1573 = vmatpush1.msra.mxu0 %v525
    %1574 = vmatprep.subr.mxu0 %v534
    %1575 = vmatpush1.msra.mxu0 %v533
    %1576 = vmatprep.subr.mxu0 %v542
    %1577 = vmatpush1.msra.mxu0 %v541
    %1578 = vmatprep.subr.mxu0 %v550
    %1579 = vmatpush1.msra.mxu0 %v549
    %1580 = vmatprep.subr.mxu0 %v558
    %1581 = vmatpush1.msra.mxu0 %v557
    %1582 = vmatprep.subr.mxu0 %v566
    %1583 = vmatpush1.msra.mxu0 %v565
    %1584 = vmatprep.subr.mxu0 %v574
    %1585 = vmatpush1.msra.mxu0 %v573
    %1586 = vmatprep.subr.mxu0 %v582
    %1587 = vmatpush1.msra.mxu0 %v581
    %1588 = vmatprep.subr.mxu0 %v590
    %1589 = vmatpush1.msra.mxu0 %v589
    %1590 = vmatprep.subr.mxu0 %v598
    %1591 = vmatpush1.msra.mxu0 %v597
    %1592 = vmatprep.subr.mxu0 %v606
    %1593 = vmatpush1.msra.mxu0 %v605
    %1594 = vmatprep.subr.mxu0 %v614
    %1595 = vmatpush1.msra.mxu0 %v613
    %1596 = vmatprep.subr.mxu0 %v622
    %1597 = vmatpush1.msra.mxu0 %v621
    %1598 = vmatprep.subr.mxu0 %v630
    %1599 = vmatpush1.msra.mxu0 %v629
    %1600 = vmatprep.subr.mxu0 %v638
    %1601 = vmatpush1.msra.mxu0 %v637
    %1602 = vmatprep.subr.mxu0 %v646
    %1603 = vmatpush1.msra.mxu0 %v645
    %1604 = vmatprep.subr.mxu0 %v654
    %1605 = vmatpush1.msra.mxu0 %v653
    %1606 = vmatprep.subr.mxu0 %v662
    %1607 = vmatpush1.msra.mxu0 %v661
    %1608 = vmatprep.subr.mxu0 %v670
    %1609 = vmatpush1.msra.mxu0 %v669
    %1610 = vmatprep.subr.mxu0 %v678
    %1611 = vmatpush1.msra.mxu0 %v677
    %1612 = vmatprep.subr.mxu0 %v686
    %1613 = vmatpush1.msra.mxu0 %v685
    %1614 = vmatprep.subr.mxu0 %v694
    %1615 = vmatpush1.msra.mxu0 %v693
    %1616 = vmatprep.subr.mxu0 %v702
    %1617 = vmatpush1.msra.mxu0 %v701
    %1618 = vmatprep.subr.mxu0 %v710
    %1619 = vmatpush1.msra.mxu0 %v709
    %1620 = vmatprep.subr.mxu0 %v718
    %1621 = vmatpush1.msra.mxu0 %v717
    %1622 = vmatprep.subr.mxu0 %v726
    %1623 = vmatpush1.msra.mxu0 %v725
    %1624 = vmatprep.subr.mxu0 %v734
    %1625 = vmatpush1.msra.mxu0 %v733
    %1626 = vmatprep.subr.mxu0 %v742
    %1627 = vmatpush1.msra.mxu0 %v741
    %1628 = vmatprep.subr.mxu0 %v750
    %1629 = vmatpush1.msra.mxu0 %v749
    %1630 = vmatprep.mubr.f32.mxu0 %v1492
    %1631 = vmatmul.mubr.f32.gmra.mrb[0].mxu0 %v1491
    %v1632 = vpop.f32.mrb[0].mxu0
    %v1633 = vadd.f32 0.0, %v1632
    %v1634 = vpop.f32.mrb[0].mxu0
    %v1635 = vadd.f32 0.0, %v1634
    %1636 = vdwg.mxu0
    %1637 = vmatprep.subr.mxu0 %v504
    %1638 = vmatpush1.msra.mxu0 %v503
    %1639 = vmatprep.subr.mxu0 %v512
    %1640 = vmatpush1.msra.mxu0 %v511
    %1641 = vmatprep.subr.mxu0 %v520
    %1642 = vmatpush1.msra.mxu0 %v519
    %1643 = vmatprep.subr.mxu0 %v528
    %1644 = vmatpush1.msra.mxu0 %v527
    %1645 = vmatprep.subr.mxu0 %v536
    %1646 = vmatpush1.msra.mxu0 %v535
    %1647 = vmatprep.subr.mxu0 %v544
    %1648 = vmatpush1.msra.mxu0 %v543
    %1649 = vmatprep.subr.mxu0 %v552
    %1650 = vmatpush1.msra.mxu0 %v551
    %1651 = vmatprep.subr.mxu0 %v560
    %1652 = vmatpush1.msra.mxu0 %v559
    %1653 = vmatprep.subr.mxu0 %v568
    %1654 = vmatpush1.msra.mxu0 %v567
    %1655 = vmatprep.subr.mxu0 %v576
    %1656 = vmatpush1.msra.mxu0 %v575
    %1657 = vmatprep.subr.mxu0 %v584
    %1658 = vmatpush1.msra.mxu0 %v583
    %1659 = vmatprep.subr.mxu0 %v592
    %1660 = vmatpush1.msra.mxu0 %v591
    %1661 = vmatprep.subr.mxu0 %v600
    %1662 = vmatpush1.msra.mxu0 %v599
    %1663 = vmatprep.subr.mxu0 %v608
    %1664 = vmatpush1.msra.mxu0 %v607
    %1665 = vmatprep.subr.mxu0 %v616
    %1666 = vmatpush1.msra.mxu0 %v615
    %1667 = vmatprep.subr.mxu0 %v624
    %1668 = vmatpush1.msra.mxu0 %v623
    %1669 = vmatprep.subr.mxu0 %v632
    %1670 = vmatpush1.msra.mxu0 %v631
    %1671 = vmatprep.subr.mxu0 %v640
    %1672 = vmatpush1.msra.mxu0 %v639
    %1673 = vmatprep.subr.mxu0 %v648
    %1674 = vmatpush1.msra.mxu0 %v647
    %1675 = vmatprep.subr.mxu0 %v656
    %1676 = vmatpush1.msra.mxu0 %v655
    %1677 = vmatprep.subr.mxu0 %v664
    %1678 = vmatpush1.msra.mxu0 %v663
    %1679 = vmatprep.subr.mxu0 %v672
    %1680 = vmatpush1.msra.mxu0 %v671
    %1681 = vmatprep.subr.mxu0 %v680
    %1682 = vmatpush1.msra.mxu0 %v679
    %1683 = vmatprep.subr.mxu0 %v688
    %1684 = vmatpush1.msra.mxu0 %v687
    %1685 = vmatprep.subr.mxu0 %v696
    %1686 = vmatpush1.msra.mxu0 %v695
    %1687 = vmatprep.subr.mxu0 %v704
    %1688 = vmatpush1.msra.mxu0 %v703
    %1689 = vmatprep.subr.mxu0 %v712
    %1690 = vmatpush1.msra.mxu0 %v711
    %1691 = vmatprep.subr.mxu0 %v720
    %1692 = vmatpush1.msra.mxu0 %v719
    %1693 = vmatprep.subr.mxu0 %v728
    %1694 = vmatpush1.msra.mxu0 %v727
    %1695 = vmatprep.subr.mxu0 %v736
    %1696 = vmatpush1.msra.mxu0 %v735
    %1697 = vmatprep.subr.mxu0 %v744
    %1698 = vmatpush1.msra.mxu0 %v743
    %1699 = vmatprep.subr.mxu0 %v752
    %1700 = vmatpush1.msra.mxu0 %v751
    %1701 = vmatprep.mubr.f32.mxu0 %v1492
    %1702 = vmatmul.mubr.f32.gmra.mrb[0].mxu0 %v1491
    %v1703 = vpop.f32.mrb[0].mxu0
    %v1704 = vadd.f32 0.0, %v1703
    %v1705 = vpop.f32.mrb[0].mxu0
    %v1706 = vadd.f32 0.0, %v1705
    %1707 = vdwg.mxu0
    %1708 = vmatprep.subr.mxu0 %v506
    %1709 = vmatpush1.msra.mxu0 %v505
    %1710 = vmatprep.subr.mxu0 %v514
    %1711 = vmatpush1.msra.mxu0 %v513
    %1712 = vmatprep.subr.mxu0 %v522
    %1713 = vmatpush1.msra.mxu0 %v521
    %1714 = vmatprep.subr.mxu0 %v530
    %1715 = vmatpush1.msra.mxu0 %v529
    %1716 = vmatprep.subr.mxu0 %v538
    %1717 = vmatpush1.msra.mxu0 %v537
    %1718 = vmatprep.subr.mxu0 %v546
    %1719 = vmatpush1.msra.mxu0 %v545
    %1720 = vmatprep.subr.mxu0 %v554
    %1721 = vmatpush1.msra.mxu0 %v553
    %1722 = vmatprep.subr.mxu0 %v562
    %1723 = vmatpush1.msra.mxu0 %v561
    %1724 = vmatprep.subr.mxu0 %v570
    %1725 = vmatpush1.msra.mxu0 %v569
    %1726 = vmatprep.subr.mxu0 %v578
    %1727 = vmatpush1.msra.mxu0 %v577
    %1728 = vmatprep.subr.mxu0 %v586
    %1729 = vmatpush1.msra.mxu0 %v585
    %1730 = vmatprep.subr.mxu0 %v594
    %1731 = vmatpush1.msra.mxu0 %v593
    %1732 = vmatprep.subr.mxu0 %v602
    %1733 = vmatpush1.msra.mxu0 %v601
    %1734 = vmatprep.subr.mxu0 %v610
    %1735 = vmatpush1.msra.mxu0 %v609
    %1736 = vmatprep.subr.mxu0 %v618
    %1737 = vmatpush1.msra.mxu0 %v617
    %1738 = vmatprep.subr.mxu0 %v626
    %1739 = vmatpush1.msra.mxu0 %v625
    %1740 = vmatprep.subr.mxu0 %v634
    %1741 = vmatpush1.msra.mxu0 %v633
    %1742 = vmatprep.subr.mxu0 %v642
    %1743 = vmatpush1.msra.mxu0 %v641
    %1744 = vmatprep.subr.mxu0 %v650
    %1745 = vmatpush1.msra.mxu0 %v649
    %1746 = vmatprep.subr.mxu0 %v658
    %1747 = vmatpush1.msra.mxu0 %v657
    %1748 = vmatprep.subr.mxu0 %v666
    %1749 = vmatpush1.msra.mxu0 %v665
    %1750 = vmatprep.subr.mxu0 %v674
    %1751 = vmatpush1.msra.mxu0 %v673
    %1752 = vmatprep.subr.mxu0 %v682
    %1753 = vmatpush1.msra.mxu0 %v681
    %1754 = vmatprep.subr.mxu0 %v690
    %1755 = vmatpush1.msra.mxu0 %v689
    %1756 = vmatprep.subr.mxu0 %v698
    %1757 = vmatpush1.msra.mxu0 %v697
    %1758 = vmatprep.subr.mxu0 %v706
    %1759 = vmatpush1.msra.mxu0 %v705
    %1760 = vmatprep.subr.mxu0 %v714
    %1761 = vmatpush1.msra.mxu0 %v713
    %1762 = vmatprep.subr.mxu0 %v722
    %1763 = vmatpush1.msra.mxu0 %v721
    %1764 = vmatprep.subr.mxu0 %v730
    %1765 = vmatpush1.msra.mxu0 %v729
    %1766 = vmatprep.subr.mxu0 %v738
    %1767 = vmatpush1.msra.mxu0 %v737
    %1768 = vmatprep.subr.mxu0 %v746
    %1769 = vmatpush1.msra.mxu0 %v745
    %1770 = vmatprep.subr.mxu0 %v754
    %1771 = vmatpush1.msra.mxu0 %v753
    %1772 = vmatprep.mubr.f32.mxu0 %v1492
    %1773 = vmatmul.mubr.f32.gmra.mrb[0].mxu0 %v1491
    %v1774 = vpop.f32.mrb[0].mxu0
    %v1775 = vadd.f32 0.0, %v1774
    %v1776 = vpop.f32.mrb[0].mxu0
    %v1777 = vadd.f32 0.0, %v1776
    %1778 = vdwg.mxu0
    %v1787 = vrot.slane %v1562, 6
    %v1788 = vrot.slane %v1564, 6
    %v1789 = vrot.slane %v1633, 6
    %v1790 = vrot.slane %v1635, 6
    %v1791 = vrot.slane %v1704, 6
    %v1792 = vrot.slane %v1706, 6
    %v1793 = vrot.slane %v1775, 6
    %v1794 = vrot.slane %v1777, 6
    %v1803 = vadd.f32 %v282, %v1787
    %v1804 = vadd.f32 %v284, %v1788
    %v1805 = vadd.f32 %v353, %v1789
    %v1806 = vadd.f32 %v355, %v1790
    %v1807 = vadd.f32 %v424, %v1791
    %v1808 = vadd.f32 %v426, %v1792
    %v1809 = vadd.f32 %v495, %v1793
    %v1810 = vadd.f32 %v497, %v1794
    %v1811 = vxor.u32 %v1803, 2147483648
    %v1812 = vxor.u32 %v1804, 2147483648
    %v1813 = vxor.u32 %v1805, 2147483648
    %v1814 = vxor.u32 %v1806, 2147483648
    %v1815 = vxor.u32 %v1807, 2147483648
    %v1816 = vxor.u32 %v1808, 2147483648
    %v1817 = vmul.f32 %v1811, 1.442695
    %v1818 = vpow.pop %v1817
    %v1819 = vmul.f32 %v1812, 1.442695
    %v1820 = vpow.pop %v1819
    %v1821 = vmul.f32 %v1813, 1.442695
    %v1822 = vpow.pop %v1821
    %v1823 = vmul.f32 %v1814, 1.442695
    %v1824 = vpow.pop %v1823
    %v1825 = vmul.f32 %v1815, 1.442695
    %v1826 = vpow.pop %v1825
    %v1827 = vmul.f32 %v1816, 1.442695
    %v1828 = vpow.pop %v1827
    %v1829 = vadd.f32 %v1818, 1.0
    %v1830 = vadd.f32 %v1820, 1.0
    %v1831 = vadd.f32 %v1822, 1.0
    %v1832 = vadd.f32 %v1824, 1.0
    %v1833 = vadd.f32 %v1826, 1.0
    %v1834 = vadd.f32 %v1828, 1.0
    %v1835 = vrcp.pop %v1829
    %v1836 = vmul.f32 1.0, %v1835
    %v1837 = vrcp.pop %v1830
    %v1838 = vmul.f32 1.0, %v1837
    %v1839 = vrcp.pop %v1831
    %v1840 = vmul.f32 1.0, %v1839
    %v1841 = vrcp.pop %v1832
    %v1842 = vmul.f32 1.0, %v1841
    %v1843 = vrcp.pop %v1833
    %v1844 = vmul.f32 1.0, %v1843
    %v1845 = vrcp.pop %v1834
    %v1846 = vmul.f32 1.0, %v1845
    %v1847 = vtanh.pop %v1809
    %v1848 = vtanh.pop %v1810
    %v1851 = vrot.slane %v1483, 7
    %v1852 = vrot.slane %v1484, 7
    %v1855 = vmul.f32 %v1840, %v1851
    %v1856 = vmul.f32 %v1842, %v1852
    %v1857 = vmul.f32 %v1836, %v1847
    %v1858 = vmul.f32 %v1838, %v1848
    %v1859 = vadd.f32 %v1855, %v1857
    %v1860 = vadd.f32 %v1856, %v1858
    %v1861 = vtanh.pop %v1859
    %v1862 = vtanh.pop %v1860
    %v1863 = vmul.f32 %v1844, %v1861
    %v1864 = vmul.f32 %v1846, %v1862
    %v1867 = vrot.slane %v1863, 2
    %v1868 = vrot.slane %v1864, 2
    %1871 = vmatprep.subr.mxu0 %v500
    %1872 = vmatpush1.msra.mxu0 %v499
    %1873 = vmatprep.subr.mxu0 %v508
    %1874 = vmatpush1.msra.mxu0 %v507
    %1875 = vmatprep.subr.mxu0 %v516
    %1876 = vmatpush1.msra.mxu0 %v515
    %1877 = vmatprep.subr.mxu0 %v524
    %1878 = vmatpush1.msra.mxu0 %v523
    %1879 = vmatprep.subr.mxu0 %v532
    %1880 = vmatpush1.msra.mxu0 %v531
    %1881 = vmatprep.subr.mxu0 %v540
    %1882 = vmatpush1.msra.mxu0 %v539
    %1883 = vmatprep.subr.mxu0 %v548
    %1884 = vmatpush1.msra.mxu0 %v547
    %1885 = vmatprep.subr.mxu0 %v556
    %1886 = vmatpush1.msra.mxu0 %v555
    %1887 = vmatprep.subr.mxu0 %v564
    %1888 = vmatpush1.msra.mxu0 %v563
    %1889 = vmatprep.subr.mxu0 %v572
    %1890 = vmatpush1.msra.mxu0 %v571
    %1891 = vmatprep.subr.mxu0 %v580
    %1892 = vmatpush1.msra.mxu0 %v579
    %1893 = vmatprep.subr.mxu0 %v588
    %1894 = vmatpush1.msra.mxu0 %v587
    %1895 = vmatprep.subr.mxu0 %v596
    %1896 = vmatpush1.msra.mxu0 %v595
    %1897 = vmatprep.subr.mxu0 %v604
    %1898 = vmatpush1.msra.mxu0 %v603
    %1899 = vmatprep.subr.mxu0 %v612
    %1900 = vmatpush1.msra.mxu0 %v611
    %1901 = vmatprep.subr.mxu0 %v620
    %1902 = vmatpush1.msra.mxu0 %v619
    %1903 = vmatprep.subr.mxu0 %v628
    %1904 = vmatpush1.msra.mxu0 %v627
    %1905 = vmatprep.subr.mxu0 %v636
    %1906 = vmatpush1.msra.mxu0 %v635
    %1907 = vmatprep.subr.mxu0 %v644
    %1908 = vmatpush1.msra.mxu0 %v643
    %1909 = vmatprep.subr.mxu0 %v652
    %1910 = vmatpush1.msra.mxu0 %v651
    %1911 = vmatprep.subr.mxu0 %v660
    %1912 = vmatpush1.msra.mxu0 %v659
    %1913 = vmatprep.subr.mxu0 %v668
    %1914 = vmatpush1.msra.mxu0 %v667
    %1915 = vmatprep.subr.mxu0 %v676
    %1916 = vmatpush1.msra.mxu0 %v675
    %1917 = vmatprep.subr.mxu0 %v684
    %1918 = vmatpush1.msra.mxu0 %v683
    %1919 = vmatprep.subr.mxu0 %v692
    %1920 = vmatpush1.msra.mxu0 %v691
    %1921 = vmatprep.subr.mxu0 %v700
    %1922 = vmatpush1.msra.mxu0 %v699
    %1923 = vmatprep.subr.mxu0 %v708
    %1924 = vmatpush1.msra.mxu0 %v707
    %1925 = vmatprep.subr.mxu0 %v716
    %1926 = vmatpush1.msra.mxu0 %v715
    %1927 = vmatprep.subr.mxu0 %v724
    %1928 = vmatpush1.msra.mxu0 %v723
    %1929 = vmatprep.subr.mxu0 %v732
    %1930 = vmatpush1.msra.mxu0 %v731
    %1931 = vmatprep.subr.mxu0 %v740
    %1932 = vmatpush1.msra.mxu0 %v739
    %1933 = vmatprep.subr.mxu0 %v748
    %1934 = vmatpush1.msra.mxu0 %v747
    %1935 = vmatprep.mubr.f32.mxu0 %v1868
    %1936 = vmatmul.mubr.f32.gmra.mrb[0].mxu0 %v1867
    %v1937 = vpop.f32.mrb[0].mxu0
    %v1938 = vadd.f32 0.0, %v1937
    %v1939 = vpop.f32.mrb[0].mxu0
    %v1940 = vadd.f32 0.0, %v1939
    %1941 = vdwg.mxu0
    %1942 = vmatprep.subr.mxu0 %v502
    %1943 = vmatpush1.msra.mxu0 %v501
    %1944 = vmatprep.subr.mxu0 %v510
    %1945 = vmatpush1.msra.mxu0 %v509
    %1946 = vmatprep.subr.mxu0 %v518
    %1947 = vmatpush1.msra.mxu0 %v517
    %1948 = vmatprep.subr.mxu0 %v526
    %1949 = vmatpush1.msra.mxu0 %v525
    %1950 = vmatprep.subr.mxu0 %v534
    %1951 = vmatpush1.msra.mxu0 %v533
    %1952 = vmatprep.subr.mxu0 %v542
    %1953 = vmatpush1.msra.mxu0 %v541
    %1954 = vmatprep.subr.mxu0 %v550
    %1955 = vmatpush1.msra.mxu0 %v549
    %1956 = vmatprep.subr.mxu0 %v558
    %1957 = vmatpush1.msra.mxu0 %v557
    %1958 = vmatprep.subr.mxu0 %v566
    %1959 = vmatpush1.msra.mxu0 %v565
    %1960 = vmatprep.subr.mxu0 %v574
    %1961 = vmatpush1.msra.mxu0 %v573
    %1962 = vmatprep.subr.mxu0 %v582
    %1963 = vmatpush1.msra.mxu0 %v581
    %1964 = vmatprep.subr.mxu0 %v590
    %1965 = vmatpush1.msra.mxu0 %v589
    %1966 = vmatprep.subr.mxu0 %v598
    %1967 = vmatpush1.msra.mxu0 %v597
    %1968 = vmatprep.subr.mxu0 %v606
    %1969 = vmatpush1.msra.mxu0 %v605
    %1970 = vmatprep.subr.mxu0 %v614
    %1971 = vmatpush1.msra.mxu0 %v613
    %1972 = vmatprep.subr.mxu0 %v622
    %1973 = vmatpush1.msra.mxu0 %v621
    %1974 = vmatprep.subr.mxu0 %v630
    %1975 = vmatpush1.msra.mxu0 %v629
    %1976 = vmatprep.subr.mxu0 %v638
    %1977 = vmatpush1.msra.mxu0 %v637
    %1978 = vmatprep.subr.mxu0 %v646
    %1979 = vmatpush1.msra.mxu0 %v645
    %1980 = vmatprep.subr.mxu0 %v654
    %1981 = vmatpush1.msra.mxu0 %v653
    %1982 = vmatprep.subr.mxu0 %v662
    %1983 = vmatpush1.msra.mxu0 %v661
    %1984 = vmatprep.subr.mxu0 %v670
    %1985 = vmatpush1.msra.mxu0 %v669
    %1986 = vmatprep.subr.mxu0 %v678
    %1987 = vmatpush1.msra.mxu0 %v677
    %1988 = vmatprep.subr.mxu0 %v686
    %1989 = vmatpush1.msra.mxu0 %v685
    %1990 = vmatprep.subr.mxu0 %v694
    %1991 = vmatpush1.msra.mxu0 %v693
    %1992 = vmatprep.subr.mxu0 %v702
    %1993 = vmatpush1.msra.mxu0 %v701
    %1994 = vmatprep.subr.mxu0 %v710
    %1995 = vmatpush1.msra.mxu0 %v709
    %1996 = vmatprep.subr.mxu0 %v718
    %1997 = vmatpush1.msra.mxu0 %v717
    %1998 = vmatprep.subr.mxu0 %v726
    %1999 = vmatpush1.msra.mxu0 %v725
    %2000 = vmatprep.subr.mxu0 %v734
    %2001 = vmatpush1.msra.mxu0 %v733
    %2002 = vmatprep.subr.mxu0 %v742
    %2003 = vmatpush1.msra.mxu0 %v741
    %2004 = vmatprep.subr.mxu0 %v750
    %2005 = vmatpush1.msra.mxu0 %v749
    %2006 = vmatprep.mubr.f32.mxu0 %v1868
    %2007 = vmatmul.mubr.f32.gmra.mrb[0].mxu0 %v1867
    %v2008 = vpop.f32.mrb[0].mxu0
    %v2009 = vadd.f32 0.0, %v2008
    %v2010 = vpop.f32.mrb[0].mxu0
    %v2011 = vadd.f32 0.0, %v2010
    %2012 = vdwg.mxu0
    %2013 = vmatprep.subr.mxu0 %v504
    %2014 = vmatpush1.msra.mxu0 %v503
    %2015 = vmatprep.subr.mxu0 %v512
    %2016 = vmatpush1.msra.mxu0 %v511
    %2017 = vmatprep.subr.mxu0 %v520
    %2018 = vmatpush1.msra.mxu0 %v519
    %2019 = vmatprep.subr.mxu0 %v528
    %2020 = vmatpush1.msra.mxu0 %v527
    %2021 = vmatprep.subr.mxu0 %v536
    %2022 = vmatpush1.msra.mxu0 %v535
    %2023 = vmatprep.subr.mxu0 %v544
    %2024 = vmatpush1.msra.mxu0 %v543
    %2025 = vmatprep.subr.mxu0 %v552
    %2026 = vmatpush1.msra.mxu0 %v551
    %2027 = vmatprep.subr.mxu0 %v560
    %2028 = vmatpush1.msra.mxu0 %v559
    %2029 = vmatprep.subr.mxu0 %v568
    %2030 = vmatpush1.msra.mxu0 %v567
    %2031 = vmatprep.subr.mxu0 %v576
    %2032 = vmatpush1.msra.mxu0 %v575
    %2033 = vmatprep.subr.mxu0 %v584
    %2034 = vmatpush1.msra.mxu0 %v583
    %2035 = vmatprep.subr.mxu0 %v592
    %2036 = vmatpush1.msra.mxu0 %v591
    %2037 = vmatprep.subr.mxu0 %v600
    %2038 = vmatpush1.msra.mxu0 %v599
    %2039 = vmatprep.subr.mxu0 %v608
    %2040 = vmatpush1.msra.mxu0 %v607
    %2041 = vmatprep.subr.mxu0 %v616
    %2042 = vmatpush1.msra.mxu0 %v615
    %2043 = vmatprep.subr.mxu0 %v624
    %2044 = vmatpush1.msra.mxu0 %v623
    %2045 = vmatprep.subr.mxu0 %v632
    %2046 = vmatpush1.msra.mxu0 %v631
    %2047 = vmatprep.subr.mxu0 %v640
    %2048 = vmatpush1.msra.mxu0 %v639
    %2049 = vmatprep.subr.mxu0 %v648
    %2050 = vmatpush1.msra.mxu0 %v647
    %2051 = vmatprep.subr.mxu0 %v656
    %2052 = vmatpush1.msra.mxu0 %v655
    %2053 = vmatprep.subr.mxu0 %v664
    %2054 = vmatpush1.msra.mxu0 %v663
    %2055 = vmatprep.subr.mxu0 %v672
    %2056 = vmatpush1.msra.mxu0 %v671
    %2057 = vmatprep.subr.mxu0 %v680
    %2058 = vmatpush1.msra.mxu0 %v679
    %2059 = vmatprep.subr.mxu0 %v688
    %2060 = vmatpush1.msra.mxu0 %v687
    %2061 = vmatprep.subr.mxu0 %v696
    %2062 = vmatpush1.msra.mxu0 %v695
    %2063 = vmatprep.subr.mxu0 %v704
    %2064 = vmatpush1.msra.mxu0 %v703
    %2065 = vmatprep.subr.mxu0 %v712
    %2066 = vmatpush1.msra.mxu0 %v711
    %2067 = vmatprep.subr.mxu0 %v720
    %2068 = vmatpush1.msra.mxu0 %v719
    %2069 = vmatprep.subr.mxu0 %v728
    %2070 = vmatpush1.msra.mxu0 %v727
    %2071 = vmatprep.subr.mxu0 %v736
    %2072 = vmatpush1.msra.mxu0 %v735
    %2073 = vmatprep.subr.mxu0 %v744
    %2074 = vmatpush1.msra.mxu0 %v743
    %2075 = vmatprep.subr.mxu0 %v752
    %2076 = vmatpush1.msra.mxu0 %v751
    %2077 = vmatprep.mubr.f32.mxu0 %v1868
    %2078 = vmatmul.mubr.f32.gmra.mrb[0].mxu0 %v1867
    %v2079 = vpop.f32.mrb[0].mxu0
    %v2080 = vadd.f32 0.0, %v2079
    %v2081 = vpop.f32.mrb[0].mxu0
    %v2082 = vadd.f32 0.0, %v2081
    %2083 = vdwg.mxu0
    %2084 = vmatprep.subr.mxu0 %v506
    %2085 = vmatpush1.msra.mxu0 %v505
    %2086 = vmatprep.subr.mxu0 %v514
    %2087 = vmatpush1.msra.mxu0 %v513
    %2088 = vmatprep.subr.mxu0 %v522
    %2089 = vmatpush1.msra.mxu0 %v521
    %2090 = vmatprep.subr.mxu0 %v530
    %2091 = vmatpush1.msra.mxu0 %v529
    %2092 = vmatprep.subr.mxu0 %v538
    %2093 = vmatpush1.msra.mxu0 %v537
    %2094 = vmatprep.subr.mxu0 %v546
    %2095 = vmatpush1.msra.mxu0 %v545
    %2096 = vmatprep.subr.mxu0 %v554
    %2097 = vmatpush1.msra.mxu0 %v553
    %2098 = vmatprep.subr.mxu0 %v562
    %2099 = vmatpush1.msra.mxu0 %v561
    %2100 = vmatprep.subr.mxu0 %v570
    %2101 = vmatpush1.msra.mxu0 %v569
    %2102 = vmatprep.subr.mxu0 %v578
    %2103 = vmatpush1.msra.mxu0 %v577
    %2104 = vmatprep.subr.mxu0 %v586
    %2105 = vmatpush1.msra.mxu0 %v585
    %2106 = vmatprep.subr.mxu0 %v594
    %2107 = vmatpush1.msra.mxu0 %v593
    %2108 = vmatprep.subr.mxu0 %v602
    %2109 = vmatpush1.msra.mxu0 %v601
    %2110 = vmatprep.subr.mxu0 %v610
    %2111 = vmatpush1.msra.mxu0 %v609
    %2112 = vmatprep.subr.mxu0 %v618
    %2113 = vmatpush1.msra.mxu0 %v617
    %2114 = vmatprep.subr.mxu0 %v626
    %2115 = vmatpush1.msra.mxu0 %v625
    %2116 = vmatprep.subr.mxu0 %v634
    %2117 = vmatpush1.msra.mxu0 %v633
    %2118 = vmatprep.subr.mxu0 %v642
    %2119 = vmatpush1.msra.mxu0 %v641
    %2120 = vmatprep.subr.mxu0 %v650
    %2121 = vmatpush1.msra.mxu0 %v649
    %2122 = vmatprep.subr.mxu0 %v658
    %2123 = vmatpush1.msra.mxu0 %v657
    %2124 = vmatprep.subr.mxu0 %v666
    %2125 = vmatpush1.msra.mxu0 %v665
    %2126 = vmatprep.subr.mxu0 %v674
    %2127 = vmatpush1.msra.mxu0 %v673
    %2128 = vmatprep.subr.mxu0 %v682
    %2129 = vmatpush1.msra.mxu0 %v681
    %2130 = vmatprep.subr.mxu0 %v690
    %2131 = vmatpush1.msra.mxu0 %v689
    %2132 = vmatprep.subr.mxu0 %v698
    %2133 = vmatpush1.msra.mxu0 %v697
    %2134 = vmatprep.subr.mxu0 %v706
    %2135 = vmatpush1.msra.mxu0 %v705
    %2136 = vmatprep.subr.mxu0 %v714
    %2137 = vmatpush1.msra.mxu0 %v713
    %2138 = vmatprep.subr.mxu0 %v722
    %2139 = vmatpush1.msra.mxu0 %v721
    %2140 = vmatprep.subr.mxu0 %v730
    %2141 = vmatpush1.msra.mxu0 %v729
    %2142 = vmatprep.subr.mxu0 %v738
    %2143 = vmatpush1.msra.mxu0 %v737
    %2144 = vmatprep.subr.mxu0 %v746
    %2145 = vmatpush1.msra.mxu0 %v745
    %2146 = vmatprep.subr.mxu0 %v754
    %2147 = vmatpush1.msra.mxu0 %v753
    %2148 = vmatprep.mubr.f32.mxu0 %v1868
    %2149 = vmatmul.mubr.f32.gmra.mrb[0].mxu0 %v1867
    %v2150 = vpop.f32.mrb[0].mxu0
    %v2151 = vadd.f32 0.0, %v2150
    %v2152 = vpop.f32.mrb[0].mxu0
    %v2153 = vadd.f32 0.0, %v2152
    %2154 = vdwg.mxu0
    %v2163 = vrot.slane %v1938, 5
    %v2164 = vrot.slane %v1940, 5
    %v2165 = vrot.slane %v2009, 5
    %v2166 = vrot.slane %v2011, 5
    %v2167 = vrot.slane %v2080, 5
    %v2168 = vrot.slane %v2082, 5
    %v2169 = vrot.slane %v2151, 5
    %v2170 = vrot.slane %v2153, 5
    %v2179 = vadd.f32 %v282, %v2163
    %v2180 = vadd.f32 %v284, %v2164
    %v2181 = vadd.f32 %v353, %v2165
    %v2182 = vadd.f32 %v355, %v2166
    %v2183 = vadd.f32 %v424, %v2167
    %v2184 = vadd.f32 %v426, %v2168
    %v2185 = vadd.f32 %v495, %v2169
    %v2186 = vadd.f32 %v497, %v2170
    %v2187 = vxor.u32 %v2179, 2147483648
    %v2188 = vxor.u32 %v2180, 2147483648
    %v2189 = vxor.u32 %v2181, 2147483648
    %v2190 = vxor.u32 %v2182, 2147483648
    %v2191 = vxor.u32 %v2183, 2147483648
    %v2192 = vxor.u32 %v2184, 2147483648
    %v2193 = vmul.f32 %v2187, 1.442695
    %v2194 = vpow.pop %v2193
    %v2195 = vmul.f32 %v2188, 1.442695
    %v2196 = vpow.pop %v2195
    %v2197 = vmul.f32 %v2189, 1.442695
    %v2198 = vpow.pop %v2197
    %v2199 = vmul.f32 %v2190, 1.442695
    %v2200 = vpow.pop %v2199
    %v2201 = vmul.f32 %v2191, 1.442695
    %v2202 = vpow.pop %v2201
    %v2203 = vmul.f32 %v2192, 1.442695
    %v2204 = vpow.pop %v2203
    %v2205 = vadd.f32 %v2194, 1.0
    %v2206 = vadd.f32 %v2196, 1.0
    %v2207 = vadd.f32 %v2198, 1.0
    %v2208 = vadd.f32 %v2200, 1.0
    %v2209 = vadd.f32 %v2202, 1.0
    %v2210 = vadd.f32 %v2204, 1.0
    %v2211 = vrcp.pop %v2205
    %v2212 = vmul.f32 1.0, %v2211
    %v2213 = vrcp.pop %v2206
    %v2214 = vmul.f32 1.0, %v2213
    %v2215 = vrcp.pop %v2207
    %v2216 = vmul.f32 1.0, %v2215
    %v2217 = vrcp.pop %v2208
    %v2218 = vmul.f32 1.0, %v2217
    %v2219 = vrcp.pop %v2209
    %v2220 = vmul.f32 1.0, %v2219
    %v2221 = vrcp.pop %v2210
    %v2222 = vmul.f32 1.0, %v2221
    %v2223 = vtanh.pop %v2185
    %v2224 = vtanh.pop %v2186
    %v2227 = vrot.slane %v1859, 7
    %v2228 = vrot.slane %v1860, 7
    %v2231 = vmul.f32 %v2216, %v2227
    %v2232 = vmul.f32 %v2218, %v2228
    %v2233 = vmul.f32 %v2212, %v2223
    %v2234 = vmul.f32 %v2214, %v2224
    %v2235 = vadd.f32 %v2231, %v2233
    %v2236 = vadd.f32 %v2232, %v2234
    %v2237 = vtanh.pop %v2235
    %v2238 = vtanh.pop %v2236
    %v2239 = vmul.f32 %v2220, %v2237
    %v2240 = vmul.f32 %v2222, %v2238
    %v2243 = vrot.slane %v2239, 3
    %v2244 = vrot.slane %v2240, 3
    %2247 = vmatprep.subr.mxu0 %v500
    %2248 = vmatpush1.msra.mxu0 %v499
    %2249 = vmatprep.subr.mxu0 %v508
    %2250 = vmatpush1.msra.mxu0 %v507
    %2251 = vmatprep.subr.mxu0 %v516
    %2252 = vmatpush1.msra.mxu0 %v515
    %2253 = vmatprep.subr.mxu0 %v524
    %2254 = vmatpush1.msra.mxu0 %v523
    %2255 = vmatprep.subr.mxu0 %v532
    %2256 = vmatpush1.msra.mxu0 %v531
    %2257 = vmatprep.subr.mxu0 %v540
    %2258 = vmatpush1.msra.mxu0 %v539
    %2259 = vmatprep.subr.mxu0 %v548
    %2260 = vmatpush1.msra.mxu0 %v547
    %2261 = vmatprep.subr.mxu0 %v556
    %2262 = vmatpush1.msra.mxu0 %v555
    %2263 = vmatprep.subr.mxu0 %v564
    %2264 = vmatpush1.msra.mxu0 %v563
    %2265 = vmatprep.subr.mxu0 %v572
    %2266 = vmatpush1.msra.mxu0 %v571
    %2267 = vmatprep.subr.mxu0 %v580
    %2268 = vmatpush1.msra.mxu0 %v579
    %2269 = vmatprep.subr.mxu0 %v588
    %2270 = vmatpush1.msra.mxu0 %v587
    %2271 = vmatprep.subr.mxu0 %v596
    %2272 = vmatpush1.msra.mxu0 %v595
    %2273 = vmatprep.subr.mxu0 %v604
    %2274 = vmatpush1.msra.mxu0 %v603
    %2275 = vmatprep.subr.mxu0 %v612
    %2276 = vmatpush1.msra.mxu0 %v611
    %2277 = vmatprep.subr.mxu0 %v620
    %2278 = vmatpush1.msra.mxu0 %v619
    %2279 = vmatprep.subr.mxu0 %v628
    %2280 = vmatpush1.msra.mxu0 %v627
    %2281 = vmatprep.subr.mxu0 %v636
    %2282 = vmatpush1.msra.mxu0 %v635
    %2283 = vmatprep.subr.mxu0 %v644
    %2284 = vmatpush1.msra.mxu0 %v643
    %2285 = vmatprep.subr.mxu0 %v652
    %2286 = vmatpush1.msra.mxu0 %v651
    %2287 = vmatprep.subr.mxu0 %v660
    %2288 = vmatpush1.msra.mxu0 %v659
    %2289 = vmatprep.subr.mxu0 %v668
    %2290 = vmatpush1.msra.mxu0 %v667
    %2291 = vmatprep.subr.mxu0 %v676
    %2292 = vmatpush1.msra.mxu0 %v675
    %2293 = vmatprep.subr.mxu0 %v684
    %2294 = vmatpush1.msra.mxu0 %v683
    %2295 = vmatprep.subr.mxu0 %v692
    %2296 = vmatpush1.msra.mxu0 %v691
    %2297 = vmatprep.subr.mxu0 %v700
    %2298 = vmatpush1.msra.mxu0 %v699
    %2299 = vmatprep.subr.mxu0 %v708
    %2300 = vmatpush1.msra.mxu0 %v707
    %2301 = vmatprep.subr.mxu0 %v716
    %2302 = vmatpush1.msra.mxu0 %v715
    %2303 = vmatprep.subr.mxu0 %v724
    %2304 = vmatpush1.msra.mxu0 %v723
    %2305 = vmatprep.subr.mxu0 %v732
    %2306 = vmatpush1.msra.mxu0 %v731
    %2307 = vmatprep.subr.mxu0 %v740
    %2308 = vmatpush1.msra.mxu0 %v739
    %2309 = vmatprep.subr.mxu0 %v748
    %2310 = vmatpush1.msra.mxu0 %v747
    %2311 = vmatprep.mubr.f32.mxu0 %v2244
    %2312 = vmatmul.mubr.f32.gmra.mrb[0].mxu0 %v2243
    %v2313 = vpop.f32.mrb[0].mxu0
    %v2314 = vadd.f32 0.0, %v2313
    %v2315 = vpop.f32.mrb[0].mxu0
    %v2316 = vadd.f32 0.0, %v2315
    %2317 = vdwg.mxu0
    %2318 = vmatprep.subr.mxu0 %v502
    %2319 = vmatpush1.msra.mxu0 %v501
    %2320 = vmatprep.subr.mxu0 %v510
    %2321 = vmatpush1.msra.mxu0 %v509
    %2322 = vmatprep.subr.mxu0 %v518
    %2323 = vmatpush1.msra.mxu0 %v517
    %2324 = vmatprep.subr.mxu0 %v526
    %2325 = vmatpush1.msra.mxu0 %v525
    %2326 = vmatprep.subr.mxu0 %v534
    %2327 = vmatpush1.msra.mxu0 %v533
    %2328 = vmatprep.subr.mxu0 %v542
    %2329 = vmatpush1.msra.mxu0 %v541
    %2330 = vmatprep.subr.mxu0 %v550
    %2331 = vmatpush1.msra.mxu0 %v549
    %2332 = vmatprep.subr.mxu0 %v558
    %2333 = vmatpush1.msra.mxu0 %v557
    %2334 = vmatprep.subr.mxu0 %v566
    %2335 = vmatpush1.msra.mxu0 %v565
    %2336 = vmatprep.subr.mxu0 %v574
    %2337 = vmatpush1.msra.mxu0 %v573
    %2338 = vmatprep.subr.mxu0 %v582
    %2339 = vmatpush1.msra.mxu0 %v581
    %2340 = vmatprep.subr.mxu0 %v590
    %2341 = vmatpush1.msra.mxu0 %v589
    %2342 = vmatprep.subr.mxu0 %v598
    %2343 = vmatpush1.msra.mxu0 %v597
    %2344 = vmatprep.subr.mxu0 %v606
    %2345 = vmatpush1.msra.mxu0 %v605
    %2346 = vmatprep.subr.mxu0 %v614
    %2347 = vmatpush1.msra.mxu0 %v613
    %2348 = vmatprep.subr.mxu0 %v622
    %2349 = vmatpush1.msra.mxu0 %v621
    %2350 = vmatprep.subr.mxu0 %v630
    %2351 = vmatpush1.msra.mxu0 %v629
    %2352 = vmatprep.subr.mxu0 %v638
    %2353 = vmatpush1.msra.mxu0 %v637
    %2354 = vmatprep.subr.mxu0 %v646
    %2355 = vmatpush1.msra.mxu0 %v645
    %2356 = vmatprep.subr.mxu0 %v654
    %2357 = vmatpush1.msra.mxu0 %v653
    %2358 = vmatprep.subr.mxu0 %v662
    %2359 = vmatpush1.msra.mxu0 %v661
    %2360 = vmatprep.subr.mxu0 %v670
    %2361 = vmatpush1.msra.mxu0 %v669
    %2362 = vmatprep.subr.mxu0 %v678
    %2363 = vmatpush1.msra.mxu0 %v677
    %2364 = vmatprep.subr.mxu0 %v686
    %2365 = vmatpush1.msra.mxu0 %v685
    %2366 = vmatprep.subr.mxu0 %v694
    %2367 = vmatpush1.msra.mxu0 %v693
    %2368 = vmatprep.subr.mxu0 %v702
    %2369 = vmatpush1.msra.mxu0 %v701
    %2370 = vmatprep.subr.mxu0 %v710
    %2371 = vmatpush1.msra.mxu0 %v709
    %2372 = vmatprep.subr.mxu0 %v718
    %2373 = vmatpush1.msra.mxu0 %v717
    %2374 = vmatprep.subr.mxu0 %v726
    %2375 = vmatpush1.msra.mxu0 %v725
    %2376 = vmatprep.subr.mxu0 %v734
    %2377 = vmatpush1.msra.mxu0 %v733
    %2378 = vmatprep.subr.mxu0 %v742
    %2379 = vmatpush1.msra.mxu0 %v741
    %2380 = vmatprep.subr.mxu0 %v750
    %2381 = vmatpush1.msra.mxu0 %v749
    %2382 = vmatprep.mubr.f32.mxu0 %v2244
    %2383 = vmatmul.mubr.f32.gmra.mrb[0].mxu0 %v2243
    %v2384 = vpop.f32.mrb[0].mxu0
    %v2385 = vadd.f32 0.0, %v2384
    %v2386 = vpop.f32.mrb[0].mxu0
    %v2387 = vadd.f32 0.0, %v2386
    %2388 = vdwg.mxu0
    %2389 = vmatprep.subr.mxu0 %v504
    %2390 = vmatpush1.msra.mxu0 %v503
    %2391 = vmatprep.subr.mxu0 %v512
    %2392 = vmatpush1.msra.mxu0 %v511
    %2393 = vmatprep.subr.mxu0 %v520
    %2394 = vmatpush1.msra.mxu0 %v519
    %2395 = vmatprep.subr.mxu0 %v528
    %2396 = vmatpush1.msra.mxu0 %v527
    %2397 = vmatprep.subr.mxu0 %v536
    %2398 = vmatpush1.msra.mxu0 %v535
    %2399 = vmatprep.subr.mxu0 %v544
    %2400 = vmatpush1.msra.mxu0 %v543
    %2401 = vmatprep.subr.mxu0 %v552
    %2402 = vmatpush1.msra.mxu0 %v551
    %2403 = vmatprep.subr.mxu0 %v560
    %2404 = vmatpush1.msra.mxu0 %v559
    %2405 = vmatprep.subr.mxu0 %v568
    %2406 = vmatpush1.msra.mxu0 %v567
    %2407 = vmatprep.subr.mxu0 %v576
    %2408 = vmatpush1.msra.mxu0 %v575
    %2409 = vmatprep.subr.mxu0 %v584
    %2410 = vmatpush1.msra.mxu0 %v583
    %2411 = vmatprep.subr.mxu0 %v592
    %2412 = vmatpush1.msra.mxu0 %v591
    %2413 = vmatprep.subr.mxu0 %v600
    %2414 = vmatpush1.msra.mxu0 %v599
    %2415 = vmatprep.subr.mxu0 %v608
    %2416 = vmatpush1.msra.mxu0 %v607
    %2417 = vmatprep.subr.mxu0 %v616
    %2418 = vmatpush1.msra.mxu0 %v615
    %2419 = vmatprep.subr.mxu0 %v624
    %2420 = vmatpush1.msra.mxu0 %v623
    %2421 = vmatprep.subr.mxu0 %v632
    %2422 = vmatpush1.msra.mxu0 %v631
    %2423 = vmatprep.subr.mxu0 %v640
    %2424 = vmatpush1.msra.mxu0 %v639
    %2425 = vmatprep.subr.mxu0 %v648
    %2426 = vmatpush1.msra.mxu0 %v647
    %2427 = vmatprep.subr.mxu0 %v656
    %2428 = vmatpush1.msra.mxu0 %v655
    %2429 = vmatprep.subr.mxu0 %v664
    %2430 = vmatpush1.msra.mxu0 %v663
    %2431 = vmatprep.subr.mxu0 %v672
    %2432 = vmatpush1.msra.mxu0 %v671
    %2433 = vmatprep.subr.mxu0 %v680
    %2434 = vmatpush1.msra.mxu0 %v679
    %2435 = vmatprep.subr.mxu0 %v688
    %2436 = vmatpush1.msra.mxu0 %v687
    %2437 = vmatprep.subr.mxu0 %v696
    %2438 = vmatpush1.msra.mxu0 %v695
    %2439 = vmatprep.subr.mxu0 %v704
    %2440 = vmatpush1.msra.mxu0 %v703
    %2441 = vmatprep.subr.mxu0 %v712
    %2442 = vmatpush1.msra.mxu0 %v711
    %2443 = vmatprep.subr.mxu0 %v720
    %2444 = vmatpush1.msra.mxu0 %v719
    %2445 = vmatprep.subr.mxu0 %v728
    %2446 = vmatpush1.msra.mxu0 %v727
    %2447 = vmatprep.subr.mxu0 %v736
    %2448 = vmatpush1.msra.mxu0 %v735
    %2449 = vmatprep.subr.mxu0 %v744
    %2450 = vmatpush1.msra.mxu0 %v743
    %2451 = vmatprep.subr.mxu0 %v752
    %2452 = vmatpush1.msra.mxu0 %v751
    %2453 = vmatprep.mubr.f32.mxu0 %v2244
    %2454 = vmatmul.mubr.f32.gmra.mrb[0].mxu0 %v2243
    %v2455 = vpop.f32.mrb[0].mxu0
    %v2456 = vadd.f32 0.0, %v2455
    %v2457 = vpop.f32.mrb[0].mxu0
    %v2458 = vadd.f32 0.0, %v2457
    %2459 = vdwg.mxu0
    %2460 = vmatprep.subr.mxu0 %v506
    %2461 = vmatpush1.msra.mxu0 %v505
    %2462 = vmatprep.subr.mxu0 %v514
    %2463 = vmatpush1.msra.mxu0 %v513
    %2464 = vmatprep.subr.mxu0 %v522
    %2465 = vmatpush1.msra.mxu0 %v521
    %2466 = vmatprep.subr.mxu0 %v530
    %2467 = vmatpush1.msra.mxu0 %v529
    %2468 = vmatprep.subr.mxu0 %v538
    %2469 = vmatpush1.msra.mxu0 %v537
    %2470 = vmatprep.subr.mxu0 %v546
    %2471 = vmatpush1.msra.mxu0 %v545
    %2472 = vmatprep.subr.mxu0 %v554
    %2473 = vmatpush1.msra.mxu0 %v553
    %2474 = vmatprep.subr.mxu0 %v562
    %2475 = vmatpush1.msra.mxu0 %v561
    %2476 = vmatprep.subr.mxu0 %v570
    %2477 = vmatpush1.msra.mxu0 %v569
    %2478 = vmatprep.subr.mxu0 %v578
    %2479 = vmatpush1.msra.mxu0 %v577
    %2480 = vmatprep.subr.mxu0 %v586
    %2481 = vmatpush1.msra.mxu0 %v585
    %2482 = vmatprep.subr.mxu0 %v594
    %2483 = vmatpush1.msra.mxu0 %v593
    %2484 = vmatprep.subr.mxu0 %v602
    %2485 = vmatpush1.msra.mxu0 %v601
    %2486 = vmatprep.subr.mxu0 %v610
    %2487 = vmatpush1.msra.mxu0 %v609
    %2488 = vmatprep.subr.mxu0 %v618
    %2489 = vmatpush1.msra.mxu0 %v617
    %2490 = vmatprep.subr.mxu0 %v626
    %2491 = vmatpush1.msra.mxu0 %v625
    %2492 = vmatprep.subr.mxu0 %v634
    %2493 = vmatpush1.msra.mxu0 %v633
    %2494 = vmatprep.subr.mxu0 %v642
    %2495 = vmatpush1.msra.mxu0 %v641
    %2496 = vmatprep.subr.mxu0 %v650
    %2497 = vmatpush1.msra.mxu0 %v649
    %2498 = vmatprep.subr.mxu0 %v658
    %2499 = vmatpush1.msra.mxu0 %v657
    %2500 = vmatprep.subr.mxu0 %v666
    %2501 = vmatpush1.msra.mxu0 %v665
    %2502 = vmatprep.subr.mxu0 %v674
    %2503 = vmatpush1.msra.mxu0 %v673
    %2504 = vmatprep.subr.mxu0 %v682
    %2505 = vmatpush1.msra.mxu0 %v681
    %2506 = vmatprep.subr.mxu0 %v690
    %2507 = vmatpush1.msra.mxu0 %v689
    %2508 = vmatprep.subr.mxu0 %v698
    %2509 = vmatpush1.msra.mxu0 %v697
    %2510 = vmatprep.subr.mxu0 %v706
    %2511 = vmatpush1.msra.mxu0 %v705
    %2512 = vmatprep.subr.mxu0 %v714
    %2513 = vmatpush1.msra.mxu0 %v713
    %2514 = vmatprep.subr.mxu0 %v722
    %2515 = vmatpush1.msra.mxu0 %v721
    %2516 = vmatprep.subr.mxu0 %v730
    %2517 = vmatpush1.msra.mxu0 %v729
    %2518 = vmatprep.subr.mxu0 %v738
    %2519 = vmatpush1.msra.mxu0 %v737
    %2520 = vmatprep.subr.mxu0 %v746
    %2521 = vmatpush1.msra.mxu0 %v745
    %2522 = vmatprep.subr.mxu0 %v754
    %2523 = vmatpush1.msra.mxu0 %v753
    %2524 = vmatprep.mubr.f32.mxu0 %v2244
    %2525 = vmatmul.mubr.f32.gmra.mrb[0].mxu0 %v2243
    %v2526 = vpop.f32.mrb[0].mxu0
    %v2527 = vadd.f32 0.0, %v2526
    %v2528 = vpop.f32.mrb[0].mxu0
    %v2529 = vadd.f32 0.0, %v2528
    %2530 = vdwg.mxu0
    %v2539 = vrot.slane %v2314, 4
    %v2540 = vrot.slane %v2316, 4
    %v2541 = vrot.slane %v2385, 4
    %v2542 = vrot.slane %v2387, 4
    %v2543 = vrot.slane %v2456, 4
    %v2544 = vrot.slane %v2458, 4
    %v2545 = vrot.slane %v2527, 4
    %v2546 = vrot.slane %v2529, 4
    %v2555 = vadd.f32 %v282, %v2539
    %v2556 = vadd.f32 %v284, %v2540
    %v2557 = vadd.f32 %v353, %v2541
    %v2558 = vadd.f32 %v355, %v2542
    %v2559 = vadd.f32 %v424, %v2543
    %v2560 = vadd.f32 %v426, %v2544
    %v2561 = vadd.f32 %v495, %v2545
    %v2562 = vadd.f32 %v497, %v2546
    %v2563 = vxor.u32 %v2555, 2147483648
    %v2564 = vxor.u32 %v2556, 2147483648
    %v2565 = vxor.u32 %v2557, 2147483648
    %v2566 = vxor.u32 %v2558, 2147483648
    %v2567 = vxor.u32 %v2559, 2147483648
    %v2568 = vxor.u32 %v2560, 2147483648
    %v2569 = vmul.f32 %v2563, 1.442695
    %v2570 = vpow.pop %v2569
    %v2571 = vmul.f32 %v2564, 1.442695
    %v2572 = vpow.pop %v2571
    %v2573 = vmul.f32 %v2565, 1.442695
    %v2574 = vpow.pop %v2573
    %v2575 = vmul.f32 %v2566, 1.442695
    %v2576 = vpow.pop %v2575
    %v2577 = vmul.f32 %v2567, 1.442695
    %v2578 = vpow.pop %v2577
    %v2579 = vmul.f32 %v2568, 1.442695
    %v2580 = vpow.pop %v2579
    %v2581 = vadd.f32 %v2570, 1.0
    %v2582 = vadd.f32 %v2572, 1.0
    %v2583 = vadd.f32 %v2574, 1.0
    %v2584 = vadd.f32 %v2576, 1.0
    %v2585 = vadd.f32 %v2578, 1.0
    %v2586 = vadd.f32 %v2580, 1.0
    %v2587 = vrcp.pop %v2581
    %v2588 = vmul.f32 1.0, %v2587
    %v2589 = vrcp.pop %v2582
    %v2590 = vmul.f32 1.0, %v2589
    %v2591 = vrcp.pop %v2583
    %v2592 = vmul.f32 1.0, %v2591
    %v2593 = vrcp.pop %v2584
    %v2594 = vmul.f32 1.0, %v2593
    %v2595 = vrcp.pop %v2585
    %v2596 = vmul.f32 1.0, %v2595
    %v2597 = vrcp.pop %v2586
    %v2598 = vmul.f32 1.0, %v2597
    %v2599 = vtanh.pop %v2561
    %v2600 = vtanh.pop %v2562
    %v2603 = vrot.slane %v2235, 7
    %v2604 = vrot.slane %v2236, 7
    %v2607 = vmul.f32 %v2592, %v2603
    %v2608 = vmul.f32 %v2594, %v2604
    %v2609 = vmul.f32 %v2588, %v2599
    %v2610 = vmul.f32 %v2590, %v2600
    %v2611 = vadd.f32 %v2607, %v2609
    %v2612 = vadd.f32 %v2608, %v2610
    %v2613 = vtanh.pop %v2611
    %v2614 = vtanh.pop %v2612
    %v2615 = vmul.f32 %v2596, %v2613
    %v2616 = vmul.f32 %v2598, %v2614
    %v2619 = vrot.slane %v2615, 4
    %v2620 = vrot.slane %v2616, 4
    %2623 = vmatprep.subr.mxu0 %v500
    %2624 = vmatpush1.msra.mxu0 %v499
    %2625 = vmatprep.subr.mxu0 %v508
    %2626 = vmatpush1.msra.mxu0 %v507
    %2627 = vmatprep.subr.mxu0 %v516
    %2628 = vmatpush1.msra.mxu0 %v515
    %2629 = vmatprep.subr.mxu0 %v524
    %2630 = vmatpush1.msra.mxu0 %v523
    %2631 = vmatprep.subr.mxu0 %v532
    %2632 = vmatpush1.msra.mxu0 %v531
    %2633 = vmatprep.subr.mxu0 %v540
    %2634 = vmatpush1.msra.mxu0 %v539
    %2635 = vmatprep.subr.mxu0 %v548
    %2636 = vmatpush1.msra.mxu0 %v547
    %2637 = vmatprep.subr.mxu0 %v556
    %2638 = vmatpush1.msra.mxu0 %v555
    %2639 = vmatprep.subr.mxu0 %v564
    %2640 = vmatpush1.msra.mxu0 %v563
    %2641 = vmatprep.subr.mxu0 %v572
    %2642 = vmatpush1.msra.mxu0 %v571
    %2643 = vmatprep.subr.mxu0 %v580
    %2644 = vmatpush1.msra.mxu0 %v579
    %2645 = vmatprep.subr.mxu0 %v588
    %2646 = vmatpush1.msra.mxu0 %v587
    %2647 = vmatprep.subr.mxu0 %v596
    %2648 = vmatpush1.msra.mxu0 %v595
    %2649 = vmatprep.subr.mxu0 %v604
    %2650 = vmatpush1.msra.mxu0 %v603
    %2651 = vmatprep.subr.mxu0 %v612
    %2652 = vmatpush1.msra.mxu0 %v611
    %2653 = vmatprep.subr.mxu0 %v620
    %2654 = vmatpush1.msra.mxu0 %v619
    %2655 = vmatprep.subr.mxu0 %v628
    %2656 = vmatpush1.msra.mxu0 %v627
    %2657 = vmatprep.subr.mxu0 %v636
    %2658 = vmatpush1.msra.mxu0 %v635
    %2659 = vmatprep.subr.mxu0 %v644
    %2660 = vmatpush1.msra.mxu0 %v643
    %2661 = vmatprep.subr.mxu0 %v652
    %2662 = vmatpush1.msra.mxu0 %v651
    %2663 = vmatprep.subr.mxu0 %v660
    %2664 = vmatpush1.msra.mxu0 %v659
    %2665 = vmatprep.subr.mxu0 %v668
    %2666 = vmatpush1.msra.mxu0 %v667
    %2667 = vmatprep.subr.mxu0 %v676
    %2668 = vmatpush1.msra.mxu0 %v675
    %2669 = vmatprep.subr.mxu0 %v684
    %2670 = vmatpush1.msra.mxu0 %v683
    %2671 = vmatprep.subr.mxu0 %v692
    %2672 = vmatpush1.msra.mxu0 %v691
    %2673 = vmatprep.subr.mxu0 %v700
    %2674 = vmatpush1.msra.mxu0 %v699
    %2675 = vmatprep.subr.mxu0 %v708
    %2676 = vmatpush1.msra.mxu0 %v707
    %2677 = vmatprep.subr.mxu0 %v716
    %2678 = vmatpush1.msra.mxu0 %v715
    %2679 = vmatprep.subr.mxu0 %v724
    %2680 = vmatpush1.msra.mxu0 %v723
    %2681 = vmatprep.subr.mxu0 %v732
    %2682 = vmatpush1.msra.mxu0 %v731
    %2683 = vmatprep.subr.mxu0 %v740
    %2684 = vmatpush1.msra.mxu0 %v739
    %2685 = vmatprep.subr.mxu0 %v748
    %2686 = vmatpush1.msra.mxu0 %v747
    %2687 = vmatprep.mubr.f32.mxu0 %v2620
    %2688 = vmatmul.mubr.f32.gmra.mrb[0].mxu0 %v2619
    %v2689 = vpop.f32.mrb[0].mxu0
    %v2690 = vadd.f32 0.0, %v2689
    %v2691 = vpop.f32.mrb[0].mxu0
    %v2692 = vadd.f32 0.0, %v2691
    %2693 = vdwg.mxu0
    %2694 = vmatprep.subr.mxu0 %v502
    %2695 = vmatpush1.msra.mxu0 %v501
    %2696 = vmatprep.subr.mxu0 %v510
    %2697 = vmatpush1.msra.mxu0 %v509
    %2698 = vmatprep.subr.mxu0 %v518
    %2699 = vmatpush1.msra.mxu0 %v517
    %2700 = vmatprep.subr.mxu0 %v526
    %2701 = vmatpush1.msra.mxu0 %v525
    %2702 = vmatprep.subr.mxu0 %v534
    %2703 = vmatpush1.msra.mxu0 %v533
    %2704 = vmatprep.subr.mxu0 %v542
    %2705 = vmatpush1.msra.mxu0 %v541
    %2706 = vmatprep.subr.mxu0 %v550
    %2707 = vmatpush1.msra.mxu0 %v549
    %2708 = vmatprep.subr.mxu0 %v558
    %2709 = vmatpush1.msra.mxu0 %v557
    %2710 = vmatprep.subr.mxu0 %v566
    %2711 = vmatpush1.msra.mxu0 %v565
    %2712 = vmatprep.subr.mxu0 %v574
    %2713 = vmatpush1.msra.mxu0 %v573
    %2714 = vmatprep.subr.mxu0 %v582
    %2715 = vmatpush1.msra.mxu0 %v581
    %2716 = vmatprep.subr.mxu0 %v590
    %2717 = vmatpush1.msra.mxu0 %v589
    %2718 = vmatprep.subr.mxu0 %v598
    %2719 = vmatpush1.msra.mxu0 %v597
    %2720 = vmatprep.subr.mxu0 %v606
    %2721 = vmatpush1.msra.mxu0 %v605
    %2722 = vmatprep.subr.mxu0 %v614
    %2723 = vmatpush1.msra.mxu0 %v613
    %2724 = vmatprep.subr.mxu0 %v622
    %2725 = vmatpush1.msra.mxu0 %v621
    %2726 = vmatprep.subr.mxu0 %v630
    %2727 = vmatpush1.msra.mxu0 %v629
    %2728 = vmatprep.subr.mxu0 %v638
    %2729 = vmatpush1.msra.mxu0 %v637
    %2730 = vmatprep.subr.mxu0 %v646
    %2731 = vmatpush1.msra.mxu0 %v645
    %2732 = vmatprep.subr.mxu0 %v654
    %2733 = vmatpush1.msra.mxu0 %v653
    %2734 = vmatprep.subr.mxu0 %v662
    %2735 = vmatpush1.msra.mxu0 %v661
    %2736 = vmatprep.subr.mxu0 %v670
    %2737 = vmatpush1.msra.mxu0 %v669
    %2738 = vmatprep.subr.mxu0 %v678
    %2739 = vmatpush1.msra.mxu0 %v677
    %2740 = vmatprep.subr.mxu0 %v686
    %2741 = vmatpush1.msra.mxu0 %v685
    %2742 = vmatprep.subr.mxu0 %v694
    %2743 = vmatpush1.msra.mxu0 %v693
    %2744 = vmatprep.subr.mxu0 %v702
    %2745 = vmatpush1.msra.mxu0 %v701
    %2746 = vmatprep.subr.mxu0 %v710
    %2747 = vmatpush1.msra.mxu0 %v709
    %2748 = vmatprep.subr.mxu0 %v718
    %2749 = vmatpush1.msra.mxu0 %v717
    %2750 = vmatprep.subr.mxu0 %v726
    %2751 = vmatpush1.msra.mxu0 %v725
    %2752 = vmatprep.subr.mxu0 %v734
    %2753 = vmatpush1.msra.mxu0 %v733
    %2754 = vmatprep.subr.mxu0 %v742
    %2755 = vmatpush1.msra.mxu0 %v741
    %2756 = vmatprep.subr.mxu0 %v750
    %2757 = vmatpush1.msra.mxu0 %v749
    %2758 = vmatprep.mubr.f32.mxu0 %v2620
    %2759 = vmatmul.mubr.f32.gmra.mrb[0].mxu0 %v2619
    %v2760 = vpop.f32.mrb[0].mxu0
    %v2761 = vadd.f32 0.0, %v2760
    %v2762 = vpop.f32.mrb[0].mxu0
    %v2763 = vadd.f32 0.0, %v2762
    %2764 = vdwg.mxu0
    %2765 = vmatprep.subr.mxu0 %v504
    %2766 = vmatpush1.msra.mxu0 %v503
    %2767 = vmatprep.subr.mxu0 %v512
    %2768 = vmatpush1.msra.mxu0 %v511
    %2769 = vmatprep.subr.mxu0 %v520
    %2770 = vmatpush1.msra.mxu0 %v519
    %2771 = vmatprep.subr.mxu0 %v528
    %2772 = vmatpush1.msra.mxu0 %v527
    %2773 = vmatprep.subr.mxu0 %v536
    %2774 = vmatpush1.msra.mxu0 %v535
    %2775 = vmatprep.subr.mxu0 %v544
    %2776 = vmatpush1.msra.mxu0 %v543
    %2777 = vmatprep.subr.mxu0 %v552
    %2778 = vmatpush1.msra.mxu0 %v551
    %2779 = vmatprep.subr.mxu0 %v560
    %2780 = vmatpush1.msra.mxu0 %v559
    %2781 = vmatprep.subr.mxu0 %v568
    %2782 = vmatpush1.msra.mxu0 %v567
    %2783 = vmatprep.subr.mxu0 %v576
    %2784 = vmatpush1.msra.mxu0 %v575
    %2785 = vmatprep.subr.mxu0 %v584
    %2786 = vmatpush1.msra.mxu0 %v583
    %2787 = vmatprep.subr.mxu0 %v592
    %2788 = vmatpush1.msra.mxu0 %v591
    %2789 = vmatprep.subr.mxu0 %v600
    %2790 = vmatpush1.msra.mxu0 %v599
    %2791 = vmatprep.subr.mxu0 %v608
    %2792 = vmatpush1.msra.mxu0 %v607
    %2793 = vmatprep.subr.mxu0 %v616
    %2794 = vmatpush1.msra.mxu0 %v615
    %2795 = vmatprep.subr.mxu0 %v624
    %2796 = vmatpush1.msra.mxu0 %v623
    %2797 = vmatprep.subr.mxu0 %v632
    %2798 = vmatpush1.msra.mxu0 %v631
    %2799 = vmatprep.subr.mxu0 %v640
    %2800 = vmatpush1.msra.mxu0 %v639
    %2801 = vmatprep.subr.mxu0 %v648
    %2802 = vmatpush1.msra.mxu0 %v647
    %2803 = vmatprep.subr.mxu0 %v656
    %2804 = vmatpush1.msra.mxu0 %v655
    %2805 = vmatprep.subr.mxu0 %v664
    %2806 = vmatpush1.msra.mxu0 %v663
    %2807 = vmatprep.subr.mxu0 %v672
    %2808 = vmatpush1.msra.mxu0 %v671
    %2809 = vmatprep.subr.mxu0 %v680
    %2810 = vmatpush1.msra.mxu0 %v679
    %2811 = vmatprep.subr.mxu0 %v688
    %2812 = vmatpush1.msra.mxu0 %v687
    %2813 = vmatprep.subr.mxu0 %v696
    %2814 = vmatpush1.msra.mxu0 %v695
    %2815 = vmatprep.subr.mxu0 %v704
    %2816 = vmatpush1.msra.mxu0 %v703
    %2817 = vmatprep.subr.mxu0 %v712
    %2818 = vmatpush1.msra.mxu0 %v711
    %2819 = vmatprep.subr.mxu0 %v720
    %2820 = vmatpush1.msra.mxu0 %v719
    %2821 = vmatprep.subr.mxu0 %v728
    %2822 = vmatpush1.msra.mxu0 %v727
    %2823 = vmatprep.subr.mxu0 %v736
    %2824 = vmatpush1.msra.mxu0 %v735
    %2825 = vmatprep.subr.mxu0 %v744
    %2826 = vmatpush1.msra.mxu0 %v743
    %2827 = vmatprep.subr.mxu0 %v752
    %2828 = vmatpush1.msra.mxu0 %v751
    %2829 = vmatprep.mubr.f32.mxu0 %v2620
    %2830 = vmatmul.mubr.f32.gmra.mrb[0].mxu0 %v2619
    %v2831 = vpop.f32.mrb[0].mxu0
    %v2832 = vadd.f32 0.0, %v2831
    %v2833 = vpop.f32.mrb[0].mxu0
    %v2834 = vadd.f32 0.0, %v2833
    %2835 = vdwg.mxu0
    %2836 = vmatprep.subr.mxu0 %v506
    %2837 = vmatpush1.msra.mxu0 %v505
    %2838 = vmatprep.subr.mxu0 %v514
    %2839 = vmatpush1.msra.mxu0 %v513
    %2840 = vmatprep.subr.mxu0 %v522
    %2841 = vmatpush1.msra.mxu0 %v521
    %2842 = vmatprep.subr.mxu0 %v530
    %2843 = vmatpush1.msra.mxu0 %v529
    %2844 = vmatprep.subr.mxu0 %v538
    %2845 = vmatpush1.msra.mxu0 %v537
    %2846 = vmatprep.subr.mxu0 %v546
    %2847 = vmatpush1.msra.mxu0 %v545
    %2848 = vmatprep.subr.mxu0 %v554
    %2849 = vmatpush1.msra.mxu0 %v553
    %2850 = vmatprep.subr.mxu0 %v562
    %2851 = vmatpush1.msra.mxu0 %v561
    %2852 = vmatprep.subr.mxu0 %v570
    %2853 = vmatpush1.msra.mxu0 %v569
    %2854 = vmatprep.subr.mxu0 %v578
    %2855 = vmatpush1.msra.mxu0 %v577
    %2856 = vmatprep.subr.mxu0 %v586
    %2857 = vmatpush1.msra.mxu0 %v585
    %2858 = vmatprep.subr.mxu0 %v594
    %2859 = vmatpush1.msra.mxu0 %v593
    %2860 = vmatprep.subr.mxu0 %v602
    %2861 = vmatpush1.msra.mxu0 %v601
    %2862 = vmatprep.subr.mxu0 %v610
    %2863 = vmatpush1.msra.mxu0 %v609
    %2864 = vmatprep.subr.mxu0 %v618
    %2865 = vmatpush1.msra.mxu0 %v617
    %2866 = vmatprep.subr.mxu0 %v626
    %2867 = vmatpush1.msra.mxu0 %v625
    %2868 = vmatprep.subr.mxu0 %v634
    %2869 = vmatpush1.msra.mxu0 %v633
    %2870 = vmatprep.subr.mxu0 %v642
    %2871 = vmatpush1.msra.mxu0 %v641
    %2872 = vmatprep.subr.mxu0 %v650
    %2873 = vmatpush1.msra.mxu0 %v649
    %2874 = vmatprep.subr.mxu0 %v658
    %2875 = vmatpush1.msra.mxu0 %v657
    %2876 = vmatprep.subr.mxu0 %v666
    %2877 = vmatpush1.msra.mxu0 %v665
    %2878 = vmatprep.subr.mxu0 %v674
    %2879 = vmatpush1.msra.mxu0 %v673
    %2880 = vmatprep.subr.mxu0 %v682
    %2881 = vmatpush1.msra.mxu0 %v681
    %2882 = vmatprep.subr.mxu0 %v690
    %2883 = vmatpush1.msra.mxu0 %v689
    %2884 = vmatprep.subr.mxu0 %v698
    %2885 = vmatpush1.msra.mxu0 %v697
    %2886 = vmatprep.subr.mxu0 %v706
    %2887 = vmatpush1.msra.mxu0 %v705
    %2888 = vmatprep.subr.mxu0 %v714
    %2889 = vmatpush1.msra.mxu0 %v713
    %2890 = vmatprep.subr.mxu0 %v722
    %2891 = vmatpush1.msra.mxu0 %v721
    %2892 = vmatprep.subr.mxu0 %v730
    %2893 = vmatpush1.msra.mxu0 %v729
    %2894 = vmatprep.subr.mxu0 %v738
    %2895 = vmatpush1.msra.mxu0 %v737
    %2896 = vmatprep.subr.mxu0 %v746
    %2897 = vmatpush1.msra.mxu0 %v745
    %2898 = vmatprep.subr.mxu0 %v754
    %2899 = vmatpush1.msra.mxu0 %v753
    %2900 = vmatprep.mubr.f32.mxu0 %v2620
    %2901 = vmatmul.mubr.f32.gmra.mrb[0].mxu0 %v2619
    %v2902 = vpop.f32.mrb[0].mxu0
    %v2903 = vadd.f32 0.0, %v2902
    %v2904 = vpop.f32.mrb[0].mxu0
    %v2905 = vadd.f32 0.0, %v2904
    %2906 = vdwg.mxu0
    %v2915 = vrot.slane %v2690, 3
    %v2916 = vrot.slane %v2692, 3
    %v2917 = vrot.slane %v2761, 3
    %v2918 = vrot.slane %v2763, 3
    %v2919 = vrot.slane %v2832, 3
    %v2920 = vrot.slane %v2834, 3
    %v2921 = vrot.slane %v2903, 3
    %v2922 = vrot.slane %v2905, 3
    %v2931 = vadd.f32 %v282, %v2915
    %v2932 = vadd.f32 %v284, %v2916
    %v2933 = vadd.f32 %v353, %v2917
    %v2934 = vadd.f32 %v355, %v2918
    %v2935 = vadd.f32 %v424, %v2919
    %v2936 = vadd.f32 %v426, %v2920
    %v2937 = vadd.f32 %v495, %v2921
    %v2938 = vadd.f32 %v497, %v2922
    %v2939 = vxor.u32 %v2931, 2147483648
    %v2940 = vxor.u32 %v2932, 2147483648
    %v2941 = vxor.u32 %v2933, 2147483648
    %v2942 = vxor.u32 %v2934, 2147483648
    %v2943 = vxor.u32 %v2935, 2147483648
    %v2944 = vxor.u32 %v2936, 2147483648
    %v2945 = vmul.f32 %v2939, 1.442695
    %v2946 = vpow.pop %v2945
    %v2947 = vmul.f32 %v2940, 1.442695
    %v2948 = vpow.pop %v2947
    %v2949 = vmul.f32 %v2941, 1.442695
    %v2950 = vpow.pop %v2949
    %v2951 = vmul.f32 %v2942, 1.442695
    %v2952 = vpow.pop %v2951
    %v2953 = vmul.f32 %v2943, 1.442695
    %v2954 = vpow.pop %v2953
    %v2955 = vmul.f32 %v2944, 1.442695
    %v2956 = vpow.pop %v2955
    %v2957 = vadd.f32 %v2946, 1.0
    %v2958 = vadd.f32 %v2948, 1.0
    %v2959 = vadd.f32 %v2950, 1.0
    %v2960 = vadd.f32 %v2952, 1.0
    %v2961 = vadd.f32 %v2954, 1.0
    %v2962 = vadd.f32 %v2956, 1.0
    %v2963 = vrcp.pop %v2957
    %v2964 = vmul.f32 1.0, %v2963
    %v2965 = vrcp.pop %v2958
    %v2966 = vmul.f32 1.0, %v2965
    %v2967 = vrcp.pop %v2959
    %v2968 = vmul.f32 1.0, %v2967
    %v2969 = vrcp.pop %v2960
    %v2970 = vmul.f32 1.0, %v2969
    %v2971 = vrcp.pop %v2961
    %v2972 = vmul.f32 1.0, %v2971
    %v2973 = vrcp.pop %v2962
    %v2974 = vmul.f32 1.0, %v2973
    %v2975 = vtanh.pop %v2937
    %v2976 = vtanh.pop %v2938
    %v2979 = vrot.slane %v2611, 7
    %v2980 = vrot.slane %v2612, 7
    %v2983 = vmul.f32 %v2968, %v2979
    %v2984 = vmul.f32 %v2970, %v2980
    %v2985 = vmul.f32 %v2964, %v2975
    %v2986 = vmul.f32 %v2966, %v2976
    %v2987 = vadd.f32 %v2983, %v2985
    %v2988 = vadd.f32 %v2984, %v2986
    %v2989 = vtanh.pop %v2987
    %v2990 = vtanh.pop %v2988
    %v2991 = vmul.f32 %v2972, %v2989
    %v2992 = vmul.f32 %v2974, %v2990
    %v2995 = vrot.slane %v2991, 5
    %v2996 = vrot.slane %v2992, 5
    %2999 = vmatprep.subr.mxu0 %v500
    %3000 = vmatpush1.msra.mxu0 %v499
    %3001 = vmatprep.subr.mxu0 %v508
    %3002 = vmatpush1.msra.mxu0 %v507
    %3003 = vmatprep.subr.mxu0 %v516
    %3004 = vmatpush1.msra.mxu0 %v515
    %3005 = vmatprep.subr.mxu0 %v524
    %3006 = vmatpush1.msra.mxu0 %v523
    %3007 = vmatprep.subr.mxu0 %v532
    %3008 = vmatpush1.msra.mxu0 %v531
    %3009 = vmatprep.subr.mxu0 %v540
    %3010 = vmatpush1.msra.mxu0 %v539
    %3011 = vmatprep.subr.mxu0 %v548
    %3012 = vmatpush1.msra.mxu0 %v547
    %3013 = vmatprep.subr.mxu0 %v556
    %3014 = vmatpush1.msra.mxu0 %v555
    %3015 = vmatprep.subr.mxu0 %v564
    %3016 = vmatpush1.msra.mxu0 %v563
    %3017 = vmatprep.subr.mxu0 %v572
    %3018 = vmatpush1.msra.mxu0 %v571
    %3019 = vmatprep.subr.mxu0 %v580
    %3020 = vmatpush1.msra.mxu0 %v579
    %3021 = vmatprep.subr.mxu0 %v588
    %3022 = vmatpush1.msra.mxu0 %v587
    %3023 = vmatprep.subr.mxu0 %v596
    %3024 = vmatpush1.msra.mxu0 %v595
    %3025 = vmatprep.subr.mxu0 %v604
    %3026 = vmatpush1.msra.mxu0 %v603
    %3027 = vmatprep.subr.mxu0 %v612
    %3028 = vmatpush1.msra.mxu0 %v611
    %3029 = vmatprep.subr.mxu0 %v620
    %3030 = vmatpush1.msra.mxu0 %v619
    %3031 = vmatprep.subr.mxu0 %v628
    %3032 = vmatpush1.msra.mxu0 %v627
    %3033 = vmatprep.subr.mxu0 %v636
    %3034 = vmatpush1.msra.mxu0 %v635
    %3035 = vmatprep.subr.mxu0 %v644
    %3036 = vmatpush1.msra.mxu0 %v643
    %3037 = vmatprep.subr.mxu0 %v652
    %3038 = vmatpush1.msra.mxu0 %v651
    %3039 = vmatprep.subr.mxu0 %v660
    %3040 = vmatpush1.msra.mxu0 %v659
    %3041 = vmatprep.subr.mxu0 %v668
    %3042 = vmatpush1.msra.mxu0 %v667
    %3043 = vmatprep.subr.mxu0 %v676
    %3044 = vmatpush1.msra.mxu0 %v675
    %3045 = vmatprep.subr.mxu0 %v684
    %3046 = vmatpush1.msra.mxu0 %v683
    %3047 = vmatprep.subr.mxu0 %v692
    %3048 = vmatpush1.msra.mxu0 %v691
    %3049 = vmatprep.subr.mxu0 %v700
    %3050 = vmatpush1.msra.mxu0 %v699
    %3051 = vmatprep.subr.mxu0 %v708
    %3052 = vmatpush1.msra.mxu0 %v707
    %3053 = vmatprep.subr.mxu0 %v716
    %3054 = vmatpush1.msra.mxu0 %v715
    %3055 = vmatprep.subr.mxu0 %v724
    %3056 = vmatpush1.msra.mxu0 %v723
    %3057 = vmatprep.subr.mxu0 %v732
    %3058 = vmatpush1.msra.mxu0 %v731
    %3059 = vmatprep.subr.mxu0 %v740
    %3060 = vmatpush1.msra.mxu0 %v739
    %3061 = vmatprep.subr.mxu0 %v748
    %3062 = vmatpush1.msra.mxu0 %v747
    %3063 = vmatprep.mubr.f32.mxu0 %v2996
    %3064 = vmatmul.mubr.f32.gmra.mrb[0].mxu0 %v2995
    %v3065 = vpop.f32.mrb[0].mxu0
    %v3066 = vadd.f32 0.0, %v3065
    %v3067 = vpop.f32.mrb[0].mxu0
    %v3068 = vadd.f32 0.0, %v3067
    %3069 = vdwg.mxu0
    %3070 = vmatprep.subr.mxu0 %v502
    %3071 = vmatpush1.msra.mxu0 %v501
    %3072 = vmatprep.subr.mxu0 %v510
    %3073 = vmatpush1.msra.mxu0 %v509
    %3074 = vmatprep.subr.mxu0 %v518
    %3075 = vmatpush1.msra.mxu0 %v517
    %3076 = vmatprep.subr.mxu0 %v526
    %3077 = vmatpush1.msra.mxu0 %v525
    %3078 = vmatprep.subr.mxu0 %v534
    %3079 = vmatpush1.msra.mxu0 %v533
    %3080 = vmatprep.subr.mxu0 %v542
    %3081 = vmatpush1.msra.mxu0 %v541
    %3082 = vmatprep.subr.mxu0 %v550
    %3083 = vmatpush1.msra.mxu0 %v549
    %3084 = vmatprep.subr.mxu0 %v558
    %3085 = vmatpush1.msra.mxu0 %v557
    %3086 = vmatprep.subr.mxu0 %v566
    %3087 = vmatpush1.msra.mxu0 %v565
    %3088 = vmatprep.subr.mxu0 %v574
    %3089 = vmatpush1.msra.mxu0 %v573
    %3090 = vmatprep.subr.mxu0 %v582
    %3091 = vmatpush1.msra.mxu0 %v581
    %3092 = vmatprep.subr.mxu0 %v590
    %3093 = vmatpush1.msra.mxu0 %v589
    %3094 = vmatprep.subr.mxu0 %v598
    %3095 = vmatpush1.msra.mxu0 %v597
    %3096 = vmatprep.subr.mxu0 %v606
    %3097 = vmatpush1.msra.mxu0 %v605
    %3098 = vmatprep.subr.mxu0 %v614
    %3099 = vmatpush1.msra.mxu0 %v613
    %3100 = vmatprep.subr.mxu0 %v622
    %3101 = vmatpush1.msra.mxu0 %v621
    %3102 = vmatprep.subr.mxu0 %v630
    %3103 = vmatpush1.msra.mxu0 %v629
    %3104 = vmatprep.subr.mxu0 %v638
    %3105 = vmatpush1.msra.mxu0 %v637
    %3106 = vmatprep.subr.mxu0 %v646
    %3107 = vmatpush1.msra.mxu0 %v645
    %3108 = vmatprep.subr.mxu0 %v654
    %3109 = vmatpush1.msra.mxu0 %v653
    %3110 = vmatprep.subr.mxu0 %v662
    %3111 = vmatpush1.msra.mxu0 %v661
    %3112 = vmatprep.subr.mxu0 %v670
    %3113 = vmatpush1.msra.mxu0 %v669
    %3114 = vmatprep.subr.mxu0 %v678
    %3115 = vmatpush1.msra.mxu0 %v677
    %3116 = vmatprep.subr.mxu0 %v686
    %3117 = vmatpush1.msra.mxu0 %v685
    %3118 = vmatprep.subr.mxu0 %v694
    %3119 = vmatpush1.msra.mxu0 %v693
    %3120 = vmatprep.subr.mxu0 %v702
    %3121 = vmatpush1.msra.mxu0 %v701
    %3122 = vmatprep.subr.mxu0 %v710
    %3123 = vmatpush1.msra.mxu0 %v709
    %3124 = vmatprep.subr.mxu0 %v718
    %3125 = vmatpush1.msra.mxu0 %v717
    %3126 = vmatprep.subr.mxu0 %v726
    %3127 = vmatpush1.msra.mxu0 %v725
    %3128 = vmatprep.subr.mxu0 %v734
    %3129 = vmatpush1.msra.mxu0 %v733
    %3130 = vmatprep.subr.mxu0 %v742
    %3131 = vmatpush1.msra.mxu0 %v741
    %3132 = vmatprep.subr.mxu0 %v750
    %3133 = vmatpush1.msra.mxu0 %v749
    %3134 = vmatprep.mubr.f32.mxu0 %v2996
    %3135 = vmatmul.mubr.f32.gmra.mrb[0].mxu0 %v2995
    %v3136 = vpop.f32.mrb[0].mxu0
    %v3137 = vadd.f32 0.0, %v3136
    %v3138 = vpop.f32.mrb[0].mxu0
    %v3139 = vadd.f32 0.0, %v3138
    %3140 = vdwg.mxu0
    %3141 = vmatprep.subr.mxu0 %v504
    %3142 = vmatpush1.msra.mxu0 %v503
    %3143 = vmatprep.subr.mxu0 %v512
    %3144 = vmatpush1.msra.mxu0 %v511
    %3145 = vmatprep.subr.mxu0 %v520
    %3146 = vmatpush1.msra.mxu0 %v519
    %3147 = vmatprep.subr.mxu0 %v528
    %3148 = vmatpush1.msra.mxu0 %v527
    %3149 = vmatprep.subr.mxu0 %v536
    %3150 = vmatpush1.msra.mxu0 %v535
    %3151 = vmatprep.subr.mxu0 %v544
    %3152 = vmatpush1.msra.mxu0 %v543
    %3153 = vmatprep.subr.mxu0 %v552
    %3154 = vmatpush1.msra.mxu0 %v551
    %3155 = vmatprep.subr.mxu0 %v560
    %3156 = vmatpush1.msra.mxu0 %v559
    %3157 = vmatprep.subr.mxu0 %v568
    %3158 = vmatpush1.msra.mxu0 %v567
    %3159 = vmatprep.subr.mxu0 %v576
    %3160 = vmatpush1.msra.mxu0 %v575
    %3161 = vmatprep.subr.mxu0 %v584
    %3162 = vmatpush1.msra.mxu0 %v583
    %3163 = vmatprep.subr.mxu0 %v592
    %3164 = vmatpush1.msra.mxu0 %v591
    %3165 = vmatprep.subr.mxu0 %v600
    %3166 = vmatpush1.msra.mxu0 %v599
    %3167 = vmatprep.subr.mxu0 %v608
    %3168 = vmatpush1.msra.mxu0 %v607
    %3169 = vmatprep.subr.mxu0 %v616
    %3170 = vmatpush1.msra.mxu0 %v615
    %3171 = vmatprep.subr.mxu0 %v624
    %3172 = vmatpush1.msra.mxu0 %v623
    %3173 = vmatprep.subr.mxu0 %v632
    %3174 = vmatpush1.msra.mxu0 %v631
    %3175 = vmatprep.subr.mxu0 %v640
    %3176 = vmatpush1.msra.mxu0 %v639
    %3177 = vmatprep.subr.mxu0 %v648
    %3178 = vmatpush1.msra.mxu0 %v647
    %3179 = vmatprep.subr.mxu0 %v656
    %3180 = vmatpush1.msra.mxu0 %v655
    %3181 = vmatprep.subr.mxu0 %v664
    %3182 = vmatpush1.msra.mxu0 %v663
    %3183 = vmatprep.subr.mxu0 %v672
    %3184 = vmatpush1.msra.mxu0 %v671
    %3185 = vmatprep.subr.mxu0 %v680
    %3186 = vmatpush1.msra.mxu0 %v679
    %3187 = vmatprep.subr.mxu0 %v688
    %3188 = vmatpush1.msra.mxu0 %v687
    %3189 = vmatprep.subr.mxu0 %v696
    %3190 = vmatpush1.msra.mxu0 %v695
    %3191 = vmatprep.subr.mxu0 %v704
    %3192 = vmatpush1.msra.mxu0 %v703
    %3193 = vmatprep.subr.mxu0 %v712
    %3194 = vmatpush1.msra.mxu0 %v711
    %3195 = vmatprep.subr.mxu0 %v720
    %3196 = vmatpush1.msra.mxu0 %v719
    %3197 = vmatprep.subr.mxu0 %v728
    %3198 = vmatpush1.msra.mxu0 %v727
    %3199 = vmatprep.subr.mxu0 %v736
    %3200 = vmatpush1.msra.mxu0 %v735
    %3201 = vmatprep.subr.mxu0 %v744
    %3202 = vmatpush1.msra.mxu0 %v743
    %3203 = vmatprep.subr.mxu0 %v752
    %3204 = vmatpush1.msra.mxu0 %v751
    %3205 = vmatprep.mubr.f32.mxu0 %v2996
    %3206 = vmatmul.mubr.f32.gmra.mrb[0].mxu0 %v2995
    %v3207 = vpop.f32.mrb[0].mxu0
    %v3208 = vadd.f32 0.0, %v3207
    %v3209 = vpop.f32.mrb[0].mxu0
    %v3210 = vadd.f32 0.0, %v3209
    %3211 = vdwg.mxu0
    %3212 = vmatprep.subr.mxu0 %v506
    %3213 = vmatpush1.msra.mxu0 %v505
    %3214 = vmatprep.subr.mxu0 %v514
    %3215 = vmatpush1.msra.mxu0 %v513
    %3216 = vmatprep.subr.mxu0 %v522
    %3217 = vmatpush1.msra.mxu0 %v521
    %3218 = vmatprep.subr.mxu0 %v530
    %3219 = vmatpush1.msra.mxu0 %v529
    %3220 = vmatprep.subr.mxu0 %v538
    %3221 = vmatpush1.msra.mxu0 %v537
    %3222 = vmatprep.subr.mxu0 %v546
    %3223 = vmatpush1.msra.mxu0 %v545
    %3224 = vmatprep.subr.mxu0 %v554
    %3225 = vmatpush1.msra.mxu0 %v553
    %3226 = vmatprep.subr.mxu0 %v562
    %3227 = vmatpush1.msra.mxu0 %v561
    %3228 = vmatprep.subr.mxu0 %v570
    %3229 = vmatpush1.msra.mxu0 %v569
    %3230 = vmatprep.subr.mxu0 %v578
    %3231 = vmatpush1.msra.mxu0 %v577
    %3232 = vmatprep.subr.mxu0 %v586
    %3233 = vmatpush1.msra.mxu0 %v585
    %3234 = vmatprep.subr.mxu0 %v594
    %3235 = vmatpush1.msra.mxu0 %v593
    %3236 = vmatprep.subr.mxu0 %v602
    %3237 = vmatpush1.msra.mxu0 %v601
    %3238 = vmatprep.subr.mxu0 %v610
    %3239 = vmatpush1.msra.mxu0 %v609
    %3240 = vmatprep.subr.mxu0 %v618
    %3241 = vmatpush1.msra.mxu0 %v617
    %3242 = vmatprep.subr.mxu0 %v626
    %3243 = vmatpush1.msra.mxu0 %v625
    %3244 = vmatprep.subr.mxu0 %v634
    %3245 = vmatpush1.msra.mxu0 %v633
    %3246 = vmatprep.subr.mxu0 %v642
    %3247 = vmatpush1.msra.mxu0 %v641
    %3248 = vmatprep.subr.mxu0 %v650
    %3249 = vmatpush1.msra.mxu0 %v649
    %3250 = vmatprep.subr.mxu0 %v658
    %3251 = vmatpush1.msra.mxu0 %v657
    %3252 = vmatprep.subr.mxu0 %v666
    %3253 = vmatpush1.msra.mxu0 %v665
    %3254 = vmatprep.subr.mxu0 %v674
    %3255 = vmatpush1.msra.mxu0 %v673
    %3256 = vmatprep.subr.mxu0 %v682
    %3257 = vmatpush1.msra.mxu0 %v681
    %3258 = vmatprep.subr.mxu0 %v690
    %3259 = vmatpush1.msra.mxu0 %v689
    %3260 = vmatprep.subr.mxu0 %v698
    %3261 = vmatpush1.msra.mxu0 %v697
    %3262 = vmatprep.subr.mxu0 %v706
    %3263 = vmatpush1.msra.mxu0 %v705
    %3264 = vmatprep.subr.mxu0 %v714
    %3265 = vmatpush1.msra.mxu0 %v713
    %3266 = vmatprep.subr.mxu0 %v722
    %3267 = vmatpush1.msra.mxu0 %v721
    %3268 = vmatprep.subr.mxu0 %v730
    %3269 = vmatpush1.msra.mxu0 %v729
    %3270 = vmatprep.subr.mxu0 %v738
    %3271 = vmatpush1.msra.mxu0 %v737
    %3272 = vmatprep.subr.mxu0 %v746
    %3273 = vmatpush1.msra.mxu0 %v745
    %3274 = vmatprep.subr.mxu0 %v754
    %3275 = vmatpush1.msra.mxu0 %v753
    %3276 = vmatprep.mubr.f32.mxu0 %v2996
    %3277 = vmatmul.mubr.f32.gmra.mrb[0].mxu0 %v2995
    %v3278 = vpop.f32.mrb[0].mxu0
    %v3279 = vadd.f32 0.0, %v3278
    %v3280 = vpop.f32.mrb[0].mxu0
    %v3281 = vadd.f32 0.0, %v3280
    %3282 = vdwg.mxu0
    %v3291 = vrot.slane %v3066, 2
    %v3292 = vrot.slane %v3068, 2
    %v3293 = vrot.slane %v3137, 2
    %v3294 = vrot.slane %v3139, 2
    %v3295 = vrot.slane %v3208, 2
    %v3296 = vrot.slane %v3210, 2
    %v3297 = vrot.slane %v3279, 2
    %v3298 = vrot.slane %v3281, 2
    %v3307 = vadd.f32 %v282, %v3291
    %v3308 = vadd.f32 %v284, %v3292
    %v3309 = vadd.f32 %v353, %v3293
    %v3310 = vadd.f32 %v355, %v3294
    %v3311 = vadd.f32 %v424, %v3295
    %v3312 = vadd.f32 %v426, %v3296
    %v3313 = vadd.f32 %v495, %v3297
    %v3314 = vadd.f32 %v497, %v3298
    %v3315 = vxor.u32 %v3307, 2147483648
    %v3316 = vxor.u32 %v3308, 2147483648
    %v3317 = vxor.u32 %v3309, 2147483648
    %v3318 = vxor.u32 %v3310, 2147483648
    %v3319 = vxor.u32 %v3311, 2147483648
    %v3320 = vxor.u32 %v3312, 2147483648
    %v3321 = vmul.f32 %v3315, 1.442695
    %v3322 = vpow.pop %v3321
    %v3323 = vmul.f32 %v3316, 1.442695
    %v3324 = vpow.pop %v3323
    %v3325 = vmul.f32 %v3317, 1.442695
    %v3326 = vpow.pop %v3325
    %v3327 = vmul.f32 %v3318, 1.442695
    %v3328 = vpow.pop %v3327
    %v3329 = vmul.f32 %v3319, 1.442695
    %v3330 = vpow.pop %v3329
    %v3331 = vmul.f32 %v3320, 1.442695
    %v3332 = vpow.pop %v3331
    %v3333 = vadd.f32 %v3322, 1.0
    %v3334 = vadd.f32 %v3324, 1.0
    %v3335 = vadd.f32 %v3326, 1.0
    %v3336 = vadd.f32 %v3328, 1.0
    %v3337 = vadd.f32 %v3330, 1.0
    %v3338 = vadd.f32 %v3332, 1.0
    %v3339 = vrcp.pop %v3333
    %v3340 = vmul.f32 1.0, %v3339
    %v3341 = vrcp.pop %v3334
    %v3342 = vmul.f32 1.0, %v3341
    %v3343 = vrcp.pop %v3335
    %v3344 = vmul.f32 1.0, %v3343
    %v3345 = vrcp.pop %v3336
    %v3346 = vmul.f32 1.0, %v3345
    %v3347 = vrcp.pop %v3337
    %v3348 = vmul.f32 1.0, %v3347
    %v3349 = vrcp.pop %v3338
    %v3350 = vmul.f32 1.0, %v3349
    %v3351 = vtanh.pop %v3313
    %v3352 = vtanh.pop %v3314
    %v3355 = vrot.slane %v2987, 7
    %v3356 = vrot.slane %v2988, 7
    %v3359 = vmul.f32 %v3344, %v3355
    %v3360 = vmul.f32 %v3346, %v3356
    %v3361 = vmul.f32 %v3340, %v3351
    %v3362 = vmul.f32 %v3342, %v3352
    %v3363 = vadd.f32 %v3359, %v3361
    %v3364 = vadd.f32 %v3360, %v3362
    %v3365 = vtanh.pop %v3363
    %v3366 = vtanh.pop %v3364
    %v3367 = vmul.f32 %v3348, %v3365
    %v3368 = vmul.f32 %v3350, %v3366
    %v3371 = vrot.slane %v3367, 6
    %v3372 = vrot.slane %v3368, 6
    %3375 = vmatprep.subr.mxu0 %v500
    %3376 = vmatpush1.msra.mxu0 %v499
    %3377 = vmatprep.subr.mxu0 %v508
    %3378 = vmatpush1.msra.mxu0 %v507
    %3379 = vmatprep.subr.mxu0 %v516
    %3380 = vmatpush1.msra.mxu0 %v515
    %3381 = vmatprep.subr.mxu0 %v524
    %3382 = vmatpush1.msra.mxu0 %v523
    %3383 = vmatprep.subr.mxu0 %v532
    %3384 = vmatpush1.msra.mxu0 %v531
    %3385 = vmatprep.subr.mxu0 %v540
    %3386 = vmatpush1.msra.mxu0 %v539
    %3387 = vmatprep.subr.mxu0 %v548
    %3388 = vmatpush1.msra.mxu0 %v547
    %3389 = vmatprep.subr.mxu0 %v556
    %3390 = vmatpush1.msra.mxu0 %v555
    %3391 = vmatprep.subr.mxu0 %v564
    %3392 = vmatpush1.msra.mxu0 %v563
    %3393 = vmatprep.subr.mxu0 %v572
    %3394 = vmatpush1.msra.mxu0 %v571
    %3395 = vmatprep.subr.mxu0 %v580
    %3396 = vmatpush1.msra.mxu0 %v579
    %3397 = vmatprep.subr.mxu0 %v588
    %3398 = vmatpush1.msra.mxu0 %v587
    %3399 = vmatprep.subr.mxu0 %v596
    %3400 = vmatpush1.msra.mxu0 %v595
    %3401 = vmatprep.subr.mxu0 %v604
    %3402 = vmatpush1.msra.mxu0 %v603
    %3403 = vmatprep.subr.mxu0 %v612
    %3404 = vmatpush1.msra.mxu0 %v611
    %3405 = vmatprep.subr.mxu0 %v620
    %3406 = vmatpush1.msra.mxu0 %v619
    %3407 = vmatprep.subr.mxu0 %v628
    %3408 = vmatpush1.msra.mxu0 %v627
    %3409 = vmatprep.subr.mxu0 %v636
    %3410 = vmatpush1.msra.mxu0 %v635
    %3411 = vmatprep.subr.mxu0 %v644
    %3412 = vmatpush1.msra.mxu0 %v643
    %3413 = vmatprep.subr.mxu0 %v652
    %3414 = vmatpush1.msra.mxu0 %v651
    %3415 = vmatprep.subr.mxu0 %v660
    %3416 = vmatpush1.msra.mxu0 %v659
    %3417 = vmatprep.subr.mxu0 %v668
    %3418 = vmatpush1.msra.mxu0 %v667
    %3419 = vmatprep.subr.mxu0 %v676
    %3420 = vmatpush1.msra.mxu0 %v675
    %3421 = vmatprep.subr.mxu0 %v684
    %3422 = vmatpush1.msra.mxu0 %v683
    %3423 = vmatprep.subr.mxu0 %v692
    %3424 = vmatpush1.msra.mxu0 %v691
    %3425 = vmatprep.subr.mxu0 %v700
    %3426 = vmatpush1.msra.mxu0 %v699
    %3427 = vmatprep.subr.mxu0 %v708
    %3428 = vmatpush1.msra.mxu0 %v707
    %3429 = vmatprep.subr.mxu0 %v716
    %3430 = vmatpush1.msra.mxu0 %v715
    %3431 = vmatprep.subr.mxu0 %v724
    %3432 = vmatpush1.msra.mxu0 %v723
    %3433 = vmatprep.subr.mxu0 %v732
    %3434 = vmatpush1.msra.mxu0 %v731
    %3435 = vmatprep.subr.mxu0 %v740
    %3436 = vmatpush1.msra.mxu0 %v739
    %3437 = vmatprep.subr.mxu0 %v748
    %3438 = vmatpush1.msra.mxu0 %v747
    %3439 = vmatprep.mubr.f32.mxu0 %v3372
    %3440 = vmatmul.mubr.f32.gmra.mrb[0].mxu0 %v3371
    %v3441 = vpop.f32.mrb[0].mxu0
    %v3442 = vadd.f32 0.0, %v3441
    %v3443 = vpop.f32.mrb[0].mxu0
    %v3444 = vadd.f32 0.0, %v3443
    %3445 = vdwg.mxu0
    %3446 = vmatprep.subr.mxu0 %v502
    %3447 = vmatpush1.msra.mxu0 %v501
    %3448 = vmatprep.subr.mxu0 %v510
    %3449 = vmatpush1.msra.mxu0 %v509
    %3450 = vmatprep.subr.mxu0 %v518
    %3451 = vmatpush1.msra.mxu0 %v517
    %3452 = vmatprep.subr.mxu0 %v526
    %3453 = vmatpush1.msra.mxu0 %v525
    %3454 = vmatprep.subr.mxu0 %v534
    %3455 = vmatpush1.msra.mxu0 %v533
    %3456 = vmatprep.subr.mxu0 %v542
    %3457 = vmatpush1.msra.mxu0 %v541
    %3458 = vmatprep.subr.mxu0 %v550
    %3459 = vmatpush1.msra.mxu0 %v549
    %3460 = vmatprep.subr.mxu0 %v558
    %3461 = vmatpush1.msra.mxu0 %v557
    %3462 = vmatprep.subr.mxu0 %v566
    %3463 = vmatpush1.msra.mxu0 %v565
    %3464 = vmatprep.subr.mxu0 %v574
    %3465 = vmatpush1.msra.mxu0 %v573
    %3466 = vmatprep.subr.mxu0 %v582
    %3467 = vmatpush1.msra.mxu0 %v581
    %3468 = vmatprep.subr.mxu0 %v590
    %3469 = vmatpush1.msra.mxu0 %v589
    %3470 = vmatprep.subr.mxu0 %v598
    %3471 = vmatpush1.msra.mxu0 %v597
    %3472 = vmatprep.subr.mxu0 %v606
    %3473 = vmatpush1.msra.mxu0 %v605
    %3474 = vmatprep.subr.mxu0 %v614
    %3475 = vmatpush1.msra.mxu0 %v613
    %3476 = vmatprep.subr.mxu0 %v622
    %3477 = vmatpush1.msra.mxu0 %v621
    %3478 = vmatprep.subr.mxu0 %v630
    %3479 = vmatpush1.msra.mxu0 %v629
    %3480 = vmatprep.subr.mxu0 %v638
    %3481 = vmatpush1.msra.mxu0 %v637
    %3482 = vmatprep.subr.mxu0 %v646
    %3483 = vmatpush1.msra.mxu0 %v645
    %3484 = vmatprep.subr.mxu0 %v654
    %3485 = vmatpush1.msra.mxu0 %v653
    %3486 = vmatprep.subr.mxu0 %v662
    %3487 = vmatpush1.msra.mxu0 %v661
    %3488 = vmatprep.subr.mxu0 %v670
    %3489 = vmatpush1.msra.mxu0 %v669
    %3490 = vmatprep.subr.mxu0 %v678
    %3491 = vmatpush1.msra.mxu0 %v677
    %3492 = vmatprep.subr.mxu0 %v686
    %3493 = vmatpush1.msra.mxu0 %v685
    %3494 = vmatprep.subr.mxu0 %v694
    %3495 = vmatpush1.msra.mxu0 %v693
    %3496 = vmatprep.subr.mxu0 %v702
    %3497 = vmatpush1.msra.mxu0 %v701
    %3498 = vmatprep.subr.mxu0 %v710
    %3499 = vmatpush1.msra.mxu0 %v709
    %3500 = vmatprep.subr.mxu0 %v718
    %3501 = vmatpush1.msra.mxu0 %v717
    %3502 = vmatprep.subr.mxu0 %v726
    %3503 = vmatpush1.msra.mxu0 %v725
    %3504 = vmatprep.subr.mxu0 %v734
    %3505 = vmatpush1.msra.mxu0 %v733
    %3506 = vmatprep.subr.mxu0 %v742
    %3507 = vmatpush1.msra.mxu0 %v741
    %3508 = vmatprep.subr.mxu0 %v750
    %3509 = vmatpush1.msra.mxu0 %v749
    %3510 = vmatprep.mubr.f32.mxu0 %v3372
    %3511 = vmatmul.mubr.f32.gmra.mrb[0].mxu0 %v3371
    %v3512 = vpop.f32.mrb[0].mxu0
    %v3513 = vadd.f32 0.0, %v3512
    %v3514 = vpop.f32.mrb[0].mxu0
    %v3515 = vadd.f32 0.0, %v3514
    %3516 = vdwg.mxu0
    %3517 = vmatprep.subr.mxu0 %v504
    %3518 = vmatpush1.msra.mxu0 %v503
    %3519 = vmatprep.subr.mxu0 %v512
    %3520 = vmatpush1.msra.mxu0 %v511
    %3521 = vmatprep.subr.mxu0 %v520
    %3522 = vmatpush1.msra.mxu0 %v519
    %3523 = vmatprep.subr.mxu0 %v528
    %3524 = vmatpush1.msra.mxu0 %v527
    %3525 = vmatprep.subr.mxu0 %v536
    %3526 = vmatpush1.msra.mxu0 %v535
    %3527 = vmatprep.subr.mxu0 %v544
    %3528 = vmatpush1.msra.mxu0 %v543
    %3529 = vmatprep.subr.mxu0 %v552
    %3530 = vmatpush1.msra.mxu0 %v551
    %3531 = vmatprep.subr.mxu0 %v560
    %3532 = vmatpush1.msra.mxu0 %v559
    %3533 = vmatprep.subr.mxu0 %v568
    %3534 = vmatpush1.msra.mxu0 %v567
    %3535 = vmatprep.subr.mxu0 %v576
    %3536 = vmatpush1.msra.mxu0 %v575
    %3537 = vmatprep.subr.mxu0 %v584
    %3538 = vmatpush1.msra.mxu0 %v583
    %3539 = vmatprep.subr.mxu0 %v592
    %3540 = vmatpush1.msra.mxu0 %v591
    %3541 = vmatprep.subr.mxu0 %v600
    %3542 = vmatpush1.msra.mxu0 %v599
    %3543 = vmatprep.subr.mxu0 %v608
    %3544 = vmatpush1.msra.mxu0 %v607
    %3545 = vmatprep.subr.mxu0 %v616
    %3546 = vmatpush1.msra.mxu0 %v615
    %3547 = vmatprep.subr.mxu0 %v624
    %3548 = vmatpush1.msra.mxu0 %v623
    %3549 = vmatprep.subr.mxu0 %v632
    %3550 = vmatpush1.msra.mxu0 %v631
    %3551 = vmatprep.subr.mxu0 %v640
    %3552 = vmatpush1.msra.mxu0 %v639
    %3553 = vmatprep.subr.mxu0 %v648
    %3554 = vmatpush1.msra.mxu0 %v647
    %3555 = vmatprep.subr.mxu0 %v656
    %3556 = vmatpush1.msra.mxu0 %v655
    %3557 = vmatprep.subr.mxu0 %v664
    %3558 = vmatpush1.msra.mxu0 %v663
    %3559 = vmatprep.subr.mxu0 %v672
    %3560 = vmatpush1.msra.mxu0 %v671
    %3561 = vmatprep.subr.mxu0 %v680
    %3562 = vmatpush1.msra.mxu0 %v679
    %3563 = vmatprep.subr.mxu0 %v688
    %3564 = vmatpush1.msra.mxu0 %v687
    %3565 = vmatprep.subr.mxu0 %v696
    %3566 = vmatpush1.msra.mxu0 %v695
    %3567 = vmatprep.subr.mxu0 %v704
    %3568 = vmatpush1.msra.mxu0 %v703
    %3569 = vmatprep.subr.mxu0 %v712
    %3570 = vmatpush1.msra.mxu0 %v711
    %3571 = vmatprep.subr.mxu0 %v720
    %3572 = vmatpush1.msra.mxu0 %v719
    %3573 = vmatprep.subr.mxu0 %v728
    %3574 = vmatpush1.msra.mxu0 %v727
    %3575 = vmatprep.subr.mxu0 %v736
    %3576 = vmatpush1.msra.mxu0 %v735
    %3577 = vmatprep.subr.mxu0 %v744
    %3578 = vmatpush1.msra.mxu0 %v743
    %3579 = vmatprep.subr.mxu0 %v752
    %3580 = vmatpush1.msra.mxu0 %v751
    %3581 = vmatprep.mubr.f32.mxu0 %v3372
    %3582 = vmatmul.mubr.f32.gmra.mrb[0].mxu0 %v3371
    %v3583 = vpop.f32.mrb[0].mxu0
    %v3584 = vadd.f32 0.0, %v3583
    %v3585 = vpop.f32.mrb[0].mxu0
    %v3586 = vadd.f32 0.0, %v3585
    %3587 = vdwg.mxu0
    %3588 = vmatprep.subr.mxu0 %v506
    %3589 = vmatpush1.msra.mxu0 %v505
    %3590 = vmatprep.subr.mxu0 %v514
    %3591 = vmatpush1.msra.mxu0 %v513
    %3592 = vmatprep.subr.mxu0 %v522
    %3593 = vmatpush1.msra.mxu0 %v521
    %3594 = vmatprep.subr.mxu0 %v530
    %3595 = vmatpush1.msra.mxu0 %v529
    %3596 = vmatprep.subr.mxu0 %v538
    %3597 = vmatpush1.msra.mxu0 %v537
    %3598 = vmatprep.subr.mxu0 %v546
    %3599 = vmatpush1.msra.mxu0 %v545
    %3600 = vmatprep.subr.mxu0 %v554
    %3601 = vmatpush1.msra.mxu0 %v553
    %3602 = vmatprep.subr.mxu0 %v562
    %3603 = vmatpush1.msra.mxu0 %v561
    %3604 = vmatprep.subr.mxu0 %v570
    %3605 = vmatpush1.msra.mxu0 %v569
    %3606 = vmatprep.subr.mxu0 %v578
    %3607 = vmatpush1.msra.mxu0 %v577
    %3608 = vmatprep.subr.mxu0 %v586
    %3609 = vmatpush1.msra.mxu0 %v585
    %3610 = vmatprep.subr.mxu0 %v594
    %3611 = vmatpush1.msra.mxu0 %v593
    %3612 = vmatprep.subr.mxu0 %v602
    %3613 = vmatpush1.msra.mxu0 %v601
    %3614 = vmatprep.subr.mxu0 %v610
    %3615 = vmatpush1.msra.mxu0 %v609
    %3616 = vmatprep.subr.mxu0 %v618
    %3617 = vmatpush1.msra.mxu0 %v617
    %3618 = vmatprep.subr.mxu0 %v626
    %3619 = vmatpush1.msra.mxu0 %v625
    %3620 = vmatprep.subr.mxu0 %v634
    %3621 = vmatpush1.msra.mxu0 %v633
    %3622 = vmatprep.subr.mxu0 %v642
    %3623 = vmatpush1.msra.mxu0 %v641
    %3624 = vmatprep.subr.mxu0 %v650
    %3625 = vmatpush1.msra.mxu0 %v649
    %3626 = vmatprep.subr.mxu0 %v658
    %3627 = vmatpush1.msra.mxu0 %v657
    %3628 = vmatprep.subr.mxu0 %v666
    %3629 = vmatpush1.msra.mxu0 %v665
    %3630 = vmatprep.subr.mxu0 %v674
    %3631 = vmatpush1.msra.mxu0 %v673
    %3632 = vmatprep.subr.mxu0 %v682
    %3633 = vmatpush1.msra.mxu0 %v681
    %3634 = vmatprep.subr.mxu0 %v690
    %3635 = vmatpush1.msra.mxu0 %v689
    %3636 = vmatprep.subr.mxu0 %v698
    %3637 = vmatpush1.msra.mxu0 %v697
    %3638 = vmatprep.subr.mxu0 %v706
    %3639 = vmatpush1.msra.mxu0 %v705
    %3640 = vmatprep.subr.mxu0 %v714
    %3641 = vmatpush1.msra.mxu0 %v713
    %3642 = vmatprep.subr.mxu0 %v722
    %3643 = vmatpush1.msra.mxu0 %v721
    %3644 = vmatprep.subr.mxu0 %v730
    %3645 = vmatpush1.msra.mxu0 %v729
    %3646 = vmatprep.subr.mxu0 %v738
    %3647 = vmatpush1.msra.mxu0 %v737
    %3648 = vmatprep.subr.mxu0 %v746
    %3649 = vmatpush1.msra.mxu0 %v745
    %3650 = vmatprep.subr.mxu0 %v754
    %3651 = vmatpush1.msra.mxu0 %v753
    %3652 = vmatprep.mubr.f32.mxu0 %v3372
    %3653 = vmatmul.mubr.f32.gmra.mrb[0].mxu0 %v3371
    %v3654 = vpop.f32.mrb[0].mxu0
    %v3655 = vadd.f32 0.0, %v3654
    %v3656 = vpop.f32.mrb[0].mxu0
    %v3657 = vadd.f32 0.0, %v3656
    %3658 = vdwg.mxu0
    %v3667 = vrot.slane %v3442, 1
    %v3668 = vrot.slane %v3444, 1
    %v3669 = vrot.slane %v3513, 1
    %v3670 = vrot.slane %v3515, 1
    %v3671 = vrot.slane %v3584, 1
    %v3672 = vrot.slane %v3586, 1
    %v3673 = vrot.slane %v3655, 1
    %v3674 = vrot.slane %v3657, 1
    %v3683 = vadd.f32 %v282, %v3667
    %v3684 = vadd.f32 %v284, %v3668
    %v3685 = vadd.f32 %v353, %v3669
    %v3686 = vadd.f32 %v355, %v3670
    %v3687 = vadd.f32 %v424, %v3671
    %v3688 = vadd.f32 %v426, %v3672
    %v3689 = vadd.f32 %v495, %v3673
    %v3690 = vadd.f32 %v497, %v3674
    %v3691 = vxor.u32 %v3683, 2147483648
    %v3692 = vxor.u32 %v3684, 2147483648
    %v3693 = vxor.u32 %v3685, 2147483648
    %v3694 = vxor.u32 %v3686, 2147483648
    %v3695 = vxor.u32 %v3687, 2147483648
    %v3696 = vxor.u32 %v3688, 2147483648
    %v3697 = vmul.f32 %v3691, 1.442695
    %v3698 = vpow.pop %v3697
    %v3699 = vmul.f32 %v3692, 1.442695
    %v3700 = vpow.pop %v3699
    %v3701 = vmul.f32 %v3693, 1.442695
    %v3702 = vpow.pop %v3701
    %v3703 = vmul.f32 %v3694, 1.442695
    %v3704 = vpow.pop %v3703
    %v3705 = vmul.f32 %v3695, 1.442695
    %v3706 = vpow.pop %v3705
    %v3707 = vmul.f32 %v3696, 1.442695
    %v3708 = vpow.pop %v3707
    %v3709 = vadd.f32 %v3698, 1.0
    %v3710 = vadd.f32 %v3700, 1.0
    %v3711 = vadd.f32 %v3702, 1.0
    %v3712 = vadd.f32 %v3704, 1.0
    %v3713 = vadd.f32 %v3706, 1.0
    %v3714 = vadd.f32 %v3708, 1.0
    %v3715 = vrcp.pop %v3709
    %v3716 = vmul.f32 1.0, %v3715
    %v3717 = vrcp.pop %v3710
    %v3718 = vmul.f32 1.0, %v3717
    %v3719 = vrcp.pop %v3711
    %v3720 = vmul.f32 1.0, %v3719
    %v3721 = vrcp.pop %v3712
    %v3722 = vmul.f32 1.0, %v3721
    %v3723 = vrcp.pop %v3713
    %v3724 = vmul.f32 1.0, %v3723
    %v3725 = vrcp.pop %v3714
    %v3726 = vmul.f32 1.0, %v3725
    %v3727 = vtanh.pop %v3689
    %v3728 = vtanh.pop %v3690
    %v3731 = vrot.slane %v3363, 7
    %v3732 = vrot.slane %v3364, 7
    %v3735 = vmul.f32 %v3720, %v3731
    %v3736 = vmul.f32 %v3722, %v3732
    %v3737 = vmul.f32 %v3716, %v3727
    %v3738 = vmul.f32 %v3718, %v3728
    %v3739 = vadd.f32 %v3735, %v3737
    %v3740 = vadd.f32 %v3736, %v3738
    %v3741 = vtanh.pop %v3739
    %v3742 = vtanh.pop %v3740
    %v3743 = vmul.f32 %v3724, %v3741
    %v3744 = vmul.f32 %v3726, %v3742
    %vm3745 = vcmask 1040384
    %v3746 = vsel %vm3745, %v1117, %v1487
    %v3747 = vsel %vm3745, %v1118, %v1488
    %v3748 = vsel %vm190, %v3746, %v1863
    %v3749 = vsel %vm190, %v3747, %v1864
    %vm3750 = vcmask 1042432
    %v3751 = vsel %vm3750, %v3748, %v2239
    %v3752 = vsel %vm3750, %v3749, %v2240
    %vm3753 = vcmask 1043456
    %v3754 = vsel %vm3753, %v3751, %v2615
    %v3755 = vsel %vm3753, %v3752, %v2616
    %vm3756 = vcmask 1044480
    %v3757 = vsel %vm3756, %v3754, %v2991
    %v3758 = vsel %vm3756, %v3755, %v2992
    %vm3759 = vcmask 1045504
    %v3760 = vsel %vm3759, %v3757, %v3367
    %v3761 = vsel %vm3759, %v3758, %v3368
    %vm3762 = vcmask 1046528
    %v3763 = vsel %vm3762, %v3760, %v3743
    %v3764 = vsel %vm3762, %v3761, %v3744
    %v3765 = vmax.f32 %v3763, 0.0
    %v3766 = vmax.f32 %v3764, 0.0
    %v3767 = vmin.f32 %v3765, 6.0
    %v3768 = vmin.f32 %v3766, 6.0
    %v3769 = vld [vmem:[#allocation8] sm:$0xff]
    %v3770 = vld [vmem:[#allocation8 + $0x8] sm:$0xff]
    %v3771 = vld [vmem:[#allocation8 + $0x10] sm:$0xff]
    %v3772 = vld [vmem:[#allocation8 + $0x18] sm:$0xff]
    %v3773 = vld [vmem:[#allocation8 + $0x20] sm:$0xff]
    %v3774 = vld [vmem:[#allocation8 + $0x28] sm:$0xff]
    %v3775 = vld [vmem:[#allocation8 + $0x30] sm:$0xff]
    %v3776 = vld [vmem:[#allocation8 + $0x38] sm:$0xff]
    %v3777 = vld [vmem:[#allocation8 + $0x40] sm:$0xff]
    %v3778 = vld [vmem:[#allocation8 + $0x48] sm:$0xff]
    %v3779 = vld [vmem:[#allocation8 + $0x50] sm:$0xff]
    %v3780 = vld [vmem:[#allocation8 + $0x58] sm:$0xff]
    %v3781 = vld [vmem:[#allocation8 + $0x60] sm:$0xff]
    %v3782 = vld [vmem:[#allocation8 + $0x68] sm:$0xff]
    %v3783 = vld [vmem:[#allocation8 + $0x70] sm:$0xff]
    %v3784 = vld [vmem:[#allocation8 + $0x78] sm:$0xff]
    %v3785 = vld [vmem:[#allocation8 + $0x80] sm:$0xff]
    %v3786 = vld [vmem:[#allocation8 + $0x88] sm:$0xff]
    %v3787 = vld [vmem:[#allocation8 + $0x90] sm:$0xff]
    %v3788 = vld [vmem:[#allocation8 + $0x98] sm:$0xff]
    %v3789 = vld [vmem:[#allocation8 + $0xa0] sm:$0xff]
    %v3790 = vld [vmem:[#allocation8 + $0xa8] sm:$0xff]
    %v3791 = vld [vmem:[#allocation8 + $0xb0] sm:$0xff]
    %v3792 = vld [vmem:[#allocation8 + $0xb8] sm:$0xff]
    %v3793 = vld [vmem:[#allocation8 + $0xc0] sm:$0xff]
    %v3794 = vld [vmem:[#allocation8 + $0xc8] sm:$0xff]
    %v3795 = vld [vmem:[#allocation8 + $0xd0] sm:$0xff]
    %v3796 = vld [vmem:[#allocation8 + $0xd8] sm:$0xff]
    %v3797 = vld [vmem:[#allocation8 + $0xe0] sm:$0xff]
    %v3798 = vld [vmem:[#allocation8 + $0xe8] sm:$0xff]
    %v3799 = vld [vmem:[#allocation8 + $0xf0] sm:$0xff]
    %v3800 = vld [vmem:[#allocation8 + $0xf8] sm:$0xff]
    %v3801 = vld [vmem:[%s5] sm:$0x1]
    %v3803 = vlaneseq
    %v3804 = vshrl.u32 %v3803, 7
    %v3805 = vsub.s32 0, %v3804
    %v3806 = vrot.slane %v3801, %v3805
    %3808 = vmatprep.subr.mxu0 0.0
    %3809 = vmatpush1.msra.mxu0 %v3769
    %3810 = vmatprep.subr.mxu0 0.0
    %3811 = vmatpush1.msra.mxu0 %v3770
    %3812 = vmatprep.subr.mxu0 0.0
    %3813 = vmatpush1.msra.mxu0 %v3771
    %3814 = vmatprep.subr.mxu0 0.0
    %3815 = vmatpush1.msra.mxu0 %v3772
    %3816 = vmatprep.subr.mxu0 0.0
    %3817 = vmatpush1.msra.mxu0 %v3773
    %3818 = vmatprep.subr.mxu0 0.0
    %3819 = vmatpush1.msra.mxu0 %v3774
    %3820 = vmatprep.subr.mxu0 0.0
    %3821 = vmatpush1.msra.mxu0 %v3775
    %3822 = vmatprep.subr.mxu0 0.0
    %3823 = vmatpush1.msra.mxu0 %v3776
    %3824 = vmatprep.subr.mxu0 0.0
    %3825 = vmatpush1.msra.mxu0 %v3777
    %3826 = vmatprep.subr.mxu0 0.0
    %3827 = vmatpush1.msra.mxu0 %v3778
    %3828 = vmatprep.subr.mxu0 0.0
    %3829 = vmatpush1.msra.mxu0 %v3779
    %3830 = vmatprep.subr.mxu0 0.0
    %3831 = vmatpush1.msra.mxu0 %v3780
    %3832 = vmatprep.subr.mxu0 0.0
    %3833 = vmatpush1.msra.mxu0 %v3781
    %3834 = vmatprep.subr.mxu0 0.0
    %3835 = vmatpush1.msra.mxu0 %v3782
    %3836 = vmatprep.subr.mxu0 0.0
    %3837 = vmatpush1.msra.mxu0 %v3783
    %3838 = vmatprep.subr.mxu0 0.0
    %3839 = vmatpush1.msra.mxu0 %v3784
    %3840 = vmatprep.subr.mxu0 0.0
    %3841 = vmatpush1.msra.mxu0 %v3785
    %3842 = vmatprep.subr.mxu0 0.0
    %3843 = vmatpush1.msra.mxu0 %v3786
    %3844 = vmatprep.subr.mxu0 0.0
    %3845 = vmatpush1.msra.mxu0 %v3787
    %3846 = vmatprep.subr.mxu0 0.0
    %3847 = vmatpush1.msra.mxu0 %v3788
    %3848 = vmatprep.subr.mxu0 0.0
    %3849 = vmatpush1.msra.mxu0 %v3789
    %3850 = vmatprep.subr.mxu0 0.0
    %3851 = vmatpush1.msra.mxu0 %v3790
    %3852 = vmatprep.subr.mxu0 0.0
    %3853 = vmatpush1.msra.mxu0 %v3791
    %3854 = vmatprep.subr.mxu0 0.0
    %3855 = vmatpush1.msra.mxu0 %v3792
    %3856 = vmatprep.subr.mxu0 0.0
    %3857 = vmatpush1.msra.mxu0 %v3793
    %3858 = vmatprep.subr.mxu0 0.0
    %3859 = vmatpush1.msra.mxu0 %v3794
    %3860 = vmatprep.subr.mxu0 0.0
    %3861 = vmatpush1.msra.mxu0 %v3795
    %3862 = vmatprep.subr.mxu0 0.0
    %3863 = vmatpush1.msra.mxu0 %v3796
    %3864 = vmatprep.subr.mxu0 0.0
    %3865 = vmatpush1.msra.mxu0 %v3797
    %3866 = vmatprep.subr.mxu0 0.0
    %3867 = vmatpush1.msra.mxu0 %v3798
    %3868 = vmatprep.subr.mxu0 0.0
    %3869 = vmatpush1.msra.mxu0 %v3799
    %3870 = vmatprep.subr.mxu0 0.0
    %3871 = vmatpush1.msra.mxu0 %v3800
    %3872 = vmatprep.mubr.f32.mxu0 %v3768
    %3873 = vmatmul.mubr.f32.gmra.mrb[0].mxu0 %v3767
    %v3874 = vpop.f32.mrb[0].mxu0
    %v3875 = vadd.f32 %v3806, %v3874
    %v3876 = vpop.f32.mrb[0].mxu0
    %3877 = vdwg.mxu0
    %3878 = vst [vmem:[#allocation10] sm:$0xff] %v3875
    %v3881 = vcombine.high %v3743, %v3744
    %v3883 = vunpack.c.l.s4 1966171168
    %v3884 = vunpack.c.0.s8 %v3883
    %v3885 = vlaneseq
    %v3886 = vshrl.u32 %v3885, 7
    %v3887 = vsub.s32 %v3884, %v3886
    %v3888 = vrot.slane %v3881, %v3887
    %v3889 = vcombine.high %v3888, %v3888
    %v3891 = vunpack.c.l.s4 1966171168
    %v3892 = vunpack.c.0.s8 %v3891
    %v3893 = vlaneseq
    %v3894 = vshrl.u32 %v3893, 7
    %v3895 = vsub.s32 %v3892, %v3894
    %v3896 = vrot.slane %v3889, %v3895
    %v3897 = vcombine.high %v3896, %v3896
    %v3899 = vlaneseq
    %vm3900 = vcmp.ge.s32.totalorder %v3899, 0
    %vm3901 = vcmp.lt.s32.totalorder %v3899, 256
    %vm3902 = vmand %vm3900, %vm3901
    %3903 = vst.msk [vmem:[#allocation11] sm:$0x3] %vm3902, %v3897
    %v3906 = vcombine.high %v3739, %v3740
    %v3908 = vunpack.c.l.s4 1966171168
    %v3909 = vunpack.c.0.s8 %v3908
    %v3910 = vlaneseq
    %v3911 = vshrl.u32 %v3910, 7
    %v3912 = vsub.s32 %v3909, %v3911
    %v3913 = vrot.slane %v3906, %v3912
    %v3914 = vcombine.high %v3913, %v3913
    %v3916 = vunpack.c.l.s4 1966171168
    %v3917 = vunpack.c.0.s8 %v3916
    %v3918 = vlaneseq
    %v3919 = vshrl.u32 %v3918, 7
    %v3920 = vsub.s32 %v3917, %v3919
    %v3921 = vrot.slane %v3914, %v3920
    %v3922 = vcombine.high %v3921, %v3921
    %3924 = vst.msk [vmem:[#allocation13] sm:$0x3] %vm3902, %v3922
    // Predicated region
    $region50: #{tpu_custom_call.1} parent=1 // pred_check
      _
    $region51: #{tpu_custom_call.1} parent=1 // pred_check_branch
      %3926 = sbr.rel (0) target = $region53
    $region52: #{tpu_custom_call.1} parent=1 // pred_region
      %s3928 = ssub.s32 128, 128
      %3929 = vsyncadd [#allocation4], %s3928
      %s3931 = sshll.u32 [#allocation10], 4
      %s3932 = int_to_ptr.vmem [resolvable:$true] %s3931
      %3934 = dma.vmem_to_hbm [thread:$0]  %s3932, 128, %s8, [#allocation4]
    $region53: #{tpu_custom_call.1} parent=1 // pred_fallthru
      _
    // Predicated region
    $region54: #{tpu_custom_call.1} parent=1 // pred_check
      _
    $region55: #{tpu_custom_call.1} parent=1 // pred_check_branch
      %3936 = sbr.rel (0) target = $region57
    $region56: #{tpu_custom_call.1} parent=1 // pred_region
      %s3938 = ssub.s32 32, 32
      %3939 = vsyncadd [#allocation12], %s3938
      %s3941 = sshll.u32 [#allocation11], 4
      %s3942 = int_to_ptr.vmem [resolvable:$true] %s3941
      %3944 = dma.vmem_to_hbm [thread:$0]  %s3942, 32, %s9, [#allocation12]
    $region57: #{tpu_custom_call.1} parent=1 // pred_fallthru
      _
    // Predicated region
    $region58: #{tpu_custom_call.1} parent=1 // pred_check
      _
    $region59: #{tpu_custom_call.1} parent=1 // pred_check_branch
      %3946 = sbr.rel (0) target = $region61
    $region60: #{tpu_custom_call.1} parent=1 // pred_region
      %s3948 = ssub.s32 32, 32
      %3949 = vsyncadd [#allocation12], %s3948
      %s3951 = sshll.u32 [#allocation13], 4
      %s3952 = int_to_ptr.vmem [resolvable:$true] %s3951
      %3954 = dma.vmem_to_hbm [thread:$0]  %s3952, 32, %s10, [#allocation12]
    $region61: #{tpu_custom_call.1} parent=1 // pred_fallthru
      _
    // Predicated region
    $region62: #{tpu_custom_call.1} parent=1 // pred_check
      _
    $region63: #{tpu_custom_call.1} parent=1 // pred_check_branch
      %3956 = sbr.rel (0) target = $region65
    $region64: #{tpu_custom_call.1} parent=1 // pred_region
      %3957 = dma.done [#allocation4], 128
    $region65: #{tpu_custom_call.1} parent=1 // pred_fallthru
      _
    // Predicated region
    $region66: #{tpu_custom_call.1} parent=1 // pred_check
      _
    $region67: #{tpu_custom_call.1} parent=1 // pred_check_branch
      %3959 = sbr.rel (0) target = $region69
    $region68: #{tpu_custom_call.1} parent=1 // pred_region
      %3960 = dma.done [#allocation12], 32
    $region69: #{tpu_custom_call.1} parent=1 // pred_fallthru
      _
    // Predicated region
    $region70: #{tpu_custom_call.1} parent=1 // pred_check
      _
    $region71: #{tpu_custom_call.1} parent=1 // pred_check_branch
      %3962 = sbr.rel (0) target = $region73
    $region72: #{tpu_custom_call.1} parent=1 // pred_region
      %3963 = dma.done [#allocation12], 32
    $region73: #{tpu_custom_call.1} parent=1 // pred_fallthru
      _
    %3964 = vsyncpa [#allocation3], 1
    %3965 = vsyncpa [#allocation6], 1
    %3966 = vsyncpa [#allocation9], 1
    %3967 = vsyncpa [#allocation4], 1
    %3968 = vsyncpa [#allocation12], 1

</llo_original>
